<compile_context>
chip_gen: v5e
topology: v5e:2x2
jax: 0.10.0
libtpu: 0.0.40
codegen_flags: <defaults>
</compile_context>

<pallas_src>
import jax
import jax.numpy as jnp
from jax.experimental import pallas as pl
from jax.experimental.pallas import tpu as pltpu


def _autoencoder_kernel(x_ref, we_ref, be_ref, wd_ref, bd_ref,
                        emb_ref, rec_ref):
    """Fused encoder->decoder forward for one batch tile.

    x_ref:   (TB, D)  input tile (bf16 or f32 — fed to the MXU as-is)
    we_ref:  (D, H)   encoder weight     be_ref: (1, H) encoder bias
    wd_ref:  (H, D)   decoder weight     bd_ref: (1, D) decoder bias
    emb_ref: (TB, H)  embedding output
    rec_ref: (TB, D)  reconstruction output
    """
    # ---- encoder: Linear + ReLU (MXU matmul, f32 accumulator, VPU epilogue) ----
    h = jnp.dot(x_ref[...], we_ref[...], preferred_element_type=jnp.float32)
    h = jnp.maximum(h + be_ref[...].astype(jnp.float32), 0.0)
    h = h.astype(emb_ref.dtype)          # embedding is produced in input dtype
    emb_ref[...] = h

    # ---- decoder: Linear (reuses the in-VMEM embedding, never touches HBM) ----
    r = jnp.dot(h, wd_ref[...], preferred_element_type=jnp.float32)
    r = r + bd_ref[...].astype(jnp.float32)
    rec_ref[...] = r.astype(rec_ref.dtype)


def _round_up(v, m):
    return ((v + m - 1) // m) * m


_SUB = 16  # sublane packing granularity (covers both bf16 and f32 rows)


def _pick_batch_tile(B, batch_tile):
    """Pick a tile that (a) is large, (b) divides the rounded batch if possible."""
    Bp0 = _round_up(B, _SUB)
    bt = min(_round_up(batch_tile, _SUB), Bp0)
    # Prefer a tile that divides Bp0 exactly (no padding, no post-call slice),
    # but never shrink below half the requested tile just to get divisibility.
    lo = max(_SUB, bt // 2)
    for cand in range(bt, lo - 1, -_SUB):
        if Bp0 % cand == 0:
            return cand, Bp0
    return bt, _round_up(Bp0, bt)   # fall back to padding


def _vmem_budget(bt, D, H, dt_bytes, single_buffer_weights):
    """Tight VMEM request: actual footprint with 2x headroom, 8..32 MiB clamp."""
    wbuf = 1 if single_buffer_weights else 2
    x_bytes = 2 * bt * D * dt_bytes                       # double-buffered input
    out_bytes = 2 * bt * (H + D) * dt_bytes               # double-buffered outputs
    w_bytes = wbuf * (D * H + H * D + H + D) * dt_bytes   # resident weights/bias
    need = x_bytes + out_bytes + w_bytes
    return int(min(max(2 * need, 8 * 1024 * 1024), 32 * 1024 * 1024))


def autoencoder_forward(x, w_enc, b_enc, w_dec, b_dec, *,
                        batch_tile=512,
                        single_buffer_weights=True):
    """Returns (embedding, reconstruction) — same semantics as Autoencoder.forward.

    x:     [B, D]
    w_enc: [D, H], b_enc: [H]   (== PyTorch Linear weight.T / bias)
    w_dec: [H, D], b_dec: [D]

    On v7x (2 TensorCores) pass batch_tile ~ B / (2k) so the "parallel" grid
    axis gets an even number of large steps; on v5e/v6e one big tile is best.
    """
    B, D = x.shape
    H = w_enc.shape[1]
    dt_bytes = jnp.dtype(x.dtype).itemsize

    bt, Bp = _pick_batch_tile(B, batch_tile)
    if Bp != B:
        x = jnp.pad(x, ((0, Bp - B), (0, 0)))

    # Biases as (1, N) rows: single VMEM vreg row, implicit broadcast on the VPU.
    b_enc2 = b_enc.reshape(1, H)
    b_dec2 = b_dec.reshape(1, D)

    grid = (Bp // bt,)

    def _call(sbw):
        const_kw = dict(pipeline_mode=pl.Buffered(1)) if sbw else {}
        return pl.pallas_call(
            _autoencoder_kernel,
            out_shape=(
                jax.ShapeDtypeStruct((Bp, H), x.dtype),   # embedding
                jax.ShapeDtypeStruct((Bp, D), x.dtype),   # reconstruction
            ),
            grid_spec=pltpu.PrefetchScalarGridSpec(
                num_scalar_prefetch=0,
                grid=grid,
                in_specs=[
                    pl.BlockSpec((bt, D), lambda i: (i, 0)),              # x tile
                    pl.BlockSpec((D, H), lambda i: (0, 0), **const_kw),   # W_enc
                    pl.BlockSpec((1, H), lambda i: (0, 0), **const_kw),   # b_enc
                    pl.BlockSpec((H, D), lambda i: (0, 0), **const_kw),   # W_dec
                    pl.BlockSpec((1, D), lambda i: (0, 0), **const_kw),   # b_dec
                ],
                out_specs=[
                    pl.BlockSpec((bt, H), lambda i: (i, 0)),
                    pl.BlockSpec((bt, D), lambda i: (i, 0)),
                ],
            ),
            compiler_params=pltpu.CompilerParams(
                dimension_semantics=("parallel",),
                vmem_limit_bytes=_vmem_budget(bt, D, H, dt_bytes, sbw),
            ),
        )(x, w_enc, b_enc2, w_dec, b_dec2)

    if single_buffer_weights:
        try:
            emb, rec = _call(True)
        except Exception:
            # pipeline_mode=Buffered(1) not supported by this JAX build —
            # fall back to default double-buffered weights (correctness identical).
            emb, rec = _call(False)
    else:
        emb, rec = _call(False)

    if Bp != B:
        # Only taken when no divisor-tile was found; padded rows are garbage
        # (ReLU(b_enc) -> decoder), so slice them off.
        emb, rec = emb[:B], rec[:B]
    return emb, rec

    # TODO(synk): weights are kept fully resident in VMEM; for very large D/H
    # (2*D*H*bytes approaching ~half of v7x's 64 MiB) a K/N-tiled grid with an
    # f32 accumulator would be needed — not required at these shapes.


def _reference_forward(x, w_enc, b_enc, w_dec, b_dec):
    """Pure-JAX reference (f32 math; kernel uses bf16 MXU inputs + f32 acc)."""
    f32 = jnp.float32
    h = jnp.maximum(x.astype(f32) @ w_enc.astype(f32) + b_enc.astype(f32), 0.0)
    h = h.astype(x.dtype)                     # embedding in input dtype
    r = h.astype(f32) @ w_dec.astype(f32) + b_dec.astype(f32)
    return h, r.astype(x.dtype)


if __name__ == "__main__":
    # Lane-aligned shapes (multiples of 128); B chosen so the default
    # batch_tile=512 gives exactly 2 parallel grid steps (balanced on v7x,
    # two large serial tiles on v5e/v6e) with no padding and no post-slice.
    B, D, H = 1024, 256, 128
    dtype = jnp.bfloat16          # MXU-native on v5e / v6e / v7x

    key = jax.random.PRNGKey(0)
    kx, kwe, kbe, kwd, kbd = jax.random.split(key, 5)

    x = jax.random.normal(kx, (B, D), jnp.float32).astype(dtype)
    # Deterministic nn.Linear-style uniform fan-in init.
    w_enc = (jax.random.uniform(kwe, (D, H), jnp.float32, -1.0, 1.0)
             / jnp.sqrt(D)).astype(dtype)
    b_enc = (jax.random.uniform(kbe, (H,), jnp.float32, -1.0, 1.0)
             / jnp.sqrt(D)).astype(dtype)
    w_dec = (jax.random.uniform(kwd, (H, D), jnp.float32, -1.0, 1.0)
             / jnp.sqrt(H)).astype(dtype)
    b_dec = (jax.random.uniform(kbd, (D,), jnp.float32, -1.0, 1.0)
             / jnp.sqrt(H)).astype(dtype)

    # Called eagerly (pallas_call compiles internally) so the single-buffer
    # fallback path can catch lowering errors; wrap in jax.jit in real use.
    embedding, reconstruct = autoencoder_forward(x, w_enc, b_enc, w_dec, b_dec)
    jax.block_until_ready((embedding, reconstruct))

    # Correctness check against a pure-JAX reference (same bf16 inputs).
    emb_ref, rec_ref = _reference_forward(x, w_enc, b_enc, w_dec, b_dec)
    assert embedding.shape == (B, H) and reconstruct.shape == (B, D)
    assert jnp.allclose(embedding.astype(jnp.float32),
                        emb_ref.astype(jnp.float32), atol=2e-2, rtol=2e-2)
    assert jnp.allclose(reconstruct.astype(jnp.float32),
                        rec_ref.astype(jnp.float32), atol=2e-2, rtol=2e-2)

    print("KERNEL_OK")
</pallas_src>

<mosaic_0001>
module attributes {stable_mosaic.version = 11 : i64} {
  func.func @_autoencoder_kernel(%arg0: i32, %arg1: memref<512x256xbf16, #tpu.memory_space<vmem>>, %arg2: memref<256x128xbf16, #tpu.memory_space<vmem>>, %arg3: memref<1x128xbf16, #tpu.memory_space<vmem>>, %arg4: memref<128x256xbf16, #tpu.memory_space<vmem>>, %arg5: memref<1x256xbf16, #tpu.memory_space<vmem>>, %arg6: memref<512x128xbf16, #tpu.memory_space<vmem>>, %arg7: memref<512x256xbf16, #tpu.memory_space<vmem>>) attributes {dimension_semantics = [#tpu.dimension_semantics<parallel>], iteration_bounds = array<i64: 2>, scalar_prefetch = 0 : i64, scratch_operands = 0 : i64, tpu.core_type = #tpu.core_type<tc>, window_params = [{transform_indices = @transform_0, window_bounds = array<i64: 512, 256>}, {pipeline_mode = #tpu.pipeline_mode<synchronous>, transform_indices = @transform_1, window_bounds = array<i64: 256, 128>}, {pipeline_mode = #tpu.pipeline_mode<synchronous>, transform_indices = @transform_2, window_bounds = array<i64: 1, 128>}, {pipeline_mode = #tpu.pipeline_mode<synchronous>, transform_indices = @transform_3, window_bounds = array<i64: 128, 256>}, {pipeline_mode = #tpu.pipeline_mode<synchronous>, transform_indices = @transform_4, window_bounds = array<i64: 1, 256>}, {transform_indices = @transform_5, window_bounds = array<i64: 512, 128>}, {transform_indices = @transform_6, window_bounds = array<i64: 512, 256>}]} {
    %c0 = arith.constant 0 : index
    %c0_0 = arith.constant 0 : index
    %0 = vector.load %arg1[%c0, %c0_0] : memref<512x256xbf16, #tpu.memory_space<vmem>>, vector<512x256xbf16>
    %c0_1 = arith.constant 0 : index
    %c0_2 = arith.constant 0 : index
    %1 = vector.load %arg2[%c0_1, %c0_2] : memref<256x128xbf16, #tpu.memory_space<vmem>>, vector<256x128xbf16>
    %cst = arith.constant dense<0.000000e+00> : vector<512x128xf32>
    %2 = tpu.matmul %0, %1, %cst {dimension_numbers = #tpu.dot_dimension_numbers<[1], [0], [0], [1], [0, 0, 1, 1], [], []>} : vector<512x256xbf16>, vector<256x128xbf16>, vector<512x128xf32> -> vector<512x128xf32>
    %c0_3 = arith.constant 0 : index
    %c0_4 = arith.constant 0 : index
    %3 = vector.load %arg3[%c0_3, %c0_4] : memref<1x128xbf16, #tpu.memory_space<vmem>>, vector<1x128xbf16>
    %4 = arith.extf %3 : vector<1x128xbf16> to vector<1x128xf32>
    %5 = vector.broadcast %4 : vector<1x128xf32> to vector<512x128xf32>
    %6 = arith.addf %2, %5 : vector<512x128xf32>
    %cst_5 = arith.constant 0.000000e+00 : f32
    %7 = vector.broadcast %cst_5 : f32 to vector<512x128xf32>
    %8 = arith.maximumf %6, %7 : vector<512x128xf32>
    %9 = arith.truncf %8 : vector<512x128xf32> to vector<512x128xbf16>
    %c0_6 = arith.constant 0 : index
    %c0_7 = arith.constant 0 : index
    %10 = vector.load %arg6[%c0_6, %c0_7] : memref<512x128xbf16, #tpu.memory_space<vmem>>, vector<512x128xbf16>
    tpu.vector_store %arg6[%c0_6, %c0_7], %9 {strides = array<i32>} : memref<512x128xbf16, #tpu.memory_space<vmem>>, vector<512x128xbf16>,
    %c0_8 = arith.constant 0 : index
    %c0_9 = arith.constant 0 : index
    %11 = vector.load %arg4[%c0_8, %c0_9] : memref<128x256xbf16, #tpu.memory_space<vmem>>, vector<128x256xbf16>
    %cst_10 = arith.constant dense<0.000000e+00> : vector<512x256xf32>
    %12 = tpu.matmul %9, %11, %cst_10 {dimension_numbers = #tpu.dot_dimension_numbers<[1], [0], [0], [1], [0, 0, 1, 1], [], []>} : vector<512x128xbf16>, vector<128x256xbf16>, vector<512x256xf32> -> vector<512x256xf32>
    %c0_11 = arith.constant 0 : index
    %c0_12 = arith.constant 0 : index
    %13 = vector.load %arg5[%c0_11, %c0_12] : memref<1x256xbf16, #tpu.memory_space<vmem>>, vector<1x256xbf16>
    %14 = arith.extf %13 : vector<1x256xbf16> to vector<1x256xf32>
    %15 = vector.broadcast %14 : vector<1x256xf32> to vector<512x256xf32>
    %16 = arith.addf %12, %15 : vector<512x256xf32>
    %17 = arith.truncf %16 : vector<512x256xf32> to vector<512x256xbf16>
    %c0_13 = arith.constant 0 : index
    %c0_14 = arith.constant 0 : index
    %18 = vector.load %arg7[%c0_13, %c0_14] : memref<512x256xbf16, #tpu.memory_space<vmem>>, vector<512x256xbf16>
    tpu.vector_store %arg7[%c0_13, %c0_14], %17 {strides = array<i32>} : memref<512x256xbf16, #tpu.memory_space<vmem>>, vector<512x256xbf16>,
    return
  }
  func.func @transform_0(%arg0: i32) -> (i32, i32) {
    %c0_i32 = arith.constant 0 : i32
    %c0_i32_0 = arith.constant 0 : i32
    return %arg0, %c0_i32 : i32, i32
  }
  func.func @transform_1(%arg0: i32) -> (i32, i32) {
    %c0_i32 = arith.constant 0 : i32
    %c0_i32_0 = arith.constant 0 : i32
    %c0_i32_1 = arith.constant 0 : i32
    return %c0_i32, %c0_i32_0 : i32, i32
  }
  func.func @transform_2(%arg0: i32) -> (i32, i32) {
    %c0_i32 = arith.constant 0 : i32
    %c0_i32_0 = arith.constant 0 : i32
    %c0_i32_1 = arith.constant 0 : i32
    return %c0_i32, %c0_i32_0 : i32, i32
  }
  func.func @transform_3(%arg0: i32) -> (i32, i32) {
    %c0_i32 = arith.constant 0 : i32
    %c0_i32_0 = arith.constant 0 : i32
    %c0_i32_1 = arith.constant 0 : i32
    return %c0_i32, %c0_i32_0 : i32, i32
  }
  func.func @transform_4(%arg0: i32) -> (i32, i32) {
    %c0_i32 = arith.constant 0 : i32
    %c0_i32_0 = arith.constant 0 : i32
    %c0_i32_1 = arith.constant 0 : i32
    return %c0_i32, %c0_i32_0 : i32, i32
  }
  func.func @transform_5(%arg0: i32) -> (i32, i32) {
    %c0_i32 = arith.constant 0 : i32
    %c0_i32_0 = arith.constant 0 : i32
    return %arg0, %c0_i32 : i32, i32
  }
  func.func @transform_6(%arg0: i32) -> (i32, i32) {
    %c0_i32 = arith.constant 0 : i32
    %c0_i32_0 = arith.constant 0 : i32
    return %arg0, %c0_i32 : i32, i32
  }
}

module attributes {stable_mosaic.version = 11 : i64} {
  func.func @_autoencoder_kernel(%arg0: i32, %arg1: memref<512x256xbf16, #tpu.memory_space<vmem>>, %arg2: memref<256x128xbf16, #tpu.memory_space<vmem>>, %arg3: memref<1x128xbf16, #tpu.memory_space<vmem>>, %arg4: memref<128x256xbf16, #tpu.memory_space<vmem>>, %arg5: memref<1x256xbf16, #tpu.memory_space<vmem>>, %arg6: memref<512x128xbf16, #tpu.memory_space<vmem>>, %arg7: memref<512x256xbf16, #tpu.memory_space<vmem>>) attributes {dimension_semantics = [#tpu.dimension_semantics<parallel>], iteration_bounds = array<i64: 2>, scalar_prefetch = 0 : i64, scratch_operands = 0 : i64, tpu.core_type = #tpu.core_type<tc>, window_params = [{transform_indices = @transform_0, window_bounds = array<i64: 512, 256>}, {pipeline_mode = #tpu.pipeline_mode<synchronous>, transform_indices = @transform_1, window_bounds = array<i64: 256, 128>}, {pipeline_mode = #tpu.pipeline_mode<synchronous>, transform_indices = @transform_2, window_bounds = array<i64: 1, 128>}, {pipeline_mode = #tpu.pipeline_mode<synchronous>, transform_indices = @transform_3, window_bounds = array<i64: 128, 256>}, {pipeline_mode = #tpu.pipeline_mode<synchronous>, transform_indices = @transform_4, window_bounds = array<i64: 1, 256>}, {transform_indices = @transform_5, window_bounds = array<i64: 512, 128>}, {transform_indices = @transform_6, window_bounds = array<i64: 512, 256>}]} {
    %c0 = arith.constant 0 : index
    %c0_0 = arith.constant 0 : index
    %0 = vector.load %arg1[%c0, %c0_0] : memref<512x256xbf16, #tpu.memory_space<vmem>>, vector<512x256xbf16>
    %c0_1 = arith.constant 0 : index
    %c0_2 = arith.constant 0 : index
    %1 = vector.load %arg2[%c0_1, %c0_2] : memref<256x128xbf16, #tpu.memory_space<vmem>>, vector<256x128xbf16>
    %cst = arith.constant dense<0.000000e+00> : vector<512x128xf32>
    %2 = tpu.matmul %0, %1, %cst {dimension_numbers = #tpu.dot_dimension_numbers<[1], [0], [0], [1], [0, 0, 1, 1], [], []>} : vector<512x256xbf16>, vector<256x128xbf16>, vector<512x128xf32> -> vector<512x128xf32>
    %c0_3 = arith.constant 0 : index
    %c0_4 = arith.constant 0 : index
    %3 = vector.load %arg3[%c0_3, %c0_4] : memref<1x128xbf16, #tpu.memory_space<vmem>>, vector<1x128xbf16>
    %4 = arith.extf %3 : vector<1x128xbf16> to vector<1x128xf32>
    %5 = vector.broadcast %4 : vector<1x128xf32> to vector<512x128xf32>
    %6 = arith.addf %2, %5 : vector<512x128xf32>
    %cst_5 = arith.constant 0.000000e+00 : f32
    %7 = vector.broadcast %cst_5 : f32 to vector<512x128xf32>
    %8 = arith.maximumf %6, %7 : vector<512x128xf32>
    %9 = arith.truncf %8 : vector<512x128xf32> to vector<512x128xbf16>
    %c0_6 = arith.constant 0 : index
    %c0_7 = arith.constant 0 : index
    %10 = vector.load %arg6[%c0_6, %c0_7] : memref<512x128xbf16, #tpu.memory_space<vmem>>, vector<512x128xbf16>
    tpu.vector_store %arg6[%c0_6, %c0_7], %9 {strides = array<i32>} : memref<512x128xbf16, #tpu.memory_space<vmem>>, vector<512x128xbf16>,
    %c0_8 = arith.constant 0 : index
    %c0_9 = arith.constant 0 : index
    %11 = vector.load %arg4[%c0_8, %c0_9] : memref<128x256xbf16, #tpu.memory_space<vmem>>, vector<128x256xbf16>
    %cst_10 = arith.constant dense<0.000000e+00> : vector<512x256xf32>
    %12 = tpu.matmul %9, %11, %cst_10 {dimension_numbers = #tpu.dot_dimension_numbers<[1], [0], [0], [1], [0, 0, 1, 1], [], []>} : vector<512x128xbf16>, vector<128x256xbf16>, vector<512x256xf32> -> vector<512x256xf32>
    %c0_11 = arith.constant 0 : index
    %c0_12 = arith.constant 0 : index
    %13 = vector.load %arg5[%c0_11, %c0_12] : memref<1x256xbf16, #tpu.memory_space<vmem>>, vector<1x256xbf16>
    %14 = arith.extf %13 : vector<1x256xbf16> to vector<1x256xf32>
    %15 = vector.broadcast %14 : vector<1x256xf32> to vector<512x256xf32>
    %16 = arith.addf %12, %15 : vector<512x256xf32>
    %17 = arith.truncf %16 : vector<512x256xf32> to vector<512x256xbf16>
    %c0_13 = arith.constant 0 : index
    %c0_14 = arith.constant 0 : index
    %18 = vector.load %arg7[%c0_13, %c0_14] : memref<512x256xbf16, #tpu.memory_space<vmem>>, vector<512x256xbf16>
    tpu.vector_store %arg7[%c0_13, %c0_14], %17 {strides = array<i32>} : memref<512x256xbf16, #tpu.memory_space<vmem>>, vector<512x256xbf16>,
    return
  }
  func.func @transform_0(%arg0: i32) -> (i32, i32) {
    %c0_i32 = arith.constant 0 : i32
    %c0_i32_0 = arith.constant 0 : i32
    return %arg0, %c0_i32 : i32, i32
  }
  func.func @transform_1(%arg0: i32) -> (i32, i32) {
    %c0_i32 = arith.constant 0 : i32
    %c0_i32_0 = arith.constant 0 : i32
    %c0_i32_1 = arith.constant 0 : i32
    return %c0_i32, %c0_i32_0 : i32, i32
  }
  func.func @transform_2(%arg0: i32) -> (i32, i32) {
    %c0_i32 = arith.constant 0 : i32
    %c0_i32_0 = arith.constant 0 : i32
    %c0_i32_1 = arith.constant 0 : i32
    return %c0_i32, %c0_i32_0 : i32, i32
  }
  func.func @transform_3(%arg0: i32) -> (i32, i32) {
    %c0_i32 = arith.constant 0 : i32
    %c0_i32_0 = arith.constant 0 : i32
    %c0_i32_1 = arith.constant 0 : i32
    return %c0_i32, %c0_i32_0 : i32, i32
  }
  func.func @transform_4(%arg0: i32) -> (i32, i32) {
    %c0_i32 = arith.constant 0 : i32
    %c0_i32_0 = arith.constant 0 : i32
    %c0_i32_1 = arith.constant 0 : i32
    return %c0_i32, %c0_i32_0 : i32, i32
  }
  func.func @transform_5(%arg0: i32) -> (i32, i32) {
    %c0_i32 = arith.constant 0 : i32
    %c0_i32_0 = arith.constant 0 : i32
    return %arg0, %c0_i32 : i32, i32
  }
  func.func @transform_6(%arg0: i32) -> (i32, i32) {
    %c0_i32 = arith.constant 0 : i32
    %c0_i32_0 = arith.constant 0 : i32
    return %arg0, %c0_i32 : i32, i32
  }
}

</mosaic_0001>

<llo_original>
// kernel: tpu_custom_call.1
$region0: #{tpu_custom_call.1}
  #allocation0 [shape = 'u32[]', space=smem, size = 0x4, offset = 0x4, fixed_abs, tag = 'smem constant byte address 0x4 - core index']
  #allocation1 [shape = 'u32[72,128]{1,0:T(1,128)}', space=vmem, size = 0x9000, scoped, tag = 'internal scratch']
  %s0 = inlined_call_operand.hbm [shape: bf16[1024,256], index: 0, kind: input, shape index: {}]
  %s1 = inlined_call_operand.hbm [shape: bf16[256,128], index: 1, kind: input, shape index: {}]
  %s2 = inlined_call_operand.vmem [shape: bf16[1,128], index: 2, kind: input, shape index: {}]
  %s3 = inlined_call_operand.hbm [shape: bf16[128,256], index: 3, kind: input, shape index: {}]
  %s4 = inlined_call_operand.vmem [shape: bf16[1,256], index: 4, kind: input, shape index: {}]
  %s5 = inlined_call_operand.hbm [shape: bf16[1024,128], index: 5, kind: output, shape index: {0}]
  %s6 = inlined_call_operand.hbm [shape: bf16[1024,256], index: 6, kind: output, shape index: {1}]
  %7 = xla_tuple %s5, %s6
  %s8 = sld [smem:[#allocation0]]
  $region73: #{tpu_custom_call.1} parent=0
    _
  %s10 = ssub.s32 1, %s8
  %s11 = scalar_select 0, %s10, %s8
  $region1: #{tpu_custom_call.1} parent=0
    #allocation2 [shape = 'u8[524288]{0}', space=vmem, size = 0x80000, scoped, tag = 'input window, operand 0']
    #allocation3 [shape = 's32[2]{0}', space=sflag, size = 0x8, scoped, tag = 'scoped memory for tpu_custom_call.1']
    #allocation4 [shape = 's32[2]{0}', space=sflag, size = 0x8, scoped, tag = 'scoped memory for tpu_custom_call.1']
    #allocation5 [shape = 'u8[65536]{0}', space=vmem, size = 0x10000, scoped, tag = 'input window, operand 1, single buffered']
    #allocation6 [shape = 's32[1]{0}', space=sflag, size = 0x4, scoped, tag = 'scoped memory for tpu_custom_call.1']
    #allocation7 [shape = 'u8[65536]{0}', space=vmem, size = 0x10000, scoped, tag = 'input window, operand 3, single buffered']
    #allocation8 [shape = 'u8[262144]{0}', space=vmem, size = 0x40000, scoped, tag = 'output window, operand 0']
    #allocation9 [shape = 'u8[524288]{0}', space=vmem, size = 0x80000, scoped, tag = 'output window, operand 1']
    #allocation10 [shape = 's32[2]{0}', space=sflag, size = 0x8, scoped, tag = 'scoped memory for tpu_custom_call.1']
    %12 = vsyncpa [#allocation3], 0
    %s13 = scalar_lea.sflag [#allocation3], 1
    %14 = vsyncpa %s13, 0
    %15 = vsyncpa [#allocation6], 0
    %16 = vsyncpa [#allocation4], 0
    %s17 = scalar_lea.sflag [#allocation4], 1
    %18 = vsyncpa %s17, 0
    %19 = vsyncpa [#allocation10], 0
    %s20 = scalar_lea.sflag [#allocation10], 1
    %21 = vsyncpa %s20, 0
    loop: start=0, step=1, limit=4
    $region2: #{tpu_custom_call.1} parent=1 // loop_pre_header
      _
    $region3: #{tpu_custom_call.1} parent=1 // loop_header
      %s23 = sphi 0, %s27
      %p24 = scmp.ge.s32.totalorder %s23, 4
      %s33 = sphi 0, %s35
      %s36 = sphi 0, %s33
      %s37 = sphi 0, %s36
      %s53 = sphi 0, %s37
      %s57 = sphi 0, %s57
      %s59 = sphi 0, %s57
      %s60 = sphi 0, %s59
      %s74 = sphi 0, %s60
      %s78 = sphi 0, %s78
      %s80 = sphi 0, %s78
      %s81 = sphi 0, %s80
      %s95 = sphi 0, %s81
      %s99 = sphi 0, %s99
      %s101 = sphi 0, %s99
      %s102 = sphi 0, %s101
      %s116 = sphi 0, %s102
      %s120 = sphi 0, %s120
      %s122 = sphi 0, %s120
      %s123 = sphi 0, %s122
      %s137 = sphi 0, %s123
      %s143 = sphi 0, %s145
      %s146 = sphi 0, %s143
      %s147 = sphi 0, %s146
      %s163 = sphi 0, %s147
      %s169 = sphi 0, %s171
      %s172 = sphi 0, %s169
      %s173 = sphi 0, %s172
      %s189 = sphi 0, %s173
    $region4: #{tpu_custom_call.1} parent=1 // loop_header_branch
      %26 = sbr.rel (%p24) target = $region8
    $region5: #{tpu_custom_call.1} parent=1 // loop_body
      %s28 = ssub.s32 %s23, 1
      %s29 = ssub.s32 %s23, 2
      %s30 = sadd.s32 %s23, 1
      %s31 = ssub.s32 %s23, %s30
      %p32 = scmp.eq.s32.totalorder %s31, 0
      %s34 = sadd.s32 %s33, 1
      %s35 = scalar_select %p32, %s33, %s34
      %p38 = pneg %p32
      %p39 = scmp.eq.s32.totalorder %s23, 1
      %p40 = por %p38, %p39
      %p41 = scmp.ne.s32.totalorder %s33, %s36
      %p42 = scmp.eq.s32.totalorder %s23, 0
      %p43 = por %p41, %p42
      %p44 = scmp.ne.s32.totalorder %s33, %s36
      %p45 = scmp.eq.s32.totalorder %s28, 1
      %p46 = por %p44, %p45
      %p47 = scmp.ne.s32.totalorder %s36, %s37
      %p48 = scmp.eq.s32.totalorder %s28, 0
      %p49 = por %p47, %p48
      %p50 = scmp.ne.s32.totalorder %s36, %s37
      %p51 = scmp.eq.s32.totalorder %s29, 1
      %p52 = por %p50, %p51
      %p54 = scmp.ne.s32.totalorder %s37, %s53
      %p55 = scmp.eq.s32.totalorder %s29, 0
      %p56 = por %p54, %p55
      %s58 = sadd.s32 %s57, 1
      %p61 = scmp.eq.s32.totalorder %s23, 1
      %p62 = scmp.ne.s32.totalorder %s57, %s59
      %p63 = scmp.eq.s32.totalorder %s23, 0
      %p64 = por %p62, %p63
      %p65 = scmp.ne.s32.totalorder %s57, %s59
      %p66 = scmp.eq.s32.totalorder %s28, 1
      %p67 = por %p65, %p66
      %p68 = scmp.ne.s32.totalorder %s59, %s60
      %p69 = scmp.eq.s32.totalorder %s28, 0
      %p70 = por %p68, %p69
      %p71 = scmp.ne.s32.totalorder %s59, %s60
      %p72 = scmp.eq.s32.totalorder %s29, 1
      %p73 = por %p71, %p72
      %p75 = scmp.ne.s32.totalorder %s60, %s74
      %p76 = scmp.eq.s32.totalorder %s29, 0
      %p77 = por %p75, %p76
      %s79 = sadd.s32 %s78, 1
      %p82 = scmp.eq.s32.totalorder %s23, 1
      %p83 = scmp.ne.s32.totalorder %s78, %s80
      %p84 = scmp.eq.s32.totalorder %s23, 0
      %p85 = por %p83, %p84
      %p86 = scmp.ne.s32.totalorder %s78, %s80
      %p87 = scmp.eq.s32.totalorder %s28, 1
      %p88 = por %p86, %p87
      %p89 = scmp.ne.s32.totalorder %s80, %s81
      %p90 = scmp.eq.s32.totalorder %s28, 0
      %p91 = por %p89, %p90
      %p92 = scmp.ne.s32.totalorder %s80, %s81
      %p93 = scmp.eq.s32.totalorder %s29, 1
      %p94 = por %p92, %p93
      %p96 = scmp.ne.s32.totalorder %s81, %s95
      %p97 = scmp.eq.s32.totalorder %s29, 0
      %p98 = por %p96, %p97
      %s100 = sadd.s32 %s99, 1
      %p103 = scmp.eq.s32.totalorder %s23, 1
      %p104 = scmp.ne.s32.totalorder %s99, %s101
      %p105 = scmp.eq.s32.totalorder %s23, 0
      %p106 = por %p104, %p105
      %p107 = scmp.ne.s32.totalorder %s99, %s101
      %p108 = scmp.eq.s32.totalorder %s28, 1
      %p109 = por %p107, %p108
      %p110 = scmp.ne.s32.totalorder %s101, %s102
      %p111 = scmp.eq.s32.totalorder %s28, 0
      %p112 = por %p110, %p111
      %p113 = scmp.ne.s32.totalorder %s101, %s102
      %p114 = scmp.eq.s32.totalorder %s29, 1
      %p115 = por %p113, %p114
      %p117 = scmp.ne.s32.totalorder %s102, %s116
      %p118 = scmp.eq.s32.totalorder %s29, 0
      %p119 = por %p117, %p118
      %s121 = sadd.s32 %s120, 1
      %p124 = scmp.eq.s32.totalorder %s23, 1
      %p125 = scmp.ne.s32.totalorder %s120, %s122
      %p126 = scmp.eq.s32.totalorder %s23, 0
      %p127 = por %p125, %p126
      %p128 = scmp.ne.s32.totalorder %s120, %s122
      %p129 = scmp.eq.s32.totalorder %s28, 1
      %p130 = por %p128, %p129
      %p131 = scmp.ne.s32.totalorder %s122, %s123
      %p132 = scmp.eq.s32.totalorder %s28, 0
      %p133 = por %p131, %p132
      %p134 = scmp.ne.s32.totalorder %s122, %s123
      %p135 = scmp.eq.s32.totalorder %s29, 1
      %p136 = por %p134, %p135
      %p138 = scmp.ne.s32.totalorder %s123, %s137
      %p139 = scmp.eq.s32.totalorder %s29, 0
      %p140 = por %p138, %p139
      %s141 = ssub.s32 %s23, %s30
      %p142 = scmp.eq.s32.totalorder %s141, 0
      %s144 = sadd.s32 %s143, 1
      %s145 = scalar_select %p142, %s143, %s144
      %p148 = pneg %p142
      %p149 = scmp.eq.s32.totalorder %s23, 1
      %p150 = por %p148, %p149
      %p151 = scmp.ne.s32.totalorder %s143, %s146
      %p152 = scmp.eq.s32.totalorder %s23, 0
      %p153 = por %p151, %p152
      %p154 = scmp.ne.s32.totalorder %s143, %s146
      %p155 = scmp.eq.s32.totalorder %s28, 1
      %p156 = por %p154, %p155
      %p157 = scmp.ne.s32.totalorder %s146, %s147
      %p158 = scmp.eq.s32.totalorder %s28, 0
      %p159 = por %p157, %p158
      %p160 = scmp.ne.s32.totalorder %s146, %s147
      %p161 = scmp.eq.s32.totalorder %s29, 1
      %p162 = por %p160, %p161
      %p164 = scmp.ne.s32.totalorder %s147, %s163
      %p165 = scmp.eq.s32.totalorder %s29, 0
      %p166 = por %p164, %p165
      %s167 = ssub.s32 %s23, %s30
      %p168 = scmp.eq.s32.totalorder %s167, 0
      %s170 = sadd.s32 %s169, 1
      %s171 = scalar_select %p168, %s169, %s170
      %p174 = pneg %p168
      %p175 = scmp.eq.s32.totalorder %s23, 1
      %p176 = por %p174, %p175
      %p177 = scmp.ne.s32.totalorder %s169, %s172
      %p178 = scmp.eq.s32.totalorder %s23, 0
      %p179 = por %p177, %p178
      %p180 = scmp.ne.s32.totalorder %s169, %s172
      %p181 = scmp.eq.s32.totalorder %s28, 1
      %p182 = por %p180, %p181
      %p183 = scmp.ne.s32.totalorder %s172, %s173
      %p184 = scmp.eq.s32.totalorder %s28, 0
      %p185 = por %p183, %p184
      %p186 = scmp.ne.s32.totalorder %s172, %s173
      %p187 = scmp.eq.s32.totalorder %s29, 1
      %p188 = por %p186, %p187
      %p190 = scmp.ne.s32.totalorder %s173, %s189
      %p191 = scmp.eq.s32.totalorder %s29, 0
      %p192 = por %p190, %p191
      %p193 = scmp.le.s32.totalorder 1, %s23
      %p194 = scmp.lt.s32.totalorder %s23, 3
      %p195 = pnand %p193, %p194
      %p196 = pneg %p195
      // Predicated region
      $region9: #{tpu_custom_call.1} parent=5 // pred_check
        _
      $region10: #{tpu_custom_call.1} parent=5 // pred_check_branch
        %198 = sbr.rel (%p195) target = $region12
      $region11: #{tpu_custom_call.1} parent=5 // pred_region
        %s199 = ssub.s32 %s23, 1
        // Predicated region
        $region13: #{tpu_custom_call.1} parent=11 // pred_check
          %p200 = pneg %p70
        $region14: #{tpu_custom_call.1} parent=11 // pred_check_branch
          %202 = sbr.rel (%p200) target = $region16
        $region15: #{tpu_custom_call.1} parent=11 // pred_region
          %204 = vsyncadd [#allocation6], 0
          %s205 = sshll.u32 %s1, 4
          %s206 = int_to_ptr.hbm [resolvable:$true] %s205
          %s207 = sshll.u32 [#allocation5], 4
          %s208 = int_to_ptr.vmem [resolvable:$true] %s207
          %213 = dma.hbm_to_vmem [thread:$0]  %s206, 2048, %s208, [#allocation6], 64, 64, 4
        $region16: #{tpu_custom_call.1} parent=11 // pred_fallthru
          _
        // Predicated region
        $region17: #{tpu_custom_call.1} parent=11 // pred_check
          %p214 = pneg %p91
        $region18: #{tpu_custom_call.1} parent=11 // pred_check_branch
          %216 = sbr.rel (%p214) target = $region20
        $region19: #{tpu_custom_call.1} parent=11 // pred_region
          _
        $region20: #{tpu_custom_call.1} parent=11 // pred_fallthru
          _
        // Predicated region
        $region21: #{tpu_custom_call.1} parent=11 // pred_check
          %p217 = pneg %p112
        $region22: #{tpu_custom_call.1} parent=11 // pred_check_branch
          %219 = sbr.rel (%p217) target = $region24
        $region23: #{tpu_custom_call.1} parent=11 // pred_region
          %221 = vsyncadd [#allocation6], 0
          %s222 = sshll.u32 %s3, 4
          %s223 = int_to_ptr.hbm [resolvable:$true] %s222
          %s224 = sshll.u32 [#allocation7], 4
          %s225 = int_to_ptr.vmem [resolvable:$true] %s224
          %230 = dma.hbm_to_vmem [thread:$0]  %s223, 2048, %s225, [#allocation6], 128, 128, 8
        $region24: #{tpu_custom_call.1} parent=11 // pred_fallthru
          _
        // Predicated region
        $region25: #{tpu_custom_call.1} parent=11 // pred_check
          %p231 = pneg %p133
        $region26: #{tpu_custom_call.1} parent=11 // pred_check_branch
          %233 = sbr.rel (%p231) target = $region28
        $region27: #{tpu_custom_call.1} parent=11 // pred_region
          _
        $region28: #{tpu_custom_call.1} parent=11 // pred_fallthru
          _
      $region12: #{tpu_custom_call.1} parent=5 // pred_fallthru
        _
      %p234 = scmp.lt.s32.totalorder %s23, 2
      // Predicated region
      $region29: #{tpu_custom_call.1} parent=5 // pred_check
        %p235 = pneg %p234
      $region30: #{tpu_custom_call.1} parent=5 // pred_check_branch
        %237 = sbr.rel (%p235) target = $region32
      $region31: #{tpu_custom_call.1} parent=5 // pred_region
        // Predicated region
        $region33: #{tpu_custom_call.1} parent=31 // pred_check
          %p238 = pneg %p43
        $region34: #{tpu_custom_call.1} parent=31 // pred_check_branch
          %240 = sbr.rel (%p238) target = $region36
        $region35: #{tpu_custom_call.1} parent=31 // pred_region
          %s241 = sand.u32 %s33, 1
          %s242 = scalar_lea.sflag [#allocation3], %s241
          %s243 = sand.u32 %s33, 1
          %s244 = smul.addr %s243, 512
          %s245 = scalar_lea.vmem [#allocation2], %s244
          %s246 = smul.u32 64, %s23
          %248 = vsyncadd %s242, 0
          %s249 = smul.addr %s246, 2
          %s250 = smul.addr %s249, 4
          %s251 = scalar_lea.hbm %s0, %s250
          %s252 = sshll.u32 %s251, 4
          %s253 = int_to_ptr.hbm [resolvable:$true] %s252
          %s254 = sshll.u32 %s245, 4
          %s255 = int_to_ptr.vmem [resolvable:$true] %s254
          %260 = dma.hbm_to_vmem [thread:$0]  %s253, 8192, %s255, %s242, 128, 128, 8
        $region36: #{tpu_custom_call.1} parent=31 // pred_fallthru
          _
      $region32: #{tpu_custom_call.1} parent=5 // pred_fallthru
        _
      %p261 = scmp.le.s32.totalorder 1, %s23
      %p262 = scmp.lt.s32.totalorder %s23, 3
      %p263 = pnand %p261, %p262
      %p264 = pneg %p263
      // Predicated region
      $region37: #{tpu_custom_call.1} parent=5 // pred_check
        _
      $region38: #{tpu_custom_call.1} parent=5 // pred_check_branch
        %266 = sbr.rel (%p263) target = $region40
      $region39: #{tpu_custom_call.1} parent=5 // pred_region
        %s267 = ssub.s32 %s23, 1
        %s268 = sand.u32 %s36, 1
        %s269 = scalar_lea.sflag [#allocation3], %s268
        %s270 = sand.u32 %s36, 1
        %s271 = smul.addr %s270, 512
        %s272 = scalar_lea.vmem [#allocation2], %s271
        // Predicated region
        $region41: #{tpu_custom_call.1} parent=39 // pred_check
          %p273 = pneg %p49
        $region42: #{tpu_custom_call.1} parent=39 // pred_check_branch
          %275 = sbr.rel (%p273) target = $region44
        $region43: #{tpu_custom_call.1} parent=39 // pred_region
          %277 = dma.done %s269, 8192
        $region44: #{tpu_custom_call.1} parent=39 // pred_fallthru
          _
        // Predicated region
        $region45: #{tpu_custom_call.1} parent=39 // pred_check
          %p278 = pneg %p70
        $region46: #{tpu_custom_call.1} parent=39 // pred_check_branch
          %280 = sbr.rel (%p278) target = $region48
        $region47: #{tpu_custom_call.1} parent=39 // pred_region
          %282 = dma.done [#allocation6], 2048
        $region48: #{tpu_custom_call.1} parent=39 // pred_fallthru
          _
        // Predicated region
        $region49: #{tpu_custom_call.1} parent=39 // pred_check
          %p283 = pneg %p112
        $region50: #{tpu_custom_call.1} parent=39 // pred_check_branch
          %285 = sbr.rel (%p283) target = $region52
        $region51: #{tpu_custom_call.1} parent=39 // pred_region
          %287 = dma.done [#allocation6], 2048
        $region52: #{tpu_custom_call.1} parent=39 // pred_fallthru
          _
        %s288 = sand.u32 %s36, 1
        %s289 = scalar_lea.sflag [#allocation3], %s288
        %s290 = sand.u32 %s36, 1
        %s291 = smul.addr %s290, 512
        %s292 = scalar_lea.vmem [#allocation2], %s291
        %p293 = pneg %p49
        %p294 = pneg %p46
        %p295 = pneg %p70
        %p296 = pneg %p67
        %p297 = pneg %p91
        %p298 = pneg %p88
        %p299 = pneg %p112
        %p300 = pneg %p109
        %p301 = pneg %p133
        %p302 = pneg %p130
        %p303 = pneg %p159
        %p304 = pneg %p156
        %s305 = sand.u32 %s146, 1
        %s306 = scalar_lea.sflag [#allocation4], %s305
        %s307 = sand.u32 %s146, 1
        %s308 = smul.addr %s307, 256
        %s309 = scalar_lea.vmem [#allocation8], %s308
        %p310 = pneg %p185
        %p311 = pneg %p182
        %s312 = sand.u32 %s172, 1
        %s313 = scalar_lea.sflag [#allocation10], %s312
        %s314 = sand.u32 %s172, 1
        %s315 = smul.addr %s314, 512
        %s316 = scalar_lea.vmem [#allocation9], %s315
        %s317 = smul.u32 64, %s28
        %s318 = smul.u32 64, %s28
        %s319 = smul.u32 64, %s28
        %v320 = vld [vmem:[%s272] sm:$0xff]
        %v321 = vld [vmem:[%s272 + $0x8] sm:$0xff]
        %v322 = vld [vmem:[%s272 + $0x10] sm:$0xff]
        %v323 = vld [vmem:[%s272 + $0x18] sm:$0xff]
        %v324 = vld [vmem:[%s272 + $0x20] sm:$0xff]
        %v325 = vld [vmem:[%s272 + $0x28] sm:$0xff]
        %v326 = vld [vmem:[%s272 + $0x30] sm:$0xff]
        %v327 = vld [vmem:[%s272 + $0x38] sm:$0xff]
        %v328 = vld [vmem:[%s272 + $0x40] sm:$0xff]
        %v329 = vld [vmem:[%s272 + $0x48] sm:$0xff]
        %v330 = vld [vmem:[%s272 + $0x50] sm:$0xff]
        %v331 = vld [vmem:[%s272 + $0x58] sm:$0xff]
        %v332 = vld [vmem:[%s272 + $0x60] sm:$0xff]
        %v333 = vld [vmem:[%s272 + $0x68] sm:$0xff]
        %v334 = vld [vmem:[%s272 + $0x70] sm:$0xff]
        %v335 = vld [vmem:[%s272 + $0x78] sm:$0xff]
        %v336 = vld [vmem:[%s272 + $0x80] sm:$0xff]
        %v337 = vld [vmem:[%s272 + $0x88] sm:$0xff]
        %v338 = vld [vmem:[%s272 + $0x90] sm:$0xff]
        %v339 = vld [vmem:[%s272 + $0x98] sm:$0xff]
        %v340 = vld [vmem:[%s272 + $0xa0] sm:$0xff]
        %v341 = vld [vmem:[%s272 + $0xa8] sm:$0xff]
        %v342 = vld [vmem:[%s272 + $0xb0] sm:$0xff]
        %v343 = vld [vmem:[%s272 + $0xb8] sm:$0xff]
        %v344 = vld [vmem:[%s272 + $0xc0] sm:$0xff]
        %v345 = vld [vmem:[%s272 + $0xc8] sm:$0xff]
        %v346 = vld [vmem:[%s272 + $0xd0] sm:$0xff]
        %v347 = vld [vmem:[%s272 + $0xd8] sm:$0xff]
        %v348 = vld [vmem:[%s272 + $0xe0] sm:$0xff]
        %v349 = vld [vmem:[%s272 + $0xe8] sm:$0xff]
        %v350 = vld [vmem:[%s272 + $0xf0] sm:$0xff]
        %v351 = vld [vmem:[%s272 + $0xf8] sm:$0xff]
        %v352 = vld [vmem:[%s272 + $0x100] sm:$0xff]
        %v353 = vld [vmem:[%s272 + $0x108] sm:$0xff]
        %v354 = vld [vmem:[%s272 + $0x110] sm:$0xff]
        %v355 = vld [vmem:[%s272 + $0x118] sm:$0xff]
        %v356 = vld [vmem:[%s272 + $0x120] sm:$0xff]
        %v357 = vld [vmem:[%s272 + $0x128] sm:$0xff]
        %v358 = vld [vmem:[%s272 + $0x130] sm:$0xff]
        %v359 = vld [vmem:[%s272 + $0x138] sm:$0xff]
        %v360 = vld [vmem:[%s272 + $0x140] sm:$0xff]
        %v361 = vld [vmem:[%s272 + $0x148] sm:$0xff]
        %v362 = vld [vmem:[%s272 + $0x150] sm:$0xff]
        %v363 = vld [vmem:[%s272 + $0x158] sm:$0xff]
        %v364 = vld [vmem:[%s272 + $0x160] sm:$0xff]
        %v365 = vld [vmem:[%s272 + $0x168] sm:$0xff]
        %v366 = vld [vmem:[%s272 + $0x170] sm:$0xff]
        %v367 = vld [vmem:[%s272 + $0x178] sm:$0xff]
        %v368 = vld [vmem:[%s272 + $0x180] sm:$0xff]
        %v369 = vld [vmem:[%s272 + $0x188] sm:$0xff]
        %v370 = vld [vmem:[%s272 + $0x190] sm:$0xff]
        %v371 = vld [vmem:[%s272 + $0x198] sm:$0xff]
        %v372 = vld [vmem:[%s272 + $0x1a0] sm:$0xff]
        %v373 = vld [vmem:[%s272 + $0x1a8] sm:$0xff]
        %v374 = vld [vmem:[%s272 + $0x1b0] sm:$0xff]
        %v375 = vld [vmem:[%s272 + $0x1b8] sm:$0xff]
        %v376 = vld [vmem:[%s272 + $0x1c0] sm:$0xff]
        %v377 = vld [vmem:[%s272 + $0x1c8] sm:$0xff]
        %v378 = vld [vmem:[%s272 + $0x1d0] sm:$0xff]
        %v379 = vld [vmem:[%s272 + $0x1d8] sm:$0xff]
        %v380 = vld [vmem:[%s272 + $0x1e0] sm:$0xff]
        %v381 = vld [vmem:[%s272 + $0x1e8] sm:$0xff]
        %v382 = vld [vmem:[%s272 + $0x1f0] sm:$0xff]
        %v383 = vld [vmem:[%s272 + $0x1f8] sm:$0xff]
        %v384 = vld [vmem:[#allocation5] sm:$0xf]
        %v385 = vld [vmem:[#allocation5 + $0x4] sm:$0xf]
        %v386 = vld [vmem:[#allocation5 + $0x8] sm:$0xf]
        %v387 = vld [vmem:[#allocation5 + $0xc] sm:$0xf]
        %v388 = vld [vmem:[#allocation5 + $0x10] sm:$0xf]
        %v389 = vld [vmem:[#allocation5 + $0x14] sm:$0xf]
        %v390 = vld [vmem:[#allocation5 + $0x18] sm:$0xf]
        %v391 = vld [vmem:[#allocation5 + $0x1c] sm:$0xf]
        %v392 = vld [vmem:[#allocation5 + $0x20] sm:$0xf]
        %v393 = vld [vmem:[#allocation5 + $0x24] sm:$0xf]
        %v394 = vld [vmem:[#allocation5 + $0x28] sm:$0xf]
        %v395 = vld [vmem:[#allocation5 + $0x2c] sm:$0xf]
        %v396 = vld [vmem:[#allocation5 + $0x30] sm:$0xf]
        %v397 = vld [vmem:[#allocation5 + $0x34] sm:$0xf]
        %v398 = vld [vmem:[#allocation5 + $0x38] sm:$0xf]
        %v399 = vld [vmem:[#allocation5 + $0x3c] sm:$0xf]
        %v400 = vld [vmem:[#allocation5 + $0x40] sm:$0xf]
        %v401 = vld [vmem:[#allocation5 + $0x44] sm:$0xf]
        %v402 = vld [vmem:[#allocation5 + $0x48] sm:$0xf]
        %v403 = vld [vmem:[#allocation5 + $0x4c] sm:$0xf]
        %v404 = vld [vmem:[#allocation5 + $0x50] sm:$0xf]
        %v405 = vld [vmem:[#allocation5 + $0x54] sm:$0xf]
        %v406 = vld [vmem:[#allocation5 + $0x58] sm:$0xf]
        %v407 = vld [vmem:[#allocation5 + $0x5c] sm:$0xf]
        %v408 = vld [vmem:[#allocation5 + $0x60] sm:$0xf]
        %v409 = vld [vmem:[#allocation5 + $0x64] sm:$0xf]
        %v410 = vld [vmem:[#allocation5 + $0x68] sm:$0xf]
        %v411 = vld [vmem:[#allocation5 + $0x6c] sm:$0xf]
        %v412 = vld [vmem:[#allocation5 + $0x70] sm:$0xf]
        %v413 = vld [vmem:[#allocation5 + $0x74] sm:$0xf]
        %v414 = vld [vmem:[#allocation5 + $0x78] sm:$0xf]
        %v415 = vld [vmem:[#allocation5 + $0x7c] sm:$0xf]
        %v416 = vld [vmem:[%s2] sm:$0x1]
        %v417 = vunpack.c.l.bf16 %v416
        %v418 = vperm.slane %v417, 0
        %v483 = vunpack.c.l.b16 %v320
        %v484 = vunpack.c.h.b16 %v320
        %v485 = vunpack.c.l.b16 %v321
        %v486 = vunpack.c.h.b16 %v321
        %v487 = vunpack.c.l.b16 %v322
        %v488 = vunpack.c.h.b16 %v322
        %v489 = vunpack.c.l.b16 %v323
        %v490 = vunpack.c.h.b16 %v323
        %v491 = vunpack.c.l.b16 %v324
        %v492 = vunpack.c.h.b16 %v324
        %v493 = vunpack.c.l.b16 %v325
        %v494 = vunpack.c.h.b16 %v325
        %v495 = vunpack.c.l.b16 %v326
        %v496 = vunpack.c.h.b16 %v326
        %v497 = vunpack.c.l.b16 %v327
        %v498 = vunpack.c.h.b16 %v327
        %v499 = vunpack.c.l.b16 %v328
        %v500 = vunpack.c.h.b16 %v328
        %v501 = vunpack.c.l.b16 %v329
        %v502 = vunpack.c.h.b16 %v329
        %v503 = vunpack.c.l.b16 %v330
        %v504 = vunpack.c.h.b16 %v330
        %v505 = vunpack.c.l.b16 %v331
        %v506 = vunpack.c.h.b16 %v331
        %v507 = vunpack.c.l.b16 %v332
        %v508 = vunpack.c.h.b16 %v332
        %v509 = vunpack.c.l.b16 %v333
        %v510 = vunpack.c.h.b16 %v333
        %v511 = vunpack.c.l.b16 %v334
        %v512 = vunpack.c.h.b16 %v334
        %v513 = vunpack.c.l.b16 %v335
        %v514 = vunpack.c.h.b16 %v335
        %v515 = vunpack.c.l.b16 %v336
        %v516 = vunpack.c.h.b16 %v336
        %v517 = vunpack.c.l.b16 %v337
        %v518 = vunpack.c.h.b16 %v337
        %v519 = vunpack.c.l.b16 %v338
        %v520 = vunpack.c.h.b16 %v338
        %v521 = vunpack.c.l.b16 %v339
        %v522 = vunpack.c.h.b16 %v339
        %v523 = vunpack.c.l.b16 %v340
        %v524 = vunpack.c.h.b16 %v340
        %v525 = vunpack.c.l.b16 %v341
        %v526 = vunpack.c.h.b16 %v341
        %v527 = vunpack.c.l.b16 %v342
        %v528 = vunpack.c.h.b16 %v342
        %v529 = vunpack.c.l.b16 %v343
        %v530 = vunpack.c.h.b16 %v343
        %v531 = vunpack.c.l.b16 %v344
        %v532 = vunpack.c.h.b16 %v344
        %v533 = vunpack.c.l.b16 %v345
        %v534 = vunpack.c.h.b16 %v345
        %v535 = vunpack.c.l.b16 %v346
        %v536 = vunpack.c.h.b16 %v346
        %v537 = vunpack.c.l.b16 %v347
        %v538 = vunpack.c.h.b16 %v347
        %v539 = vunpack.c.l.b16 %v348
        %v540 = vunpack.c.h.b16 %v348
        %v541 = vunpack.c.l.b16 %v349
        %v542 = vunpack.c.h.b16 %v349
        %v543 = vunpack.c.l.b16 %v350
        %v544 = vunpack.c.h.b16 %v350
        %v545 = vunpack.c.l.b16 %v351
        %v546 = vunpack.c.h.b16 %v351
        %v547 = vunpack.c.l.b16 %v352
        %v548 = vunpack.c.h.b16 %v352
        %v549 = vunpack.c.l.b16 %v353
        %v550 = vunpack.c.h.b16 %v353
        %v551 = vunpack.c.l.b16 %v354
        %v552 = vunpack.c.h.b16 %v354
        %v553 = vunpack.c.l.b16 %v355
        %v554 = vunpack.c.h.b16 %v355
        %v555 = vunpack.c.l.b16 %v356
        %v556 = vunpack.c.h.b16 %v356
        %v557 = vunpack.c.l.b16 %v357
        %v558 = vunpack.c.h.b16 %v357
        %v559 = vunpack.c.l.b16 %v358
        %v560 = vunpack.c.h.b16 %v358
        %v561 = vunpack.c.l.b16 %v359
        %v562 = vunpack.c.h.b16 %v359
        %v563 = vunpack.c.l.b16 %v360
        %v564 = vunpack.c.h.b16 %v360
        %v565 = vunpack.c.l.b16 %v361
        %v566 = vunpack.c.h.b16 %v361
        %v567 = vunpack.c.l.b16 %v362
        %v568 = vunpack.c.h.b16 %v362
        %v569 = vunpack.c.l.b16 %v363
        %v570 = vunpack.c.h.b16 %v363
        %v571 = vunpack.c.l.b16 %v364
        %v572 = vunpack.c.h.b16 %v364
        %v573 = vunpack.c.l.b16 %v365
        %v574 = vunpack.c.h.b16 %v365
        %v575 = vunpack.c.l.b16 %v366
        %v576 = vunpack.c.h.b16 %v366
        %v577 = vunpack.c.l.b16 %v367
        %v578 = vunpack.c.h.b16 %v367
        %v579 = vunpack.c.l.b16 %v368
        %v580 = vunpack.c.h.b16 %v368
        %v581 = vunpack.c.l.b16 %v369
        %v582 = vunpack.c.h.b16 %v369
        %v583 = vunpack.c.l.b16 %v370
        %v584 = vunpack.c.h.b16 %v370
        %v585 = vunpack.c.l.b16 %v371
        %v586 = vunpack.c.h.b16 %v371
        %v587 = vunpack.c.l.b16 %v372
        %v588 = vunpack.c.h.b16 %v372
        %v589 = vunpack.c.l.b16 %v373
        %v590 = vunpack.c.h.b16 %v373
        %v591 = vunpack.c.l.b16 %v374
        %v592 = vunpack.c.h.b16 %v374
        %v593 = vunpack.c.l.b16 %v375
        %v594 = vunpack.c.h.b16 %v375
        %v595 = vunpack.c.l.b16 %v376
        %v596 = vunpack.c.h.b16 %v376
        %v597 = vunpack.c.l.b16 %v377
        %v598 = vunpack.c.h.b16 %v377
        %v599 = vunpack.c.l.b16 %v378
        %v600 = vunpack.c.h.b16 %v378
        %v601 = vunpack.c.l.b16 %v379
        %v602 = vunpack.c.h.b16 %v379
        %v603 = vunpack.c.l.b16 %v380
        %v604 = vunpack.c.h.b16 %v380
        %v605 = vunpack.c.l.b16 %v381
        %v606 = vunpack.c.h.b16 %v381
        %v607 = vunpack.c.l.b16 %v382
        %v608 = vunpack.c.h.b16 %v382
        %v609 = vunpack.c.l.b16 %v383
        %v610 = vunpack.c.h.b16 %v383
        %v611 = vpack.c.b16 %v485, %v483
        %v612 = vpack.c.b16 %v486, %v484
        %v613 = vpack.c.b16 %v489, %v487
        %v614 = vpack.c.b16 %v490, %v488
        %v615 = vpack.c.b16 %v493, %v491
        %v616 = vpack.c.b16 %v494, %v492
        %v617 = vpack.c.b16 %v497, %v495
        %v618 = vpack.c.b16 %v498, %v496
        %v619 = vpack.c.b16 %v501, %v499
        %v620 = vpack.c.b16 %v502, %v500
        %v621 = vpack.c.b16 %v505, %v503
        %v622 = vpack.c.b16 %v506, %v504
        %v623 = vpack.c.b16 %v509, %v507
        %v624 = vpack.c.b16 %v510, %v508
        %v625 = vpack.c.b16 %v513, %v511
        %v626 = vpack.c.b16 %v514, %v512
        %v627 = vpack.c.b16 %v517, %v515
        %v628 = vpack.c.b16 %v518, %v516
        %v629 = vpack.c.b16 %v521, %v519
        %v630 = vpack.c.b16 %v522, %v520
        %v631 = vpack.c.b16 %v525, %v523
        %v632 = vpack.c.b16 %v526, %v524
        %v633 = vpack.c.b16 %v529, %v527
        %v634 = vpack.c.b16 %v530, %v528
        %v635 = vpack.c.b16 %v533, %v531
        %v636 = vpack.c.b16 %v534, %v532
        %v637 = vpack.c.b16 %v537, %v535
        %v638 = vpack.c.b16 %v538, %v536
        %v639 = vpack.c.b16 %v541, %v539
        %v640 = vpack.c.b16 %v542, %v540
        %v641 = vpack.c.b16 %v545, %v543
        %v642 = vpack.c.b16 %v546, %v544
        %v643 = vpack.c.b16 %v549, %v547
        %v644 = vpack.c.b16 %v550, %v548
        %v645 = vpack.c.b16 %v553, %v551
        %v646 = vpack.c.b16 %v554, %v552
        %v647 = vpack.c.b16 %v557, %v555
        %v648 = vpack.c.b16 %v558, %v556
        %v649 = vpack.c.b16 %v561, %v559
        %v650 = vpack.c.b16 %v562, %v560
        %v651 = vpack.c.b16 %v565, %v563
        %v652 = vpack.c.b16 %v566, %v564
        %v653 = vpack.c.b16 %v569, %v567
        %v654 = vpack.c.b16 %v570, %v568
        %v655 = vpack.c.b16 %v573, %v571
        %v656 = vpack.c.b16 %v574, %v572
        %v657 = vpack.c.b16 %v577, %v575
        %v658 = vpack.c.b16 %v578, %v576
        %v659 = vpack.c.b16 %v581, %v579
        %v660 = vpack.c.b16 %v582, %v580
        %v661 = vpack.c.b16 %v585, %v583
        %v662 = vpack.c.b16 %v586, %v584
        %v663 = vpack.c.b16 %v589, %v587
        %v664 = vpack.c.b16 %v590, %v588
        %v665 = vpack.c.b16 %v593, %v591
        %v666 = vpack.c.b16 %v594, %v592
        %v667 = vpack.c.b16 %v597, %v595
        %v668 = vpack.c.b16 %v598, %v596
        %v669 = vpack.c.b16 %v601, %v599
        %v670 = vpack.c.b16 %v602, %v600
        %v671 = vpack.c.b16 %v605, %v603
        %v672 = vpack.c.b16 %v606, %v604
        %v673 = vpack.c.b16 %v609, %v607
        %v674 = vpack.c.b16 %v610, %v608
        %v771 = vunpack.c.l.b16 %v384
        %v772 = vunpack.c.l.b16 %v385
        %v773 = vunpack.c.l.b16 %v386
        %v774 = vunpack.c.l.b16 %v387
        %v775 = vunpack.c.l.b16 %v388
        %v776 = vunpack.c.l.b16 %v389
        %v777 = vunpack.c.l.b16 %v390
        %v778 = vunpack.c.l.b16 %v391
        %v779 = vunpack.c.l.b16 %v392
        %v780 = vunpack.c.l.b16 %v393
        %v781 = vunpack.c.l.b16 %v394
        %v782 = vunpack.c.l.b16 %v395
        %v783 = vunpack.c.l.b16 %v396
        %v784 = vunpack.c.l.b16 %v397
        %v785 = vunpack.c.l.b16 %v398
        %v786 = vunpack.c.l.b16 %v399
        %v787 = vunpack.c.l.b16 %v400
        %v788 = vunpack.c.l.b16 %v401
        %v789 = vunpack.c.l.b16 %v402
        %v790 = vunpack.c.l.b16 %v403
        %v791 = vunpack.c.l.b16 %v404
        %v792 = vunpack.c.l.b16 %v405
        %v793 = vunpack.c.l.b16 %v406
        %v794 = vunpack.c.l.b16 %v407
        %v795 = vunpack.c.l.b16 %v408
        %v796 = vunpack.c.l.b16 %v409
        %v797 = vunpack.c.l.b16 %v410
        %v798 = vunpack.c.l.b16 %v411
        %v799 = vunpack.c.l.b16 %v412
        %v800 = vunpack.c.l.b16 %v413
        %v801 = vunpack.c.l.b16 %v414
        %v802 = vunpack.c.l.b16 %v415
        %v803 = vpack.c.b16 %v772, %v771
        %v804 = vpack.c.b16 %v774, %v773
        %v805 = vpack.c.b16 %v776, %v775
        %v806 = vpack.c.b16 %v778, %v777
        %v807 = vpack.c.b16 %v780, %v779
        %v808 = vpack.c.b16 %v782, %v781
        %v809 = vpack.c.b16 %v784, %v783
        %v810 = vpack.c.b16 %v786, %v785
        %v811 = vpack.c.b16 %v788, %v787
        %v812 = vpack.c.b16 %v790, %v789
        %v813 = vpack.c.b16 %v792, %v791
        %v814 = vpack.c.b16 %v794, %v793
        %v815 = vpack.c.b16 %v796, %v795
        %v816 = vpack.c.b16 %v798, %v797
        %v817 = vpack.c.b16 %v800, %v799
        %v818 = vpack.c.b16 %v802, %v801
        %835 = vmatpush.bf16.msra.mxu0 %v810
        %836 = vmatpush.bf16.msra.mxu0 %v809
        %837 = vmatpush.bf16.msra.mxu0 %v808
        %838 = vmatpush.bf16.msra.mxu0 %v807
        %839 = vmatpush.bf16.msra.mxu0 %v806
        %840 = vmatpush.bf16.msra.mxu0 %v805
        %841 = vmatpush.bf16.msra.mxu0 %v804
        %842 = vmatpush.bf16.msra.mxu0 %v803
        %843 = vmatmul.bf16.gmra.mxu0 %v611
        %v844 = vpop.f32.mrf.mxu0
        %v845 = vadd.f32 %v418, %v844
        %v846 = vpop.f32.mrf.mxu0
        %v847 = vadd.f32 %v418, %v846
        %848 = vmatmul.bf16.gmra.mxu0 %v613
        %v849 = vpop.f32.mrf.mxu0
        %v850 = vadd.f32 %v418, %v849
        %v851 = vpop.f32.mrf.mxu0
        %v852 = vadd.f32 %v418, %v851
        %853 = vmatmul.bf16.gmra.mxu0 %v615
        %v854 = vpop.f32.mrf.mxu0
        %v855 = vadd.f32 %v418, %v854
        %v856 = vpop.f32.mrf.mxu0
        %v857 = vadd.f32 %v418, %v856
        %858 = vmatmul.bf16.gmra.mxu0 %v617
        %v859 = vpop.f32.mrf.mxu0
        %v860 = vadd.f32 %v418, %v859
        %v861 = vpop.f32.mrf.mxu0
        %v862 = vadd.f32 %v418, %v861
        %863 = vmatmul.bf16.gmra.mxu0 %v619
        %v864 = vpop.f32.mrf.mxu0
        %v865 = vadd.f32 %v418, %v864
        %v866 = vpop.f32.mrf.mxu0
        %v867 = vadd.f32 %v418, %v866
        %868 = vmatmul.bf16.gmra.mxu0 %v621
        %v869 = vpop.f32.mrf.mxu0
        %v870 = vadd.f32 %v418, %v869
        %v871 = vpop.f32.mrf.mxu0
        %v872 = vadd.f32 %v418, %v871
        %873 = vmatmul.bf16.gmra.mxu0 %v623
        %v874 = vpop.f32.mrf.mxu0
        %v875 = vadd.f32 %v418, %v874
        %v876 = vpop.f32.mrf.mxu0
        %v877 = vadd.f32 %v418, %v876
        %878 = vmatmul.bf16.gmra.mxu0 %v625
        %v879 = vpop.f32.mrf.mxu0
        %v880 = vadd.f32 %v418, %v879
        %v881 = vpop.f32.mrf.mxu0
        %v882 = vadd.f32 %v418, %v881
        %883 = vmatmul.bf16.gmra.mxu0 %v627
        %v884 = vpop.f32.mrf.mxu0
        %v885 = vadd.f32 %v418, %v884
        %v886 = vpop.f32.mrf.mxu0
        %v887 = vadd.f32 %v418, %v886
        %888 = vmatmul.bf16.gmra.mxu0 %v629
        %v889 = vpop.f32.mrf.mxu0
        %v890 = vadd.f32 %v418, %v889
        %v891 = vpop.f32.mrf.mxu0
        %v892 = vadd.f32 %v418, %v891
        %893 = vmatmul.bf16.gmra.mxu0 %v631
        %v894 = vpop.f32.mrf.mxu0
        %v895 = vadd.f32 %v418, %v894
        %v896 = vpop.f32.mrf.mxu0
        %v897 = vadd.f32 %v418, %v896
        %898 = vmatmul.bf16.gmra.mxu0 %v633
        %v899 = vpop.f32.mrf.mxu0
        %v900 = vadd.f32 %v418, %v899
        %v901 = vpop.f32.mrf.mxu0
        %v902 = vadd.f32 %v418, %v901
        %903 = vmatmul.bf16.gmra.mxu0 %v635
        %v904 = vpop.f32.mrf.mxu0
        %v905 = vadd.f32 %v418, %v904
        %v906 = vpop.f32.mrf.mxu0
        %v907 = vadd.f32 %v418, %v906
        %908 = vmatmul.bf16.gmra.mxu0 %v637
        %v909 = vpop.f32.mrf.mxu0
        %v910 = vadd.f32 %v418, %v909
        %v911 = vpop.f32.mrf.mxu0
        %v912 = vadd.f32 %v418, %v911
        %913 = vmatmul.bf16.gmra.mxu0 %v639
        %v914 = vpop.f32.mrf.mxu0
        %v915 = vadd.f32 %v418, %v914
        %v916 = vpop.f32.mrf.mxu0
        %v917 = vadd.f32 %v418, %v916
        %918 = vmatmul.bf16.gmra.mxu0 %v641
        %v919 = vpop.f32.mrf.mxu0
        %v920 = vadd.f32 %v418, %v919
        %v921 = vpop.f32.mrf.mxu0
        %v922 = vadd.f32 %v418, %v921
        %923 = vmatmul.bf16.gmra.mxu0 %v643
        %v924 = vpop.f32.mrf.mxu0
        %v925 = vadd.f32 %v418, %v924
        %v926 = vpop.f32.mrf.mxu0
        %v927 = vadd.f32 %v418, %v926
        %928 = vmatmul.bf16.gmra.mxu0 %v645
        %v929 = vpop.f32.mrf.mxu0
        %v930 = vadd.f32 %v418, %v929
        %v931 = vpop.f32.mrf.mxu0
        %v932 = vadd.f32 %v418, %v931
        %933 = vmatmul.bf16.gmra.mxu0 %v647
        %v934 = vpop.f32.mrf.mxu0
        %v935 = vadd.f32 %v418, %v934
        %v936 = vpop.f32.mrf.mxu0
        %v937 = vadd.f32 %v418, %v936
        %938 = vmatmul.bf16.gmra.mxu0 %v649
        %v939 = vpop.f32.mrf.mxu0
        %v940 = vadd.f32 %v418, %v939
        %v941 = vpop.f32.mrf.mxu0
        %v942 = vadd.f32 %v418, %v941
        %943 = vmatmul.bf16.gmra.mxu0 %v651
        %v944 = vpop.f32.mrf.mxu0
        %v945 = vadd.f32 %v418, %v944
        %v946 = vpop.f32.mrf.mxu0
        %v947 = vadd.f32 %v418, %v946
        %948 = vmatmul.bf16.gmra.mxu0 %v653
        %v949 = vpop.f32.mrf.mxu0
        %v950 = vadd.f32 %v418, %v949
        %v951 = vpop.f32.mrf.mxu0
        %v952 = vadd.f32 %v418, %v951
        %953 = vmatmul.bf16.gmra.mxu0 %v655
        %v954 = vpop.f32.mrf.mxu0
        %v955 = vadd.f32 %v418, %v954
        %v956 = vpop.f32.mrf.mxu0
        %v957 = vadd.f32 %v418, %v956
        %958 = vmatmul.bf16.gmra.mxu0 %v657
        %v959 = vpop.f32.mrf.mxu0
        %v960 = vadd.f32 %v418, %v959
        %v961 = vpop.f32.mrf.mxu0
        %v962 = vadd.f32 %v418, %v961
        %963 = vmatmul.bf16.gmra.mxu0 %v659
        %v964 = vpop.f32.mrf.mxu0
        %v965 = vadd.f32 %v418, %v964
        %v966 = vpop.f32.mrf.mxu0
        %v967 = vadd.f32 %v418, %v966
        %968 = vmatmul.bf16.gmra.mxu0 %v661
        %v969 = vpop.f32.mrf.mxu0
        %v970 = vadd.f32 %v418, %v969
        %v971 = vpop.f32.mrf.mxu0
        %v972 = vadd.f32 %v418, %v971
        %973 = vmatmul.bf16.gmra.mxu0 %v663
        %v974 = vpop.f32.mrf.mxu0
        %v975 = vadd.f32 %v418, %v974
        %v976 = vpop.f32.mrf.mxu0
        %v977 = vadd.f32 %v418, %v976
        %978 = vmatmul.bf16.gmra.mxu0 %v665
        %v979 = vpop.f32.mrf.mxu0
        %v980 = vadd.f32 %v418, %v979
        %v981 = vpop.f32.mrf.mxu0
        %v982 = vadd.f32 %v418, %v981
        %983 = vmatmul.bf16.gmra.mxu0 %v667
        %v984 = vpop.f32.mrf.mxu0
        %v985 = vadd.f32 %v418, %v984
        %v986 = vpop.f32.mrf.mxu0
        %v987 = vadd.f32 %v418, %v986
        %988 = vmatmul.bf16.gmra.mxu0 %v669
        %v989 = vpop.f32.mrf.mxu0
        %v990 = vadd.f32 %v418, %v989
        %v991 = vpop.f32.mrf.mxu0
        %v992 = vadd.f32 %v418, %v991
        %993 = vmatmul.bf16.gmra.mxu0 %v671
        %v994 = vpop.f32.mrf.mxu0
        %v995 = vadd.f32 %v418, %v994
        %v996 = vpop.f32.mrf.mxu0
        %v997 = vadd.f32 %v418, %v996
        %998 = vmatmul.bf16.gmra.mxu0 %v673
        %v999 = vpop.f32.mrf.mxu0
        %v1000 = vadd.f32 %v418, %v999
        %v1001 = vpop.f32.mrf.mxu0
        %v1002 = vadd.f32 %v418, %v1001
        %1003 = vdwg.mxu0
        %1004 = vmatpush.bf16.msra.mxu0 %v818
        %1005 = vmatpush.bf16.msra.mxu0 %v817
        %1006 = vmatpush.bf16.msra.mxu0 %v816
        %1007 = vmatpush.bf16.msra.mxu0 %v815
        %1008 = vmatpush.bf16.msra.mxu0 %v814
        %1009 = vmatpush.bf16.msra.mxu0 %v813
        %1010 = vmatpush.bf16.msra.mxu0 %v812
        %1011 = vmatpush.bf16.msra.mxu0 %v811
        %1012 = vmatmul.bf16.gmra.mxu0 %v612
        %v1013 = vpop.f32.mrf.mxu0
        %v1014 = vadd.f32 %v845, %v1013
        %v1015 = vpop.f32.mrf.mxu0
        %v1016 = vadd.f32 %v847, %v1015
        %1017 = vmatmul.bf16.gmra.mxu0 %v614
        %v1018 = vpop.f32.mrf.mxu0
        %v1019 = vadd.f32 %v850, %v1018
        %v1020 = vpop.f32.mrf.mxu0
        %v1021 = vadd.f32 %v852, %v1020
        %1022 = vmatmul.bf16.gmra.mxu0 %v616
        %v1023 = vpop.f32.mrf.mxu0
        %v1024 = vadd.f32 %v855, %v1023
        %v1025 = vpop.f32.mrf.mxu0
        %v1026 = vadd.f32 %v857, %v1025
        %1027 = vmatmul.bf16.gmra.mxu0 %v618
        %v1028 = vpop.f32.mrf.mxu0
        %v1029 = vadd.f32 %v860, %v1028
        %v1030 = vpop.f32.mrf.mxu0
        %v1031 = vadd.f32 %v862, %v1030
        %1032 = vmatmul.bf16.gmra.mxu0 %v620
        %v1033 = vpop.f32.mrf.mxu0
        %v1034 = vadd.f32 %v865, %v1033
        %v1035 = vpop.f32.mrf.mxu0
        %v1036 = vadd.f32 %v867, %v1035
        %1037 = vmatmul.bf16.gmra.mxu0 %v622
        %v1038 = vpop.f32.mrf.mxu0
        %v1039 = vadd.f32 %v870, %v1038
        %v1040 = vpop.f32.mrf.mxu0
        %v1041 = vadd.f32 %v872, %v1040
        %1042 = vmatmul.bf16.gmra.mxu0 %v624
        %v1043 = vpop.f32.mrf.mxu0
        %v1044 = vadd.f32 %v875, %v1043
        %v1045 = vpop.f32.mrf.mxu0
        %v1046 = vadd.f32 %v877, %v1045
        %1047 = vmatmul.bf16.gmra.mxu0 %v626
        %v1048 = vpop.f32.mrf.mxu0
        %v1049 = vadd.f32 %v880, %v1048
        %v1050 = vpop.f32.mrf.mxu0
        %v1051 = vadd.f32 %v882, %v1050
        %1052 = vmatmul.bf16.gmra.mxu0 %v628
        %v1053 = vpop.f32.mrf.mxu0
        %v1054 = vadd.f32 %v885, %v1053
        %v1055 = vpop.f32.mrf.mxu0
        %v1056 = vadd.f32 %v887, %v1055
        %1057 = vmatmul.bf16.gmra.mxu0 %v630
        %v1058 = vpop.f32.mrf.mxu0
        %v1059 = vadd.f32 %v890, %v1058
        %v1060 = vpop.f32.mrf.mxu0
        %v1061 = vadd.f32 %v892, %v1060
        %1062 = vmatmul.bf16.gmra.mxu0 %v632
        %v1063 = vpop.f32.mrf.mxu0
        %v1064 = vadd.f32 %v895, %v1063
        %v1065 = vpop.f32.mrf.mxu0
        %v1066 = vadd.f32 %v897, %v1065
        %1067 = vmatmul.bf16.gmra.mxu0 %v634
        %v1068 = vpop.f32.mrf.mxu0
        %v1069 = vadd.f32 %v900, %v1068
        %v1070 = vpop.f32.mrf.mxu0
        %v1071 = vadd.f32 %v902, %v1070
        %1072 = vmatmul.bf16.gmra.mxu0 %v636
        %v1073 = vpop.f32.mrf.mxu0
        %v1074 = vadd.f32 %v905, %v1073
        %v1075 = vpop.f32.mrf.mxu0
        %v1076 = vadd.f32 %v907, %v1075
        %1077 = vmatmul.bf16.gmra.mxu0 %v638
        %v1078 = vpop.f32.mrf.mxu0
        %v1079 = vadd.f32 %v910, %v1078
        %v1080 = vpop.f32.mrf.mxu0
        %v1081 = vadd.f32 %v912, %v1080
        %1082 = vmatmul.bf16.gmra.mxu0 %v640
        %v1083 = vpop.f32.mrf.mxu0
        %v1084 = vadd.f32 %v915, %v1083
        %v1085 = vpop.f32.mrf.mxu0
        %v1086 = vadd.f32 %v917, %v1085
        %1087 = vmatmul.bf16.gmra.mxu0 %v642
        %v1088 = vpop.f32.mrf.mxu0
        %v1089 = vadd.f32 %v920, %v1088
        %v1090 = vpop.f32.mrf.mxu0
        %v1091 = vadd.f32 %v922, %v1090
        %1092 = vmatmul.bf16.gmra.mxu0 %v644
        %v1093 = vpop.f32.mrf.mxu0
        %v1094 = vadd.f32 %v925, %v1093
        %v1095 = vpop.f32.mrf.mxu0
        %v1096 = vadd.f32 %v927, %v1095
        %1097 = vmatmul.bf16.gmra.mxu0 %v646
        %v1098 = vpop.f32.mrf.mxu0
        %v1099 = vadd.f32 %v930, %v1098
        %v1100 = vpop.f32.mrf.mxu0
        %v1101 = vadd.f32 %v932, %v1100
        %1102 = vmatmul.bf16.gmra.mxu0 %v648
        %v1103 = vpop.f32.mrf.mxu0
        %v1104 = vadd.f32 %v935, %v1103
        %v1105 = vpop.f32.mrf.mxu0
        %v1106 = vadd.f32 %v937, %v1105
        %1107 = vmatmul.bf16.gmra.mxu0 %v650
        %v1108 = vpop.f32.mrf.mxu0
        %v1109 = vadd.f32 %v940, %v1108
        %v1110 = vpop.f32.mrf.mxu0
        %v1111 = vadd.f32 %v942, %v1110
        %1112 = vmatmul.bf16.gmra.mxu0 %v652
        %v1113 = vpop.f32.mrf.mxu0
        %v1114 = vadd.f32 %v945, %v1113
        %v1115 = vpop.f32.mrf.mxu0
        %v1116 = vadd.f32 %v947, %v1115
        %1117 = vmatmul.bf16.gmra.mxu0 %v654
        %v1118 = vpop.f32.mrf.mxu0
        %v1119 = vadd.f32 %v950, %v1118
        %v1120 = vpop.f32.mrf.mxu0
        %v1121 = vadd.f32 %v952, %v1120
        %1122 = vmatmul.bf16.gmra.mxu0 %v656
        %v1123 = vpop.f32.mrf.mxu0
        %v1124 = vadd.f32 %v955, %v1123
        %v1125 = vpop.f32.mrf.mxu0
        %v1126 = vadd.f32 %v957, %v1125
        %1127 = vmatmul.bf16.gmra.mxu0 %v658
        %v1128 = vpop.f32.mrf.mxu0
        %v1129 = vadd.f32 %v960, %v1128
        %v1130 = vpop.f32.mrf.mxu0
        %v1131 = vadd.f32 %v962, %v1130
        %1132 = vmatmul.bf16.gmra.mxu0 %v660
        %v1133 = vpop.f32.mrf.mxu0
        %v1134 = vadd.f32 %v965, %v1133
        %v1135 = vpop.f32.mrf.mxu0
        %v1136 = vadd.f32 %v967, %v1135
        %1137 = vmatmul.bf16.gmra.mxu0 %v662
        %v1138 = vpop.f32.mrf.mxu0
        %v1139 = vadd.f32 %v970, %v1138
        %v1140 = vpop.f32.mrf.mxu0
        %v1141 = vadd.f32 %v972, %v1140
        %1142 = vmatmul.bf16.gmra.mxu0 %v664
        %v1143 = vpop.f32.mrf.mxu0
        %v1144 = vadd.f32 %v975, %v1143
        %v1145 = vpop.f32.mrf.mxu0
        %v1146 = vadd.f32 %v977, %v1145
        %1147 = vmatmul.bf16.gmra.mxu0 %v666
        %v1148 = vpop.f32.mrf.mxu0
        %v1149 = vadd.f32 %v980, %v1148
        %v1150 = vpop.f32.mrf.mxu0
        %v1151 = vadd.f32 %v982, %v1150
        %1152 = vmatmul.bf16.gmra.mxu0 %v668
        %v1153 = vpop.f32.mrf.mxu0
        %v1154 = vadd.f32 %v985, %v1153
        %v1155 = vpop.f32.mrf.mxu0
        %v1156 = vadd.f32 %v987, %v1155
        %1157 = vmatmul.bf16.gmra.mxu0 %v670
        %v1158 = vpop.f32.mrf.mxu0
        %v1159 = vadd.f32 %v990, %v1158
        %v1160 = vpop.f32.mrf.mxu0
        %v1161 = vadd.f32 %v992, %v1160
        %1162 = vmatmul.bf16.gmra.mxu0 %v672
        %v1163 = vpop.f32.mrf.mxu0
        %v1164 = vadd.f32 %v995, %v1163
        %v1165 = vpop.f32.mrf.mxu0
        %v1166 = vadd.f32 %v997, %v1165
        %1167 = vmatmul.bf16.gmra.mxu0 %v674
        %v1168 = vpop.f32.mrf.mxu0
        %v1169 = vadd.f32 %v1000, %v1168
        %v1170 = vpop.f32.mrf.mxu0
        %v1171 = vadd.f32 %v1002, %v1170
        %1172 = vdwg.mxu0
        %v1173 = vmax.f32 %v1014, 0.0
        %v1174 = vmax.f32 %v1016, 0.0
        %v1175 = vmax.f32 %v1019, 0.0
        %v1176 = vmax.f32 %v1021, 0.0
        %v1177 = vmax.f32 %v1024, 0.0
        %v1178 = vmax.f32 %v1026, 0.0
        %v1179 = vmax.f32 %v1029, 0.0
        %v1180 = vmax.f32 %v1031, 0.0
        %v1181 = vmax.f32 %v1034, 0.0
        %v1182 = vmax.f32 %v1036, 0.0
        %v1183 = vmax.f32 %v1039, 0.0
        %v1184 = vmax.f32 %v1041, 0.0
        %v1185 = vmax.f32 %v1044, 0.0
        %v1186 = vmax.f32 %v1046, 0.0
        %v1187 = vmax.f32 %v1049, 0.0
        %v1188 = vmax.f32 %v1051, 0.0
        %v1189 = vmax.f32 %v1054, 0.0
        %v1190 = vmax.f32 %v1056, 0.0
        %v1191 = vmax.f32 %v1059, 0.0
        %v1192 = vmax.f32 %v1061, 0.0
        %v1193 = vmax.f32 %v1064, 0.0
        %v1194 = vmax.f32 %v1066, 0.0
        %v1195 = vmax.f32 %v1069, 0.0
        %v1196 = vmax.f32 %v1071, 0.0
        %v1197 = vmax.f32 %v1074, 0.0
        %v1198 = vmax.f32 %v1076, 0.0
        %v1199 = vmax.f32 %v1079, 0.0
        %v1200 = vmax.f32 %v1081, 0.0
        %v1201 = vmax.f32 %v1084, 0.0
        %v1202 = vmax.f32 %v1086, 0.0
        %v1203 = vmax.f32 %v1089, 0.0
        %v1204 = vmax.f32 %v1091, 0.0
        %v1205 = vmax.f32 %v1094, 0.0
        %v1206 = vmax.f32 %v1096, 0.0
        %v1207 = vmax.f32 %v1099, 0.0
        %v1208 = vmax.f32 %v1101, 0.0
        %v1209 = vmax.f32 %v1104, 0.0
        %v1210 = vmax.f32 %v1106, 0.0
        %v1211 = vmax.f32 %v1109, 0.0
        %v1212 = vmax.f32 %v1111, 0.0
        %v1213 = vmax.f32 %v1114, 0.0
        %v1214 = vmax.f32 %v1116, 0.0
        %v1215 = vmax.f32 %v1119, 0.0
        %v1216 = vmax.f32 %v1121, 0.0
        %v1217 = vmax.f32 %v1124, 0.0
        %v1218 = vmax.f32 %v1126, 0.0
        %v1219 = vmax.f32 %v1129, 0.0
        %v1220 = vmax.f32 %v1131, 0.0
        %v1221 = vmax.f32 %v1134, 0.0
        %v1222 = vmax.f32 %v1136, 0.0
        %v1223 = vmax.f32 %v1139, 0.0
        %v1224 = vmax.f32 %v1141, 0.0
        %v1225 = vmax.f32 %v1144, 0.0
        %v1226 = vmax.f32 %v1146, 0.0
        %v1227 = vmax.f32 %v1149, 0.0
        %v1228 = vmax.f32 %v1151, 0.0
        %v1229 = vmax.f32 %v1154, 0.0
        %v1230 = vmax.f32 %v1156, 0.0
        %v1231 = vmax.f32 %v1159, 0.0
        %v1232 = vmax.f32 %v1161, 0.0
        %v1233 = vmax.f32 %v1164, 0.0
        %v1234 = vmax.f32 %v1166, 0.0
        %v1235 = vmax.f32 %v1169, 0.0
        %v1236 = vmax.f32 %v1171, 0.0
        %v1237 = vpack.c.bf16 %v1173, %v1173
        %v1238 = vpack.c.bf16 %v1174, %v1174
        %v1239 = vpack.c.bf16 %v1175, %v1175
        %v1240 = vpack.c.bf16 %v1176, %v1176
        %v1241 = vpack.c.bf16 %v1177, %v1177
        %v1242 = vpack.c.bf16 %v1178, %v1178
        %v1243 = vpack.c.bf16 %v1179, %v1179
        %v1244 = vpack.c.bf16 %v1180, %v1180
        %v1245 = vpack.c.bf16 %v1181, %v1181
        %v1246 = vpack.c.bf16 %v1182, %v1182
        %v1247 = vpack.c.bf16 %v1183, %v1183
        %v1248 = vpack.c.bf16 %v1184, %v1184
        %v1249 = vpack.c.bf16 %v1185, %v1185
        %v1250 = vpack.c.bf16 %v1186, %v1186
        %v1251 = vpack.c.bf16 %v1187, %v1187
        %v1252 = vpack.c.bf16 %v1188, %v1188
        %v1253 = vpack.c.bf16 %v1189, %v1189
        %v1254 = vpack.c.bf16 %v1190, %v1190
        %v1255 = vpack.c.bf16 %v1191, %v1191
        %v1256 = vpack.c.bf16 %v1192, %v1192
        %v1257 = vpack.c.bf16 %v1193, %v1193
        %v1258 = vpack.c.bf16 %v1194, %v1194
        %v1259 = vpack.c.bf16 %v1195, %v1195
        %v1260 = vpack.c.bf16 %v1196, %v1196
        %v1261 = vpack.c.bf16 %v1197, %v1197
        %v1262 = vpack.c.bf16 %v1198, %v1198
        %v1263 = vpack.c.bf16 %v1199, %v1199
        %v1264 = vpack.c.bf16 %v1200, %v1200
        %v1265 = vpack.c.bf16 %v1201, %v1201
        %v1266 = vpack.c.bf16 %v1202, %v1202
        %v1267 = vpack.c.bf16 %v1203, %v1203
        %v1268 = vpack.c.bf16 %v1204, %v1204
        %v1269 = vpack.c.bf16 %v1205, %v1205
        %v1270 = vpack.c.bf16 %v1206, %v1206
        %v1271 = vpack.c.bf16 %v1207, %v1207
        %v1272 = vpack.c.bf16 %v1208, %v1208
        %v1273 = vpack.c.bf16 %v1209, %v1209
        %v1274 = vpack.c.bf16 %v1210, %v1210
        %v1275 = vpack.c.bf16 %v1211, %v1211
        %v1276 = vpack.c.bf16 %v1212, %v1212
        %v1277 = vpack.c.bf16 %v1213, %v1213
        %v1278 = vpack.c.bf16 %v1214, %v1214
        %v1279 = vpack.c.bf16 %v1215, %v1215
        %v1280 = vpack.c.bf16 %v1216, %v1216
        %v1281 = vpack.c.bf16 %v1217, %v1217
        %v1282 = vpack.c.bf16 %v1218, %v1218
        %v1283 = vpack.c.bf16 %v1219, %v1219
        %v1284 = vpack.c.bf16 %v1220, %v1220
        %v1285 = vpack.c.bf16 %v1221, %v1221
        %v1286 = vpack.c.bf16 %v1222, %v1222
        %v1287 = vpack.c.bf16 %v1223, %v1223
        %v1288 = vpack.c.bf16 %v1224, %v1224
        %v1289 = vpack.c.bf16 %v1225, %v1225
        %v1290 = vpack.c.bf16 %v1226, %v1226
        %v1291 = vpack.c.bf16 %v1227, %v1227
        %v1292 = vpack.c.bf16 %v1228, %v1228
        %v1293 = vpack.c.bf16 %v1229, %v1229
        %v1294 = vpack.c.bf16 %v1230, %v1230
        %v1295 = vpack.c.bf16 %v1231, %v1231
        %v1296 = vpack.c.bf16 %v1232, %v1232
        %v1297 = vpack.c.bf16 %v1233, %v1233
        %v1298 = vpack.c.bf16 %v1234, %v1234
        %v1299 = vpack.c.bf16 %v1235, %v1235
        %v1300 = vpack.c.bf16 %v1236, %v1236
        %1301 = vst [vmem:[%s309] sm:$0xf] %v1237
        %1302 = vst [vmem:[%s309 + $0x4] sm:$0xf] %v1238
        %1303 = vst [vmem:[%s309 + $0x8] sm:$0xf] %v1239
        %1304 = vst [vmem:[%s309 + $0xc] sm:$0xf] %v1240
        %1305 = vst [vmem:[%s309 + $0x10] sm:$0xf] %v1241
        %1306 = vst [vmem:[%s309 + $0x14] sm:$0xf] %v1242
        %1307 = vst [vmem:[%s309 + $0x18] sm:$0xf] %v1243
        %1308 = vst [vmem:[%s309 + $0x1c] sm:$0xf] %v1244
        %1309 = vst [vmem:[%s309 + $0x20] sm:$0xf] %v1245
        %1310 = vst [vmem:[%s309 + $0x24] sm:$0xf] %v1246
        %1311 = vst [vmem:[%s309 + $0x28] sm:$0xf] %v1247
        %1312 = vst [vmem:[%s309 + $0x2c] sm:$0xf] %v1248
        %1313 = vst [vmem:[%s309 + $0x30] sm:$0xf] %v1249
        %1314 = vst [vmem:[%s309 + $0x34] sm:$0xf] %v1250
        %1315 = vst [vmem:[%s309 + $0x38] sm:$0xf] %v1251
        %1316 = vst [vmem:[%s309 + $0x3c] sm:$0xf] %v1252
        %1317 = vst [vmem:[%s309 + $0x40] sm:$0xf] %v1253
        %1318 = vst [vmem:[%s309 + $0x44] sm:$0xf] %v1254
        %1319 = vst [vmem:[%s309 + $0x48] sm:$0xf] %v1255
        %1320 = vst [vmem:[%s309 + $0x4c] sm:$0xf] %v1256
        %1321 = vst [vmem:[%s309 + $0x50] sm:$0xf] %v1257
        %1322 = vst [vmem:[%s309 + $0x54] sm:$0xf] %v1258
        %1323 = vst [vmem:[%s309 + $0x58] sm:$0xf] %v1259
        %1324 = vst [vmem:[%s309 + $0x5c] sm:$0xf] %v1260
        %1325 = vst [vmem:[%s309 + $0x60] sm:$0xf] %v1261
        %1326 = vst [vmem:[%s309 + $0x64] sm:$0xf] %v1262
        %1327 = vst [vmem:[%s309 + $0x68] sm:$0xf] %v1263
        %1328 = vst [vmem:[%s309 + $0x6c] sm:$0xf] %v1264
        %1329 = vst [vmem:[%s309 + $0x70] sm:$0xf] %v1265
        %1330 = vst [vmem:[%s309 + $0x74] sm:$0xf] %v1266
        %1331 = vst [vmem:[%s309 + $0x78] sm:$0xf] %v1267
        %1332 = vst [vmem:[%s309 + $0x7c] sm:$0xf] %v1268
        %1333 = vst [vmem:[%s309 + $0x80] sm:$0xf] %v1269
        %1334 = vst [vmem:[%s309 + $0x84] sm:$0xf] %v1270
        %1335 = vst [vmem:[%s309 + $0x88] sm:$0xf] %v1271
        %1336 = vst [vmem:[%s309 + $0x8c] sm:$0xf] %v1272
        %1337 = vst [vmem:[%s309 + $0x90] sm:$0xf] %v1273
        %1338 = vst [vmem:[%s309 + $0x94] sm:$0xf] %v1274
        %1339 = vst [vmem:[%s309 + $0x98] sm:$0xf] %v1275
        %1340 = vst [vmem:[%s309 + $0x9c] sm:$0xf] %v1276
        %1341 = vst [vmem:[%s309 + $0xa0] sm:$0xf] %v1277
        %1342 = vst [vmem:[%s309 + $0xa4] sm:$0xf] %v1278
        %1343 = vst [vmem:[%s309 + $0xa8] sm:$0xf] %v1279
        %1344 = vst [vmem:[%s309 + $0xac] sm:$0xf] %v1280
        %1345 = vst [vmem:[%s309 + $0xb0] sm:$0xf] %v1281
        %1346 = vst [vmem:[%s309 + $0xb4] sm:$0xf] %v1282
        %1347 = vst [vmem:[%s309 + $0xb8] sm:$0xf] %v1283
        %1348 = vst [vmem:[%s309 + $0xbc] sm:$0xf] %v1284
        %1349 = vst [vmem:[%s309 + $0xc0] sm:$0xf] %v1285
        %1350 = vst [vmem:[%s309 + $0xc4] sm:$0xf] %v1286
        %1351 = vst [vmem:[%s309 + $0xc8] sm:$0xf] %v1287
        %1352 = vst [vmem:[%s309 + $0xcc] sm:$0xf] %v1288
        %1353 = vst [vmem:[%s309 + $0xd0] sm:$0xf] %v1289
        %1354 = vst [vmem:[%s309 + $0xd4] sm:$0xf] %v1290
        %1355 = vst [vmem:[%s309 + $0xd8] sm:$0xf] %v1291
        %1356 = vst [vmem:[%s309 + $0xdc] sm:$0xf] %v1292
        %1357 = vst [vmem:[%s309 + $0xe0] sm:$0xf] %v1293
        %1358 = vst [vmem:[%s309 + $0xe4] sm:$0xf] %v1294
        %1359 = vst [vmem:[%s309 + $0xe8] sm:$0xf] %v1295
        %1360 = vst [vmem:[%s309 + $0xec] sm:$0xf] %v1296
        %1361 = vst [vmem:[%s309 + $0xf0] sm:$0xf] %v1297
        %1362 = vst [vmem:[%s309 + $0xf4] sm:$0xf] %v1298
        %1363 = vst [vmem:[%s309 + $0xf8] sm:$0xf] %v1299
        %1364 = vst [vmem:[%s309 + $0xfc] sm:$0xf] %v1300
        %v1365 = vld [vmem:[#allocation7] sm:$0xff]
        %v1366 = vld [vmem:[#allocation7 + $0x8] sm:$0xff]
        %v1367 = vld [vmem:[#allocation7 + $0x10] sm:$0xff]
        %v1368 = vld [vmem:[#allocation7 + $0x18] sm:$0xff]
        %v1369 = vld [vmem:[#allocation7 + $0x20] sm:$0xff]
        %v1370 = vld [vmem:[#allocation7 + $0x28] sm:$0xff]
        %v1371 = vld [vmem:[#allocation7 + $0x30] sm:$0xff]
        %v1372 = vld [vmem:[#allocation7 + $0x38] sm:$0xff]
        %v1373 = vld [vmem:[#allocation7 + $0x40] sm:$0xff]
        %v1374 = vld [vmem:[#allocation7 + $0x48] sm:$0xff]
        %v1375 = vld [vmem:[#allocation7 + $0x50] sm:$0xff]
        %v1376 = vld [vmem:[#allocation7 + $0x58] sm:$0xff]
        %v1377 = vld [vmem:[#allocation7 + $0x60] sm:$0xff]
        %v1378 = vld [vmem:[#allocation7 + $0x68] sm:$0xff]
        %v1379 = vld [vmem:[#allocation7 + $0x70] sm:$0xff]
        %v1380 = vld [vmem:[#allocation7 + $0x78] sm:$0xff]
        %v1381 = vld [vmem:[%s4] sm:$0x3]
        %v1382 = vunpack.c.l.bf16 %v1381
        %v1384 = vperm.slane %v1382, 0
        %v1385 = vperm.slane %v1382, 2
        %v1388 = vperm.slane %v1384, 0
        %v1389 = vperm.slane %v1385, 0
        %v1454 = vunpack.c.l.b16 %v1237
        %v1455 = vunpack.c.l.b16 %v1238
        %v1456 = vunpack.c.l.b16 %v1239
        %v1457 = vunpack.c.l.b16 %v1240
        %v1458 = vunpack.c.l.b16 %v1241
        %v1459 = vunpack.c.l.b16 %v1242
        %v1460 = vunpack.c.l.b16 %v1243
        %v1461 = vunpack.c.l.b16 %v1244
        %v1462 = vunpack.c.l.b16 %v1245
        %v1463 = vunpack.c.l.b16 %v1246
        %v1464 = vunpack.c.l.b16 %v1247
        %v1465 = vunpack.c.l.b16 %v1248
        %v1466 = vunpack.c.l.b16 %v1249
        %v1467 = vunpack.c.l.b16 %v1250
        %v1468 = vunpack.c.l.b16 %v1251
        %v1469 = vunpack.c.l.b16 %v1252
        %v1470 = vunpack.c.l.b16 %v1253
        %v1471 = vunpack.c.l.b16 %v1254
        %v1472 = vunpack.c.l.b16 %v1255
        %v1473 = vunpack.c.l.b16 %v1256
        %v1474 = vunpack.c.l.b16 %v1257
        %v1475 = vunpack.c.l.b16 %v1258
        %v1476 = vunpack.c.l.b16 %v1259
        %v1477 = vunpack.c.l.b16 %v1260
        %v1478 = vunpack.c.l.b16 %v1261
        %v1479 = vunpack.c.l.b16 %v1262
        %v1480 = vunpack.c.l.b16 %v1263
        %v1481 = vunpack.c.l.b16 %v1264
        %v1482 = vunpack.c.l.b16 %v1265
        %v1483 = vunpack.c.l.b16 %v1266
        %v1484 = vunpack.c.l.b16 %v1267
        %v1485 = vunpack.c.l.b16 %v1268
        %v1486 = vunpack.c.l.b16 %v1269
        %v1487 = vunpack.c.l.b16 %v1270
        %v1488 = vunpack.c.l.b16 %v1271
        %v1489 = vunpack.c.l.b16 %v1272
        %v1490 = vunpack.c.l.b16 %v1273
        %v1491 = vunpack.c.l.b16 %v1274
        %v1492 = vunpack.c.l.b16 %v1275
        %v1493 = vunpack.c.l.b16 %v1276
        %v1494 = vunpack.c.l.b16 %v1277
        %v1495 = vunpack.c.l.b16 %v1278
        %v1496 = vunpack.c.l.b16 %v1279
        %v1497 = vunpack.c.l.b16 %v1280
        %v1498 = vunpack.c.l.b16 %v1281
        %v1499 = vunpack.c.l.b16 %v1282
        %v1500 = vunpack.c.l.b16 %v1283
        %v1501 = vunpack.c.l.b16 %v1284
        %v1502 = vunpack.c.l.b16 %v1285
        %v1503 = vunpack.c.l.b16 %v1286
        %v1504 = vunpack.c.l.b16 %v1287
        %v1505 = vunpack.c.l.b16 %v1288
        %v1506 = vunpack.c.l.b16 %v1289
        %v1507 = vunpack.c.l.b16 %v1290
        %v1508 = vunpack.c.l.b16 %v1291
        %v1509 = vunpack.c.l.b16 %v1292
        %v1510 = vunpack.c.l.b16 %v1293
        %v1511 = vunpack.c.l.b16 %v1294
        %v1512 = vunpack.c.l.b16 %v1295
        %v1513 = vunpack.c.l.b16 %v1296
        %v1514 = vunpack.c.l.b16 %v1297
        %v1515 = vunpack.c.l.b16 %v1298
        %v1516 = vunpack.c.l.b16 %v1299
        %v1517 = vunpack.c.l.b16 %v1300
        %v1518 = vpack.c.b16 %v1455, %v1454
        %v1519 = vpack.c.b16 %v1457, %v1456
        %v1520 = vpack.c.b16 %v1459, %v1458
        %v1521 = vpack.c.b16 %v1461, %v1460
        %v1522 = vpack.c.b16 %v1463, %v1462
        %v1523 = vpack.c.b16 %v1465, %v1464
        %v1524 = vpack.c.b16 %v1467, %v1466
        %v1525 = vpack.c.b16 %v1469, %v1468
        %v1526 = vpack.c.b16 %v1471, %v1470
        %v1527 = vpack.c.b16 %v1473, %v1472
        %v1528 = vpack.c.b16 %v1475, %v1474
        %v1529 = vpack.c.b16 %v1477, %v1476
        %v1530 = vpack.c.b16 %v1479, %v1478
        %v1531 = vpack.c.b16 %v1481, %v1480
        %v1532 = vpack.c.b16 %v1483, %v1482
        %v1533 = vpack.c.b16 %v1485, %v1484
        %v1534 = vpack.c.b16 %v1487, %v1486
        %v1535 = vpack.c.b16 %v1489, %v1488
        %v1536 = vpack.c.b16 %v1491, %v1490
        %v1537 = vpack.c.b16 %v1493, %v1492
        %v1538 = vpack.c.b16 %v1495, %v1494
        %v1539 = vpack.c.b16 %v1497, %v1496
        %v1540 = vpack.c.b16 %v1499, %v1498
        %v1541 = vpack.c.b16 %v1501, %v1500
        %v1542 = vpack.c.b16 %v1503, %v1502
        %v1543 = vpack.c.b16 %v1505, %v1504
        %v1544 = vpack.c.b16 %v1507, %v1506
        %v1545 = vpack.c.b16 %v1509, %v1508
        %v1546 = vpack.c.b16 %v1511, %v1510
        %v1547 = vpack.c.b16 %v1513, %v1512
        %v1548 = vpack.c.b16 %v1515, %v1514
        %v1549 = vpack.c.b16 %v1517, %v1516
        %v1598 = vunpack.c.l.b16 %v1365
        %v1599 = vunpack.c.h.b16 %v1365
        %v1600 = vunpack.c.l.b16 %v1366
        %v1601 = vunpack.c.h.b16 %v1366
        %v1602 = vunpack.c.l.b16 %v1367
        %v1603 = vunpack.c.h.b16 %v1367
        %v1604 = vunpack.c.l.b16 %v1368
        %v1605 = vunpack.c.h.b16 %v1368
        %v1606 = vunpack.c.l.b16 %v1369
        %v1607 = vunpack.c.h.b16 %v1369
        %v1608 = vunpack.c.l.b16 %v1370
        %v1609 = vunpack.c.h.b16 %v1370
        %v1610 = vunpack.c.l.b16 %v1371
        %v1611 = vunpack.c.h.b16 %v1371
        %v1612 = vunpack.c.l.b16 %v1372
        %v1613 = vunpack.c.h.b16 %v1372
        %v1614 = vunpack.c.l.b16 %v1373
        %v1615 = vunpack.c.h.b16 %v1373
        %v1616 = vunpack.c.l.b16 %v1374
        %v1617 = vunpack.c.h.b16 %v1374
        %v1618 = vunpack.c.l.b16 %v1375
        %v1619 = vunpack.c.h.b16 %v1375
        %v1620 = vunpack.c.l.b16 %v1376
        %v1621 = vunpack.c.h.b16 %v1376
        %v1622 = vunpack.c.l.b16 %v1377
        %v1623 = vunpack.c.h.b16 %v1377
        %v1624 = vunpack.c.l.b16 %v1378
        %v1625 = vunpack.c.h.b16 %v1378
        %v1626 = vunpack.c.l.b16 %v1379
        %v1627 = vunpack.c.h.b16 %v1379
        %v1628 = vunpack.c.l.b16 %v1380
        %v1629 = vunpack.c.h.b16 %v1380
        %v1630 = vpack.c.b16 %v1600, %v1598
        %v1631 = vpack.c.b16 %v1601, %v1599
        %v1632 = vpack.c.b16 %v1604, %v1602
        %v1633 = vpack.c.b16 %v1605, %v1603
        %v1634 = vpack.c.b16 %v1608, %v1606
        %v1635 = vpack.c.b16 %v1609, %v1607
        %v1636 = vpack.c.b16 %v1612, %v1610
        %v1637 = vpack.c.b16 %v1613, %v1611
        %v1638 = vpack.c.b16 %v1616, %v1614
        %v1639 = vpack.c.b16 %v1617, %v1615
        %v1640 = vpack.c.b16 %v1620, %v1618
        %v1641 = vpack.c.b16 %v1621, %v1619
        %v1642 = vpack.c.b16 %v1624, %v1622
        %v1643 = vpack.c.b16 %v1625, %v1623
        %v1644 = vpack.c.b16 %v1628, %v1626
        %v1645 = vpack.c.b16 %v1629, %v1627
        %1662 = vmatpush.bf16.msra.mxu0 %v1644
        %1663 = vmatpush.bf16.msra.mxu0 %v1642
        %1664 = vmatpush.bf16.msra.mxu0 %v1640
        %1665 = vmatpush.bf16.msra.mxu0 %v1638
        %1666 = vmatpush.bf16.msra.mxu0 %v1636
        %1667 = vmatpush.bf16.msra.mxu0 %v1634
        %1668 = vmatpush.bf16.msra.mxu0 %v1632
        %1669 = vmatpush.bf16.msra.mxu0 %v1630
        %1670 = vmatmul.bf16.gmra.mxu0 %v1518
        %v1671 = vpop.f32.mrf.mxu0
        %v1672 = vadd.f32 %v1388, %v1671
        %v1673 = vpop.f32.mrf.mxu0
        %v1674 = vadd.f32 %v1388, %v1673
        %1675 = vmatmul.bf16.gmra.mxu0 %v1519
        %v1676 = vpop.f32.mrf.mxu0
        %v1677 = vadd.f32 %v1388, %v1676
        %v1678 = vpop.f32.mrf.mxu0
        %v1679 = vadd.f32 %v1388, %v1678
        %1680 = vmatmul.bf16.gmra.mxu0 %v1520
        %v1681 = vpop.f32.mrf.mxu0
        %v1682 = vadd.f32 %v1388, %v1681
        %v1683 = vpop.f32.mrf.mxu0
        %v1684 = vadd.f32 %v1388, %v1683
        %1685 = vmatmul.bf16.gmra.mxu0 %v1521
        %v1686 = vpop.f32.mrf.mxu0
        %v1687 = vadd.f32 %v1388, %v1686
        %v1688 = vpop.f32.mrf.mxu0
        %v1689 = vadd.f32 %v1388, %v1688
        %1690 = vmatmul.bf16.gmra.mxu0 %v1522
        %v1691 = vpop.f32.mrf.mxu0
        %v1692 = vadd.f32 %v1388, %v1691
        %v1693 = vpop.f32.mrf.mxu0
        %v1694 = vadd.f32 %v1388, %v1693
        %1695 = vmatmul.bf16.gmra.mxu0 %v1523
        %v1696 = vpop.f32.mrf.mxu0
        %v1697 = vadd.f32 %v1388, %v1696
        %v1698 = vpop.f32.mrf.mxu0
        %v1699 = vadd.f32 %v1388, %v1698
        %1700 = vmatmul.bf16.gmra.mxu0 %v1524
        %v1701 = vpop.f32.mrf.mxu0
        %v1702 = vadd.f32 %v1388, %v1701
        %v1703 = vpop.f32.mrf.mxu0
        %v1704 = vadd.f32 %v1388, %v1703
        %1705 = vmatmul.bf16.gmra.mxu0 %v1525
        %v1706 = vpop.f32.mrf.mxu0
        %v1707 = vadd.f32 %v1388, %v1706
        %v1708 = vpop.f32.mrf.mxu0
        %v1709 = vadd.f32 %v1388, %v1708
        %1710 = vmatmul.bf16.gmra.mxu0 %v1526
        %v1711 = vpop.f32.mrf.mxu0
        %v1712 = vadd.f32 %v1388, %v1711
        %v1713 = vpop.f32.mrf.mxu0
        %v1714 = vadd.f32 %v1388, %v1713
        %1715 = vmatmul.bf16.gmra.mxu0 %v1527
        %v1716 = vpop.f32.mrf.mxu0
        %v1717 = vadd.f32 %v1388, %v1716
        %v1718 = vpop.f32.mrf.mxu0
        %v1719 = vadd.f32 %v1388, %v1718
        %1720 = vmatmul.bf16.gmra.mxu0 %v1528
        %v1721 = vpop.f32.mrf.mxu0
        %v1722 = vadd.f32 %v1388, %v1721
        %v1723 = vpop.f32.mrf.mxu0
        %v1724 = vadd.f32 %v1388, %v1723
        %1725 = vmatmul.bf16.gmra.mxu0 %v1529
        %v1726 = vpop.f32.mrf.mxu0
        %v1727 = vadd.f32 %v1388, %v1726
        %v1728 = vpop.f32.mrf.mxu0
        %v1729 = vadd.f32 %v1388, %v1728
        %1730 = vmatmul.bf16.gmra.mxu0 %v1530
        %v1731 = vpop.f32.mrf.mxu0
        %v1732 = vadd.f32 %v1388, %v1731
        %v1733 = vpop.f32.mrf.mxu0
        %v1734 = vadd.f32 %v1388, %v1733
        %1735 = vmatmul.bf16.gmra.mxu0 %v1531
        %v1736 = vpop.f32.mrf.mxu0
        %v1737 = vadd.f32 %v1388, %v1736
        %v1738 = vpop.f32.mrf.mxu0
        %v1739 = vadd.f32 %v1388, %v1738
        %1740 = vmatmul.bf16.gmra.mxu0 %v1532
        %v1741 = vpop.f32.mrf.mxu0
        %v1742 = vadd.f32 %v1388, %v1741
        %v1743 = vpop.f32.mrf.mxu0
        %v1744 = vadd.f32 %v1388, %v1743
        %1745 = vmatmul.bf16.gmra.mxu0 %v1533
        %v1746 = vpop.f32.mrf.mxu0
        %v1747 = vadd.f32 %v1388, %v1746
        %v1748 = vpop.f32.mrf.mxu0
        %v1749 = vadd.f32 %v1388, %v1748
        %1750 = vmatmul.bf16.gmra.mxu0 %v1534
        %v1751 = vpop.f32.mrf.mxu0
        %v1752 = vadd.f32 %v1388, %v1751
        %v1753 = vpop.f32.mrf.mxu0
        %v1754 = vadd.f32 %v1388, %v1753
        %1755 = vmatmul.bf16.gmra.mxu0 %v1535
        %v1756 = vpop.f32.mrf.mxu0
        %v1757 = vadd.f32 %v1388, %v1756
        %v1758 = vpop.f32.mrf.mxu0
        %v1759 = vadd.f32 %v1388, %v1758
        %1760 = vmatmul.bf16.gmra.mxu0 %v1536
        %v1761 = vpop.f32.mrf.mxu0
        %v1762 = vadd.f32 %v1388, %v1761
        %v1763 = vpop.f32.mrf.mxu0
        %v1764 = vadd.f32 %v1388, %v1763
        %1765 = vmatmul.bf16.gmra.mxu0 %v1537
        %v1766 = vpop.f32.mrf.mxu0
        %v1767 = vadd.f32 %v1388, %v1766
        %v1768 = vpop.f32.mrf.mxu0
        %v1769 = vadd.f32 %v1388, %v1768
        %1770 = vmatmul.bf16.gmra.mxu0 %v1538
        %v1771 = vpop.f32.mrf.mxu0
        %v1772 = vadd.f32 %v1388, %v1771
        %v1773 = vpop.f32.mrf.mxu0
        %v1774 = vadd.f32 %v1388, %v1773
        %1775 = vmatmul.bf16.gmra.mxu0 %v1539
        %v1776 = vpop.f32.mrf.mxu0
        %v1777 = vadd.f32 %v1388, %v1776
        %v1778 = vpop.f32.mrf.mxu0
        %v1779 = vadd.f32 %v1388, %v1778
        %1780 = vmatmul.bf16.gmra.mxu0 %v1540
        %v1781 = vpop.f32.mrf.mxu0
        %v1782 = vadd.f32 %v1388, %v1781
        %v1783 = vpop.f32.mrf.mxu0
        %v1784 = vadd.f32 %v1388, %v1783
        %1785 = vmatmul.bf16.gmra.mxu0 %v1541
        %v1786 = vpop.f32.mrf.mxu0
        %v1787 = vadd.f32 %v1388, %v1786
        %v1788 = vpop.f32.mrf.mxu0
        %v1789 = vadd.f32 %v1388, %v1788
        %1790 = vmatmul.bf16.gmra.mxu0 %v1542
        %v1791 = vpop.f32.mrf.mxu0
        %v1792 = vadd.f32 %v1388, %v1791
        %v1793 = vpop.f32.mrf.mxu0
        %v1794 = vadd.f32 %v1388, %v1793
        %1795 = vmatmul.bf16.gmra.mxu0 %v1543
        %v1796 = vpop.f32.mrf.mxu0
        %v1797 = vadd.f32 %v1388, %v1796
        %v1798 = vpop.f32.mrf.mxu0
        %v1799 = vadd.f32 %v1388, %v1798
        %1800 = vmatmul.bf16.gmra.mxu0 %v1544
        %v1801 = vpop.f32.mrf.mxu0
        %v1802 = vadd.f32 %v1388, %v1801
        %v1803 = vpop.f32.mrf.mxu0
        %v1804 = vadd.f32 %v1388, %v1803
        %1805 = vmatmul.bf16.gmra.mxu0 %v1545
        %v1806 = vpop.f32.mrf.mxu0
        %v1807 = vadd.f32 %v1388, %v1806
        %v1808 = vpop.f32.mrf.mxu0
        %v1809 = vadd.f32 %v1388, %v1808
        %1810 = vmatmul.bf16.gmra.mxu0 %v1546
        %v1811 = vpop.f32.mrf.mxu0
        %v1812 = vadd.f32 %v1388, %v1811
        %v1813 = vpop.f32.mrf.mxu0
        %v1814 = vadd.f32 %v1388, %v1813
        %1815 = vmatmul.bf16.gmra.mxu0 %v1547
        %v1816 = vpop.f32.mrf.mxu0
        %v1817 = vadd.f32 %v1388, %v1816
        %v1818 = vpop.f32.mrf.mxu0
        %v1819 = vadd.f32 %v1388, %v1818
        %1820 = vmatmul.bf16.gmra.mxu0 %v1548
        %v1821 = vpop.f32.mrf.mxu0
        %v1822 = vadd.f32 %v1388, %v1821
        %v1823 = vpop.f32.mrf.mxu0
        %v1824 = vadd.f32 %v1388, %v1823
        %1825 = vmatmul.bf16.gmra.mxu0 %v1549
        %v1826 = vpop.f32.mrf.mxu0
        %v1827 = vadd.f32 %v1388, %v1826
        %v1828 = vpop.f32.mrf.mxu0
        %v1829 = vadd.f32 %v1388, %v1828
        %1830 = vdwg.mxu0
        %1831 = vmatpush.bf16.msra.mxu0 %v1645
        %1832 = vmatpush.bf16.msra.mxu0 %v1643
        %1833 = vmatpush.bf16.msra.mxu0 %v1641
        %1834 = vmatpush.bf16.msra.mxu0 %v1639
        %1835 = vmatpush.bf16.msra.mxu0 %v1637
        %1836 = vmatpush.bf16.msra.mxu0 %v1635
        %1837 = vmatpush.bf16.msra.mxu0 %v1633
        %1838 = vmatpush.bf16.msra.mxu0 %v1631
        %1839 = vmatmul.bf16.gmra.mxu0 %v1518
        %v1840 = vpop.f32.mrf.mxu0
        %v1841 = vadd.f32 %v1389, %v1840
        %v1842 = vpop.f32.mrf.mxu0
        %v1843 = vadd.f32 %v1389, %v1842
        %1844 = vmatmul.bf16.gmra.mxu0 %v1519
        %v1845 = vpop.f32.mrf.mxu0
        %v1846 = vadd.f32 %v1389, %v1845
        %v1847 = vpop.f32.mrf.mxu0
        %v1848 = vadd.f32 %v1389, %v1847
        %1849 = vmatmul.bf16.gmra.mxu0 %v1520
        %v1850 = vpop.f32.mrf.mxu0
        %v1851 = vadd.f32 %v1389, %v1850
        %v1852 = vpop.f32.mrf.mxu0
        %v1853 = vadd.f32 %v1389, %v1852
        %1854 = vmatmul.bf16.gmra.mxu0 %v1521
        %v1855 = vpop.f32.mrf.mxu0
        %v1856 = vadd.f32 %v1389, %v1855
        %v1857 = vpop.f32.mrf.mxu0
        %v1858 = vadd.f32 %v1389, %v1857
        %1859 = vmatmul.bf16.gmra.mxu0 %v1522
        %v1860 = vpop.f32.mrf.mxu0
        %v1861 = vadd.f32 %v1389, %v1860
        %v1862 = vpop.f32.mrf.mxu0
        %v1863 = vadd.f32 %v1389, %v1862
        %1864 = vmatmul.bf16.gmra.mxu0 %v1523
        %v1865 = vpop.f32.mrf.mxu0
        %v1866 = vadd.f32 %v1389, %v1865
        %v1867 = vpop.f32.mrf.mxu0
        %v1868 = vadd.f32 %v1389, %v1867
        %1869 = vmatmul.bf16.gmra.mxu0 %v1524
        %v1870 = vpop.f32.mrf.mxu0
        %v1871 = vadd.f32 %v1389, %v1870
        %v1872 = vpop.f32.mrf.mxu0
        %v1873 = vadd.f32 %v1389, %v1872
        %1874 = vmatmul.bf16.gmra.mxu0 %v1525
        %v1875 = vpop.f32.mrf.mxu0
        %v1876 = vadd.f32 %v1389, %v1875
        %v1877 = vpop.f32.mrf.mxu0
        %v1878 = vadd.f32 %v1389, %v1877
        %1879 = vmatmul.bf16.gmra.mxu0 %v1526
        %v1880 = vpop.f32.mrf.mxu0
        %v1881 = vadd.f32 %v1389, %v1880
        %v1882 = vpop.f32.mrf.mxu0
        %v1883 = vadd.f32 %v1389, %v1882
        %1884 = vmatmul.bf16.gmra.mxu0 %v1527
        %v1885 = vpop.f32.mrf.mxu0
        %v1886 = vadd.f32 %v1389, %v1885
        %v1887 = vpop.f32.mrf.mxu0
        %v1888 = vadd.f32 %v1389, %v1887
        %1889 = vmatmul.bf16.gmra.mxu0 %v1528
        %v1890 = vpop.f32.mrf.mxu0
        %v1891 = vadd.f32 %v1389, %v1890
        %v1892 = vpop.f32.mrf.mxu0
        %v1893 = vadd.f32 %v1389, %v1892
        %1894 = vmatmul.bf16.gmra.mxu0 %v1529
        %v1895 = vpop.f32.mrf.mxu0
        %v1896 = vadd.f32 %v1389, %v1895
        %v1897 = vpop.f32.mrf.mxu0
        %v1898 = vadd.f32 %v1389, %v1897
        %1899 = vmatmul.bf16.gmra.mxu0 %v1530
        %v1900 = vpop.f32.mrf.mxu0
        %v1901 = vadd.f32 %v1389, %v1900
        %v1902 = vpop.f32.mrf.mxu0
        %v1903 = vadd.f32 %v1389, %v1902
        %1904 = vmatmul.bf16.gmra.mxu0 %v1531
        %v1905 = vpop.f32.mrf.mxu0
        %v1906 = vadd.f32 %v1389, %v1905
        %v1907 = vpop.f32.mrf.mxu0
        %v1908 = vadd.f32 %v1389, %v1907
        %1909 = vmatmul.bf16.gmra.mxu0 %v1532
        %v1910 = vpop.f32.mrf.mxu0
        %v1911 = vadd.f32 %v1389, %v1910
        %v1912 = vpop.f32.mrf.mxu0
        %v1913 = vadd.f32 %v1389, %v1912
        %1914 = vmatmul.bf16.gmra.mxu0 %v1533
        %v1915 = vpop.f32.mrf.mxu0
        %v1916 = vadd.f32 %v1389, %v1915
        %v1917 = vpop.f32.mrf.mxu0
        %v1918 = vadd.f32 %v1389, %v1917
        %1919 = vmatmul.bf16.gmra.mxu0 %v1534
        %v1920 = vpop.f32.mrf.mxu0
        %v1921 = vadd.f32 %v1389, %v1920
        %v1922 = vpop.f32.mrf.mxu0
        %v1923 = vadd.f32 %v1389, %v1922
        %1924 = vmatmul.bf16.gmra.mxu0 %v1535
        %v1925 = vpop.f32.mrf.mxu0
        %v1926 = vadd.f32 %v1389, %v1925
        %v1927 = vpop.f32.mrf.mxu0
        %v1928 = vadd.f32 %v1389, %v1927
        %1929 = vmatmul.bf16.gmra.mxu0 %v1536
        %v1930 = vpop.f32.mrf.mxu0
        %v1931 = vadd.f32 %v1389, %v1930
        %v1932 = vpop.f32.mrf.mxu0
        %v1933 = vadd.f32 %v1389, %v1932
        %1934 = vmatmul.bf16.gmra.mxu0 %v1537
        %v1935 = vpop.f32.mrf.mxu0
        %v1936 = vadd.f32 %v1389, %v1935
        %v1937 = vpop.f32.mrf.mxu0
        %v1938 = vadd.f32 %v1389, %v1937
        %1939 = vmatmul.bf16.gmra.mxu0 %v1538
        %v1940 = vpop.f32.mrf.mxu0
        %v1941 = vadd.f32 %v1389, %v1940
        %v1942 = vpop.f32.mrf.mxu0
        %v1943 = vadd.f32 %v1389, %v1942
        %1944 = vmatmul.bf16.gmra.mxu0 %v1539
        %v1945 = vpop.f32.mrf.mxu0
        %v1946 = vadd.f32 %v1389, %v1945
        %v1947 = vpop.f32.mrf.mxu0
        %v1948 = vadd.f32 %v1389, %v1947
        %1949 = vmatmul.bf16.gmra.mxu0 %v1540
        %v1950 = vpop.f32.mrf.mxu0
        %v1951 = vadd.f32 %v1389, %v1950
        %v1952 = vpop.f32.mrf.mxu0
        %v1953 = vadd.f32 %v1389, %v1952
        %1954 = vmatmul.bf16.gmra.mxu0 %v1541
        %v1955 = vpop.f32.mrf.mxu0
        %v1956 = vadd.f32 %v1389, %v1955
        %v1957 = vpop.f32.mrf.mxu0
        %v1958 = vadd.f32 %v1389, %v1957
        %1959 = vmatmul.bf16.gmra.mxu0 %v1542
        %v1960 = vpop.f32.mrf.mxu0
        %v1961 = vadd.f32 %v1389, %v1960
        %v1962 = vpop.f32.mrf.mxu0
        %v1963 = vadd.f32 %v1389, %v1962
        %1964 = vmatmul.bf16.gmra.mxu0 %v1543
        %v1965 = vpop.f32.mrf.mxu0
        %v1966 = vadd.f32 %v1389, %v1965
        %v1967 = vpop.f32.mrf.mxu0
        %v1968 = vadd.f32 %v1389, %v1967
        %1969 = vmatmul.bf16.gmra.mxu0 %v1544
        %v1970 = vpop.f32.mrf.mxu0
        %v1971 = vadd.f32 %v1389, %v1970
        %v1972 = vpop.f32.mrf.mxu0
        %v1973 = vadd.f32 %v1389, %v1972
        %1974 = vmatmul.bf16.gmra.mxu0 %v1545
        %v1975 = vpop.f32.mrf.mxu0
        %v1976 = vadd.f32 %v1389, %v1975
        %v1977 = vpop.f32.mrf.mxu0
        %v1978 = vadd.f32 %v1389, %v1977
        %1979 = vmatmul.bf16.gmra.mxu0 %v1546
        %v1980 = vpop.f32.mrf.mxu0
        %v1981 = vadd.f32 %v1389, %v1980
        %v1982 = vpop.f32.mrf.mxu0
        %v1983 = vadd.f32 %v1389, %v1982
        %1984 = vmatmul.bf16.gmra.mxu0 %v1547
        %v1985 = vpop.f32.mrf.mxu0
        %v1986 = vadd.f32 %v1389, %v1985
        %v1987 = vpop.f32.mrf.mxu0
        %v1988 = vadd.f32 %v1389, %v1987
        %1989 = vmatmul.bf16.gmra.mxu0 %v1548
        %v1990 = vpop.f32.mrf.mxu0
        %v1991 = vadd.f32 %v1389, %v1990
        %v1992 = vpop.f32.mrf.mxu0
        %v1993 = vadd.f32 %v1389, %v1992
        %1994 = vmatmul.bf16.gmra.mxu0 %v1549
        %v1995 = vpop.f32.mrf.mxu0
        %v1996 = vadd.f32 %v1389, %v1995
        %v1997 = vpop.f32.mrf.mxu0
        %v1998 = vadd.f32 %v1389, %v1997
        %1999 = vdwg.mxu0
        %v2000 = vpack.c.bf16 %v1841, %v1672
        %v2001 = vpack.c.bf16 %v1843, %v1674
        %v2002 = vpack.c.bf16 %v1846, %v1677
        %v2003 = vpack.c.bf16 %v1848, %v1679
        %v2004 = vpack.c.bf16 %v1851, %v1682
        %v2005 = vpack.c.bf16 %v1853, %v1684
        %v2006 = vpack.c.bf16 %v1856, %v1687
        %v2007 = vpack.c.bf16 %v1858, %v1689
        %v2008 = vpack.c.bf16 %v1861, %v1692
        %v2009 = vpack.c.bf16 %v1863, %v1694
        %v2010 = vpack.c.bf16 %v1866, %v1697
        %v2011 = vpack.c.bf16 %v1868, %v1699
        %v2012 = vpack.c.bf16 %v1871, %v1702
        %v2013 = vpack.c.bf16 %v1873, %v1704
        %v2014 = vpack.c.bf16 %v1876, %v1707
        %v2015 = vpack.c.bf16 %v1878, %v1709
        %v2016 = vpack.c.bf16 %v1881, %v1712
        %v2017 = vpack.c.bf16 %v1883, %v1714
        %v2018 = vpack.c.bf16 %v1886, %v1717
        %v2019 = vpack.c.bf16 %v1888, %v1719
        %v2020 = vpack.c.bf16 %v1891, %v1722
        %v2021 = vpack.c.bf16 %v1893, %v1724
        %v2022 = vpack.c.bf16 %v1896, %v1727
        %v2023 = vpack.c.bf16 %v1898, %v1729
        %v2024 = vpack.c.bf16 %v1901, %v1732
        %v2025 = vpack.c.bf16 %v1903, %v1734
        %v2026 = vpack.c.bf16 %v1906, %v1737
        %v2027 = vpack.c.bf16 %v1908, %v1739
        %v2028 = vpack.c.bf16 %v1911, %v1742
        %v2029 = vpack.c.bf16 %v1913, %v1744
        %v2030 = vpack.c.bf16 %v1916, %v1747
        %v2031 = vpack.c.bf16 %v1918, %v1749
        %v2032 = vpack.c.bf16 %v1921, %v1752
        %v2033 = vpack.c.bf16 %v1923, %v1754
        %v2034 = vpack.c.bf16 %v1926, %v1757
        %v2035 = vpack.c.bf16 %v1928, %v1759
        %v2036 = vpack.c.bf16 %v1931, %v1762
        %v2037 = vpack.c.bf16 %v1933, %v1764
        %v2038 = vpack.c.bf16 %v1936, %v1767
        %v2039 = vpack.c.bf16 %v1938, %v1769
        %v2040 = vpack.c.bf16 %v1941, %v1772
        %v2041 = vpack.c.bf16 %v1943, %v1774
        %v2042 = vpack.c.bf16 %v1946, %v1777
        %v2043 = vpack.c.bf16 %v1948, %v1779
        %v2044 = vpack.c.bf16 %v1951, %v1782
        %v2045 = vpack.c.bf16 %v1953, %v1784
        %v2046 = vpack.c.bf16 %v1956, %v1787
        %v2047 = vpack.c.bf16 %v1958, %v1789
        %v2048 = vpack.c.bf16 %v1961, %v1792
        %v2049 = vpack.c.bf16 %v1963, %v1794
        %v2050 = vpack.c.bf16 %v1966, %v1797
        %v2051 = vpack.c.bf16 %v1968, %v1799
        %v2052 = vpack.c.bf16 %v1971, %v1802
        %v2053 = vpack.c.bf16 %v1973, %v1804
        %v2054 = vpack.c.bf16 %v1976, %v1807
        %v2055 = vpack.c.bf16 %v1978, %v1809
        %v2056 = vpack.c.bf16 %v1981, %v1812
        %v2057 = vpack.c.bf16 %v1983, %v1814
        %v2058 = vpack.c.bf16 %v1986, %v1817
        %v2059 = vpack.c.bf16 %v1988, %v1819
        %v2060 = vpack.c.bf16 %v1991, %v1822
        %v2061 = vpack.c.bf16 %v1993, %v1824
        %v2062 = vpack.c.bf16 %v1996, %v1827
        %v2063 = vpack.c.bf16 %v1998, %v1829
        %2064 = vst [vmem:[%s316] sm:$0xff] %v2000
        %2065 = vst [vmem:[%s316 + $0x8] sm:$0xff] %v2001
        %2066 = vst [vmem:[%s316 + $0x10] sm:$0xff] %v2002
        %2067 = vst [vmem:[%s316 + $0x18] sm:$0xff] %v2003
        %2068 = vst [vmem:[%s316 + $0x20] sm:$0xff] %v2004
        %2069 = vst [vmem:[%s316 + $0x28] sm:$0xff] %v2005
        %2070 = vst [vmem:[%s316 + $0x30] sm:$0xff] %v2006
        %2071 = vst [vmem:[%s316 + $0x38] sm:$0xff] %v2007
        %2072 = vst [vmem:[%s316 + $0x40] sm:$0xff] %v2008
        %2073 = vst [vmem:[%s316 + $0x48] sm:$0xff] %v2009
        %2074 = vst [vmem:[%s316 + $0x50] sm:$0xff] %v2010
        %2075 = vst [vmem:[%s316 + $0x58] sm:$0xff] %v2011
        %2076 = vst [vmem:[%s316 + $0x60] sm:$0xff] %v2012
        %2077 = vst [vmem:[%s316 + $0x68] sm:$0xff] %v2013
        %2078 = vst [vmem:[%s316 + $0x70] sm:$0xff] %v2014
        %2079 = vst [vmem:[%s316 + $0x78] sm:$0xff] %v2015
        %2080 = vst [vmem:[%s316 + $0x80] sm:$0xff] %v2016
        %2081 = vst [vmem:[%s316 + $0x88] sm:$0xff] %v2017
        %2082 = vst [vmem:[%s316 + $0x90] sm:$0xff] %v2018
        %2083 = vst [vmem:[%s316 + $0x98] sm:$0xff] %v2019
        %2084 = vst [vmem:[%s316 + $0xa0] sm:$0xff] %v2020
        %2085 = vst [vmem:[%s316 + $0xa8] sm:$0xff] %v2021
        %2086 = vst [vmem:[%s316 + $0xb0] sm:$0xff] %v2022
        %2087 = vst [vmem:[%s316 + $0xb8] sm:$0xff] %v2023
        %2088 = vst [vmem:[%s316 + $0xc0] sm:$0xff] %v2024
        %2089 = vst [vmem:[%s316 + $0xc8] sm:$0xff] %v2025
        %2090 = vst [vmem:[%s316 + $0xd0] sm:$0xff] %v2026
        %2091 = vst [vmem:[%s316 + $0xd8] sm:$0xff] %v2027
        %2092 = vst [vmem:[%s316 + $0xe0] sm:$0xff] %v2028
        %2093 = vst [vmem:[%s316 + $0xe8] sm:$0xff] %v2029
        %2094 = vst [vmem:[%s316 + $0xf0] sm:$0xff] %v2030
        %2095 = vst [vmem:[%s316 + $0xf8] sm:$0xff] %v2031
        %2096 = vst [vmem:[%s316 + $0x100] sm:$0xff] %v2032
        %2097 = vst [vmem:[%s316 + $0x108] sm:$0xff] %v2033
        %2098 = vst [vmem:[%s316 + $0x110] sm:$0xff] %v2034
        %2099 = vst [vmem:[%s316 + $0x118] sm:$0xff] %v2035
        %2100 = vst [vmem:[%s316 + $0x120] sm:$0xff] %v2036
        %2101 = vst [vmem:[%s316 + $0x128] sm:$0xff] %v2037
        %2102 = vst [vmem:[%s316 + $0x130] sm:$0xff] %v2038
        %2103 = vst [vmem:[%s316 + $0x138] sm:$0xff] %v2039
        %2104 = vst [vmem:[%s316 + $0x140] sm:$0xff] %v2040
        %2105 = vst [vmem:[%s316 + $0x148] sm:$0xff] %v2041
        %2106 = vst [vmem:[%s316 + $0x150] sm:$0xff] %v2042
        %2107 = vst [vmem:[%s316 + $0x158] sm:$0xff] %v2043
        %2108 = vst [vmem:[%s316 + $0x160] sm:$0xff] %v2044
        %2109 = vst [vmem:[%s316 + $0x168] sm:$0xff] %v2045
        %2110 = vst [vmem:[%s316 + $0x170] sm:$0xff] %v2046
        %2111 = vst [vmem:[%s316 + $0x178] sm:$0xff] %v2047
        %2112 = vst [vmem:[%s316 + $0x180] sm:$0xff] %v2048
        %2113 = vst [vmem:[%s316 + $0x188] sm:$0xff] %v2049
        %2114 = vst [vmem:[%s316 + $0x190] sm:$0xff] %v2050
        %2115 = vst [vmem:[%s316 + $0x198] sm:$0xff] %v2051
        %2116 = vst [vmem:[%s316 + $0x1a0] sm:$0xff] %v2052
        %2117 = vst [vmem:[%s316 + $0x1a8] sm:$0xff] %v2053
        %2118 = vst [vmem:[%s316 + $0x1b0] sm:$0xff] %v2054
        %2119 = vst [vmem:[%s316 + $0x1b8] sm:$0xff] %v2055
        %2120 = vst [vmem:[%s316 + $0x1c0] sm:$0xff] %v2056
        %2121 = vst [vmem:[%s316 + $0x1c8] sm:$0xff] %v2057
        %2122 = vst [vmem:[%s316 + $0x1d0] sm:$0xff] %v2058
        %2123 = vst [vmem:[%s316 + $0x1d8] sm:$0xff] %v2059
        %2124 = vst [vmem:[%s316 + $0x1e0] sm:$0xff] %v2060
        %2125 = vst [vmem:[%s316 + $0x1e8] sm:$0xff] %v2061
        %2126 = vst [vmem:[%s316 + $0x1f0] sm:$0xff] %v2062
        %2127 = vst [vmem:[%s316 + $0x1f8] sm:$0xff] %v2063
        %s2128 = sand.u32 %s146, 1
        %s2129 = scalar_lea.sflag [#allocation4], %s2128
        %s2130 = sand.u32 %s146, 1
        %s2131 = smul.addr %s2130, 256
        %s2132 = scalar_lea.vmem [#allocation8], %s2131
        %s2133 = sand.u32 %s172, 1
        %s2134 = scalar_lea.sflag [#allocation10], %s2133
        %s2135 = sand.u32 %s172, 1
        %s2136 = smul.addr %s2135, 512
        %s2137 = scalar_lea.vmem [#allocation9], %s2136
        // Predicated region
        $region53: #{tpu_custom_call.1} parent=39 // pred_check
          %p2138 = pneg %p156
        $region54: #{tpu_custom_call.1} parent=39 // pred_check_branch
          %2140 = sbr.rel (%p2138) target = $region56
        $region55: #{tpu_custom_call.1} parent=39 // pred_region
          %s2141 = smul.u32 64, %s28
          %2143 = vsyncadd %s2129, 0
          %s2144 = smul.addr %s2141, 4
          %s2145 = scalar_lea.hbm %s5, %s2144
          %s2146 = sshll.u32 %s2132, 4
          %s2147 = int_to_ptr.vmem [resolvable:$true] %s2146
          %s2148 = sshll.u32 %s2145, 4
          %s2149 = int_to_ptr.hbm [resolvable:$true] %s2148
          %2154 = dma.vmem_to_hbm [thread:$0]  %s2147, 4096, %s2149, %s2129, 64, 64, 4
        $region56: #{tpu_custom_call.1} parent=39 // pred_fallthru
          _
        // Predicated region
        $region57: #{tpu_custom_call.1} parent=39 // pred_check
          %p2155 = pneg %p182
        $region58: #{tpu_custom_call.1} parent=39 // pred_check_branch
          %2157 = sbr.rel (%p2155) target = $region60
        $region59: #{tpu_custom_call.1} parent=39 // pred_region
          %s2158 = smul.u32 64, %s28
          %2160 = vsyncadd %s2134, 0
          %s2161 = smul.addr %s2158, 2
          %s2162 = smul.addr %s2161, 4
          %s2163 = scalar_lea.hbm %s6, %s2162
          %s2164 = sshll.u32 %s2137, 4
          %s2165 = int_to_ptr.vmem [resolvable:$true] %s2164
          %s2166 = sshll.u32 %s2163, 4
          %s2167 = int_to_ptr.hbm [resolvable:$true] %s2166
          %2172 = dma.vmem_to_hbm [thread:$0]  %s2165, 8192, %s2167, %s2134, 128, 128, 8
        $region60: #{tpu_custom_call.1} parent=39 // pred_fallthru
          _
      $region40: #{tpu_custom_call.1} parent=5 // pred_fallthru
        _
      %p2173 = scmp.le.s32.totalorder 2, %s23
      // Predicated region
      $region61: #{tpu_custom_call.1} parent=5 // pred_check
        %p2174 = pneg %p2173
      $region62: #{tpu_custom_call.1} parent=5 // pred_check_branch
        %2176 = sbr.rel (%p2174) target = $region64
      $region63: #{tpu_custom_call.1} parent=5 // pred_region
        %s2177 = ssub.s32 %s23, 2
        // Predicated region
        $region65: #{tpu_custom_call.1} parent=63 // pred_check
          %p2178 = pneg %p162
        $region66: #{tpu_custom_call.1} parent=63 // pred_check_branch
          %2180 = sbr.rel (%p2178) target = $region68
        $region67: #{tpu_custom_call.1} parent=63 // pred_region
          %s2181 = sand.u32 %s147, 1
          %s2182 = scalar_lea.sflag [#allocation4], %s2181
          %s2183 = sand.u32 %s147, 1
          %s2184 = smul.addr %s2183, 256
          %s2185 = scalar_lea.vmem [#allocation8], %s2184
          %2187 = dma.done %s2182, 4096
        $region68: #{tpu_custom_call.1} parent=63 // pred_fallthru
          _
        // Predicated region
        $region69: #{tpu_custom_call.1} parent=63 // pred_check
          %p2188 = pneg %p188
        $region70: #{tpu_custom_call.1} parent=63 // pred_check_branch
          %2190 = sbr.rel (%p2188) target = $region72
        $region71: #{tpu_custom_call.1} parent=63 // pred_region
          %s2191 = sand.u32 %s173, 1
          %s2192 = scalar_lea.sflag [#allocation10], %s2191
          %s2193 = sand.u32 %s173, 1
          %s2194 = smul.addr %s2193, 512
          %s2195 = scalar_lea.vmem [#allocation9], %s2194
          %2197 = dma.done %s2192, 8192
        $region72: #{tpu_custom_call.1} parent=63 // pred_fallthru
          _
      $region64: #{tpu_custom_call.1} parent=5 // pred_fallthru
        _
    $region6: #{tpu_custom_call.1} parent=1 // loop_footer
      %s27 = sadd.s32 1, %s23
    $region7: #{tpu_custom_call.1} parent=1 // loop_footer_branch
      %22 = sbr.rel target = $region3
    $region8: #{tpu_custom_call.1} parent=1 // loop_exit
      _
    %2198 = vsyncpa [#allocation3], 1
    %s2199 = scalar_lea.sflag [#allocation3], 1
    %2200 = vsyncpa %s2199, 1
    %2201 = vsyncpa [#allocation6], 1
    %2202 = vsyncpa [#allocation4], 1
    %s2203 = scalar_lea.sflag [#allocation4], 1
    %2204 = vsyncpa %s2203, 1
    %2205 = vsyncpa [#allocation10], 1
    %s2206 = scalar_lea.sflag [#allocation10], 1
    %2207 = vsyncpa %s2206, 1

// kernel: tpu_custom_call.1
$region0: #{tpu_custom_call.1}
  #allocation0 [shape = 'u32[]', space=smem, size = 0x4, offset = 0x4, fixed_abs, tag = 'smem constant byte address 0x4 - core index']
  #allocation1 [shape = 'u32[72,128]{1,0:T(1,128)}', space=vmem, size = 0x9000, scoped, tag = 'internal scratch']
  %s0 = inlined_call_operand.hbm [shape: bf16[1024,256], index: 0, kind: input, shape index: {}]
  %s1 = inlined_call_operand.hbm [shape: bf16[256,128], index: 1, kind: input, shape index: {}]
  %s2 = inlined_call_operand.vmem [shape: bf16[1,128], index: 2, kind: input, shape index: {}]
  %s3 = inlined_call_operand.hbm [shape: bf16[128,256], index: 3, kind: input, shape index: {}]
  %s4 = inlined_call_operand.vmem [shape: bf16[1,256], index: 4, kind: input, shape index: {}]
  %s5 = inlined_call_operand.hbm [shape: bf16[1024,128], index: 5, kind: output, shape index: {0}]
  %s6 = inlined_call_operand.hbm [shape: bf16[1024,256], index: 6, kind: output, shape index: {1}]
  %7 = xla_tuple %s5, %s6
  %s8 = sld [smem:[#allocation0]]
  $region73: #{tpu_custom_call.1} parent=0
    _
  %s10 = ssub.s32 1, %s8
  %s11 = scalar_select 0, %s10, %s8
  $region1: #{tpu_custom_call.1} parent=0
    #allocation2 [shape = 'u8[524288]{0}', space=vmem, size = 0x80000, scoped, tag = 'input window, operand 0']
    #allocation3 [shape = 's32[2]{0}', space=sflag, size = 0x8, scoped, tag = 'scoped memory for tpu_custom_call.1']
    #allocation4 [shape = 's32[2]{0}', space=sflag, size = 0x8, scoped, tag = 'scoped memory for tpu_custom_call.1']
    #allocation5 [shape = 'u8[65536]{0}', space=vmem, size = 0x10000, scoped, tag = 'input window, operand 1, single buffered']
    #allocation6 [shape = 's32[1]{0}', space=sflag, size = 0x4, scoped, tag = 'scoped memory for tpu_custom_call.1']
    #allocation7 [shape = 'u8[65536]{0}', space=vmem, size = 0x10000, scoped, tag = 'input window, operand 3, single buffered']
    #allocation8 [shape = 'u8[262144]{0}', space=vmem, size = 0x40000, scoped, tag = 'output window, operand 0']
    #allocation9 [shape = 'u8[524288]{0}', space=vmem, size = 0x80000, scoped, tag = 'output window, operand 1']
    #allocation10 [shape = 's32[2]{0}', space=sflag, size = 0x8, scoped, tag = 'scoped memory for tpu_custom_call.1']
    %12 = vsyncpa [#allocation3], 0
    %s13 = scalar_lea.sflag [#allocation3], 1
    %14 = vsyncpa %s13, 0
    %15 = vsyncpa [#allocation6], 0
    %16 = vsyncpa [#allocation4], 0
    %s17 = scalar_lea.sflag [#allocation4], 1
    %18 = vsyncpa %s17, 0
    %19 = vsyncpa [#allocation10], 0
    %s20 = scalar_lea.sflag [#allocation10], 1
    %21 = vsyncpa %s20, 0
    loop: start=0, step=1, limit=4
    $region2: #{tpu_custom_call.1} parent=1 // loop_pre_header
      _
    $region3: #{tpu_custom_call.1} parent=1 // loop_header
      %s23 = sphi 0, %s27
      %p24 = scmp.ge.s32.totalorder %s23, 4
      %s33 = sphi 0, %s35
      %s36 = sphi 0, %s33
      %s37 = sphi 0, %s36
      %s53 = sphi 0, %s37
      %s57 = sphi 0, %s57
      %s59 = sphi 0, %s57
      %s60 = sphi 0, %s59
      %s74 = sphi 0, %s60
      %s78 = sphi 0, %s78
      %s80 = sphi 0, %s78
      %s81 = sphi 0, %s80
      %s95 = sphi 0, %s81
      %s99 = sphi 0, %s99
      %s101 = sphi 0, %s99
      %s102 = sphi 0, %s101
      %s116 = sphi 0, %s102
      %s120 = sphi 0, %s120
      %s122 = sphi 0, %s120
      %s123 = sphi 0, %s122
      %s137 = sphi 0, %s123
      %s143 = sphi 0, %s145
      %s146 = sphi 0, %s143
      %s147 = sphi 0, %s146
      %s163 = sphi 0, %s147
      %s169 = sphi 0, %s171
      %s172 = sphi 0, %s169
      %s173 = sphi 0, %s172
      %s189 = sphi 0, %s173
    $region4: #{tpu_custom_call.1} parent=1 // loop_header_branch
      %26 = sbr.rel (%p24) target = $region8
    $region5: #{tpu_custom_call.1} parent=1 // loop_body
      %s28 = ssub.s32 %s23, 1
      %s29 = ssub.s32 %s23, 2
      %s30 = sadd.s32 %s23, 1
      %s31 = ssub.s32 %s23, %s30
      %p32 = scmp.eq.s32.totalorder %s31, 0
      %s34 = sadd.s32 %s33, 1
      %s35 = scalar_select %p32, %s33, %s34
      %p38 = pneg %p32
      %p39 = scmp.eq.s32.totalorder %s23, 1
      %p40 = por %p38, %p39
      %p41 = scmp.ne.s32.totalorder %s33, %s36
      %p42 = scmp.eq.s32.totalorder %s23, 0
      %p43 = por %p41, %p42
      %p44 = scmp.ne.s32.totalorder %s33, %s36
      %p45 = scmp.eq.s32.totalorder %s28, 1
      %p46 = por %p44, %p45
      %p47 = scmp.ne.s32.totalorder %s36, %s37
      %p48 = scmp.eq.s32.totalorder %s28, 0
      %p49 = por %p47, %p48
      %p50 = scmp.ne.s32.totalorder %s36, %s37
      %p51 = scmp.eq.s32.totalorder %s29, 1
      %p52 = por %p50, %p51
      %p54 = scmp.ne.s32.totalorder %s37, %s53
      %p55 = scmp.eq.s32.totalorder %s29, 0
      %p56 = por %p54, %p55
      %s58 = sadd.s32 %s57, 1
      %p61 = scmp.eq.s32.totalorder %s23, 1
      %p62 = scmp.ne.s32.totalorder %s57, %s59
      %p63 = scmp.eq.s32.totalorder %s23, 0
      %p64 = por %p62, %p63
      %p65 = scmp.ne.s32.totalorder %s57, %s59
      %p66 = scmp.eq.s32.totalorder %s28, 1
      %p67 = por %p65, %p66
      %p68 = scmp.ne.s32.totalorder %s59, %s60
      %p69 = scmp.eq.s32.totalorder %s28, 0
      %p70 = por %p68, %p69
      %p71 = scmp.ne.s32.totalorder %s59, %s60
      %p72 = scmp.eq.s32.totalorder %s29, 1
      %p73 = por %p71, %p72
      %p75 = scmp.ne.s32.totalorder %s60, %s74
      %p76 = scmp.eq.s32.totalorder %s29, 0
      %p77 = por %p75, %p76
      %s79 = sadd.s32 %s78, 1
      %p82 = scmp.eq.s32.totalorder %s23, 1
      %p83 = scmp.ne.s32.totalorder %s78, %s80
      %p84 = scmp.eq.s32.totalorder %s23, 0
      %p85 = por %p83, %p84
      %p86 = scmp.ne.s32.totalorder %s78, %s80
      %p87 = scmp.eq.s32.totalorder %s28, 1
      %p88 = por %p86, %p87
      %p89 = scmp.ne.s32.totalorder %s80, %s81
      %p90 = scmp.eq.s32.totalorder %s28, 0
      %p91 = por %p89, %p90
      %p92 = scmp.ne.s32.totalorder %s80, %s81
      %p93 = scmp.eq.s32.totalorder %s29, 1
      %p94 = por %p92, %p93
      %p96 = scmp.ne.s32.totalorder %s81, %s95
      %p97 = scmp.eq.s32.totalorder %s29, 0
      %p98 = por %p96, %p97
      %s100 = sadd.s32 %s99, 1
      %p103 = scmp.eq.s32.totalorder %s23, 1
      %p104 = scmp.ne.s32.totalorder %s99, %s101
      %p105 = scmp.eq.s32.totalorder %s23, 0
      %p106 = por %p104, %p105
      %p107 = scmp.ne.s32.totalorder %s99, %s101
      %p108 = scmp.eq.s32.totalorder %s28, 1
      %p109 = por %p107, %p108
      %p110 = scmp.ne.s32.totalorder %s101, %s102
      %p111 = scmp.eq.s32.totalorder %s28, 0
      %p112 = por %p110, %p111
      %p113 = scmp.ne.s32.totalorder %s101, %s102
      %p114 = scmp.eq.s32.totalorder %s29, 1
      %p115 = por %p113, %p114
      %p117 = scmp.ne.s32.totalorder %s102, %s116
      %p118 = scmp.eq.s32.totalorder %s29, 0
      %p119 = por %p117, %p118
      %s121 = sadd.s32 %s120, 1
      %p124 = scmp.eq.s32.totalorder %s23, 1
      %p125 = scmp.ne.s32.totalorder %s120, %s122
      %p126 = scmp.eq.s32.totalorder %s23, 0
      %p127 = por %p125, %p126
      %p128 = scmp.ne.s32.totalorder %s120, %s122
      %p129 = scmp.eq.s32.totalorder %s28, 1
      %p130 = por %p128, %p129
      %p131 = scmp.ne.s32.totalorder %s122, %s123
      %p132 = scmp.eq.s32.totalorder %s28, 0
      %p133 = por %p131, %p132
      %p134 = scmp.ne.s32.totalorder %s122, %s123
      %p135 = scmp.eq.s32.totalorder %s29, 1
      %p136 = por %p134, %p135
      %p138 = scmp.ne.s32.totalorder %s123, %s137
      %p139 = scmp.eq.s32.totalorder %s29, 0
      %p140 = por %p138, %p139
      %s141 = ssub.s32 %s23, %s30
      %p142 = scmp.eq.s32.totalorder %s141, 0
      %s144 = sadd.s32 %s143, 1
      %s145 = scalar_select %p142, %s143, %s144
      %p148 = pneg %p142
      %p149 = scmp.eq.s32.totalorder %s23, 1
      %p150 = por %p148, %p149
      %p151 = scmp.ne.s32.totalorder %s143, %s146
      %p152 = scmp.eq.s32.totalorder %s23, 0
      %p153 = por %p151, %p152
      %p154 = scmp.ne.s32.totalorder %s143, %s146
      %p155 = scmp.eq.s32.totalorder %s28, 1
      %p156 = por %p154, %p155
      %p157 = scmp.ne.s32.totalorder %s146, %s147
      %p158 = scmp.eq.s32.totalorder %s28, 0
      %p159 = por %p157, %p158
      %p160 = scmp.ne.s32.totalorder %s146, %s147
      %p161 = scmp.eq.s32.totalorder %s29, 1
      %p162 = por %p160, %p161
      %p164 = scmp.ne.s32.totalorder %s147, %s163
      %p165 = scmp.eq.s32.totalorder %s29, 0
      %p166 = por %p164, %p165
      %s167 = ssub.s32 %s23, %s30
      %p168 = scmp.eq.s32.totalorder %s167, 0
      %s170 = sadd.s32 %s169, 1
      %s171 = scalar_select %p168, %s169, %s170
      %p174 = pneg %p168
      %p175 = scmp.eq.s32.totalorder %s23, 1
      %p176 = por %p174, %p175
      %p177 = scmp.ne.s32.totalorder %s169, %s172
      %p178 = scmp.eq.s32.totalorder %s23, 0
      %p179 = por %p177, %p178
      %p180 = scmp.ne.s32.totalorder %s169, %s172
      %p181 = scmp.eq.s32.totalorder %s28, 1
      %p182 = por %p180, %p181
      %p183 = scmp.ne.s32.totalorder %s172, %s173
      %p184 = scmp.eq.s32.totalorder %s28, 0
      %p185 = por %p183, %p184
      %p186 = scmp.ne.s32.totalorder %s172, %s173
      %p187 = scmp.eq.s32.totalorder %s29, 1
      %p188 = por %p186, %p187
      %p190 = scmp.ne.s32.totalorder %s173, %s189
      %p191 = scmp.eq.s32.totalorder %s29, 0
      %p192 = por %p190, %p191
      %p193 = scmp.le.s32.totalorder 1, %s23
      %p194 = scmp.lt.s32.totalorder %s23, 3
      %p195 = pnand %p193, %p194
      %p196 = pneg %p195
      // Predicated region
      $region9: #{tpu_custom_call.1} parent=5 // pred_check
        _
      $region10: #{tpu_custom_call.1} parent=5 // pred_check_branch
        %198 = sbr.rel (%p195) target = $region12
      $region11: #{tpu_custom_call.1} parent=5 // pred_region
        %s199 = ssub.s32 %s23, 1
        // Predicated region
        $region13: #{tpu_custom_call.1} parent=11 // pred_check
          %p200 = pneg %p70
        $region14: #{tpu_custom_call.1} parent=11 // pred_check_branch
          %202 = sbr.rel (%p200) target = $region16
        $region15: #{tpu_custom_call.1} parent=11 // pred_region
          %204 = vsyncadd [#allocation6], 0
          %s205 = sshll.u32 %s1, 4
          %s206 = int_to_ptr.hbm [resolvable:$true] %s205
          %s207 = sshll.u32 [#allocation5], 4
          %s208 = int_to_ptr.vmem [resolvable:$true] %s207
          %213 = dma.hbm_to_vmem [thread:$0]  %s206, 2048, %s208, [#allocation6], 64, 64, 4
        $region16: #{tpu_custom_call.1} parent=11 // pred_fallthru
          _
        // Predicated region
        $region17: #{tpu_custom_call.1} parent=11 // pred_check
          %p214 = pneg %p91
        $region18: #{tpu_custom_call.1} parent=11 // pred_check_branch
          %216 = sbr.rel (%p214) target = $region20
        $region19: #{tpu_custom_call.1} parent=11 // pred_region
          _
        $region20: #{tpu_custom_call.1} parent=11 // pred_fallthru
          _
        // Predicated region
        $region21: #{tpu_custom_call.1} parent=11 // pred_check
          %p217 = pneg %p112
        $region22: #{tpu_custom_call.1} parent=11 // pred_check_branch
          %219 = sbr.rel (%p217) target = $region24
        $region23: #{tpu_custom_call.1} parent=11 // pred_region
          %221 = vsyncadd [#allocation6], 0
          %s222 = sshll.u32 %s3, 4
          %s223 = int_to_ptr.hbm [resolvable:$true] %s222
          %s224 = sshll.u32 [#allocation7], 4
          %s225 = int_to_ptr.vmem [resolvable:$true] %s224
          %230 = dma.hbm_to_vmem [thread:$0]  %s223, 2048, %s225, [#allocation6], 128, 128, 8
        $region24: #{tpu_custom_call.1} parent=11 // pred_fallthru
          _
        // Predicated region
        $region25: #{tpu_custom_call.1} parent=11 // pred_check
          %p231 = pneg %p133
        $region26: #{tpu_custom_call.1} parent=11 // pred_check_branch
          %233 = sbr.rel (%p231) target = $region28
        $region27: #{tpu_custom_call.1} parent=11 // pred_region
          _
        $region28: #{tpu_custom_call.1} parent=11 // pred_fallthru
          _
      $region12: #{tpu_custom_call.1} parent=5 // pred_fallthru
        _
      %p234 = scmp.lt.s32.totalorder %s23, 2
      // Predicated region
      $region29: #{tpu_custom_call.1} parent=5 // pred_check
        %p235 = pneg %p234
      $region30: #{tpu_custom_call.1} parent=5 // pred_check_branch
        %237 = sbr.rel (%p235) target = $region32
      $region31: #{tpu_custom_call.1} parent=5 // pred_region
        // Predicated region
        $region33: #{tpu_custom_call.1} parent=31 // pred_check
          %p238 = pneg %p43
        $region34: #{tpu_custom_call.1} parent=31 // pred_check_branch
          %240 = sbr.rel (%p238) target = $region36
        $region35: #{tpu_custom_call.1} parent=31 // pred_region
          %s241 = sand.u32 %s33, 1
          %s242 = scalar_lea.sflag [#allocation3], %s241
          %s243 = sand.u32 %s33, 1
          %s244 = smul.addr %s243, 512
          %s245 = scalar_lea.vmem [#allocation2], %s244
          %s246 = smul.u32 64, %s23
          %248 = vsyncadd %s242, 0
          %s249 = smul.addr %s246, 2
          %s250 = smul.addr %s249, 4
          %s251 = scalar_lea.hbm %s0, %s250
          %s252 = sshll.u32 %s251, 4
          %s253 = int_to_ptr.hbm [resolvable:$true] %s252
          %s254 = sshll.u32 %s245, 4
          %s255 = int_to_ptr.vmem [resolvable:$true] %s254
          %260 = dma.hbm_to_vmem [thread:$0]  %s253, 8192, %s255, %s242, 128, 128, 8
        $region36: #{tpu_custom_call.1} parent=31 // pred_fallthru
          _
      $region32: #{tpu_custom_call.1} parent=5 // pred_fallthru
        _
      %p261 = scmp.le.s32.totalorder 1, %s23
      %p262 = scmp.lt.s32.totalorder %s23, 3
      %p263 = pnand %p261, %p262
      %p264 = pneg %p263
      // Predicated region
      $region37: #{tpu_custom_call.1} parent=5 // pred_check
        _
      $region38: #{tpu_custom_call.1} parent=5 // pred_check_branch
        %266 = sbr.rel (%p263) target = $region40
      $region39: #{tpu_custom_call.1} parent=5 // pred_region
        %s267 = ssub.s32 %s23, 1
        %s268 = sand.u32 %s36, 1
        %s269 = scalar_lea.sflag [#allocation3], %s268
        %s270 = sand.u32 %s36, 1
        %s271 = smul.addr %s270, 512
        %s272 = scalar_lea.vmem [#allocation2], %s271
        // Predicated region
        $region41: #{tpu_custom_call.1} parent=39 // pred_check
          %p273 = pneg %p49
        $region42: #{tpu_custom_call.1} parent=39 // pred_check_branch
          %275 = sbr.rel (%p273) target = $region44
        $region43: #{tpu_custom_call.1} parent=39 // pred_region
          %277 = dma.done %s269, 8192
        $region44: #{tpu_custom_call.1} parent=39 // pred_fallthru
          _
        // Predicated region
        $region45: #{tpu_custom_call.1} parent=39 // pred_check
          %p278 = pneg %p70
        $region46: #{tpu_custom_call.1} parent=39 // pred_check_branch
          %280 = sbr.rel (%p278) target = $region48
        $region47: #{tpu_custom_call.1} parent=39 // pred_region
          %282 = dma.done [#allocation6], 2048
        $region48: #{tpu_custom_call.1} parent=39 // pred_fallthru
          _
        // Predicated region
        $region49: #{tpu_custom_call.1} parent=39 // pred_check
          %p283 = pneg %p112
        $region50: #{tpu_custom_call.1} parent=39 // pred_check_branch
          %285 = sbr.rel (%p283) target = $region52
        $region51: #{tpu_custom_call.1} parent=39 // pred_region
          %287 = dma.done [#allocation6], 2048
        $region52: #{tpu_custom_call.1} parent=39 // pred_fallthru
          _
        %s288 = sand.u32 %s36, 1
        %s289 = scalar_lea.sflag [#allocation3], %s288
        %s290 = sand.u32 %s36, 1
        %s291 = smul.addr %s290, 512
        %s292 = scalar_lea.vmem [#allocation2], %s291
        %p293 = pneg %p49
        %p294 = pneg %p46
        %p295 = pneg %p70
        %p296 = pneg %p67
        %p297 = pneg %p91
        %p298 = pneg %p88
        %p299 = pneg %p112
        %p300 = pneg %p109
        %p301 = pneg %p133
        %p302 = pneg %p130
        %p303 = pneg %p159
        %p304 = pneg %p156
        %s305 = sand.u32 %s146, 1
        %s306 = scalar_lea.sflag [#allocation4], %s305
        %s307 = sand.u32 %s146, 1
        %s308 = smul.addr %s307, 256
        %s309 = scalar_lea.vmem [#allocation8], %s308
        %p310 = pneg %p185
        %p311 = pneg %p182
        %s312 = sand.u32 %s172, 1
        %s313 = scalar_lea.sflag [#allocation10], %s312
        %s314 = sand.u32 %s172, 1
        %s315 = smul.addr %s314, 512
        %s316 = scalar_lea.vmem [#allocation9], %s315
        %s317 = smul.u32 64, %s28
        %s318 = smul.u32 64, %s28
        %s319 = smul.u32 64, %s28
        %v320 = vld [vmem:[%s272] sm:$0xff]
        %v321 = vld [vmem:[%s272 + $0x8] sm:$0xff]
        %v322 = vld [vmem:[%s272 + $0x10] sm:$0xff]
        %v323 = vld [vmem:[%s272 + $0x18] sm:$0xff]
        %v324 = vld [vmem:[%s272 + $0x20] sm:$0xff]
        %v325 = vld [vmem:[%s272 + $0x28] sm:$0xff]
        %v326 = vld [vmem:[%s272 + $0x30] sm:$0xff]
        %v327 = vld [vmem:[%s272 + $0x38] sm:$0xff]
        %v328 = vld [vmem:[%s272 + $0x40] sm:$0xff]
        %v329 = vld [vmem:[%s272 + $0x48] sm:$0xff]
        %v330 = vld [vmem:[%s272 + $0x50] sm:$0xff]
        %v331 = vld [vmem:[%s272 + $0x58] sm:$0xff]
        %v332 = vld [vmem:[%s272 + $0x60] sm:$0xff]
        %v333 = vld [vmem:[%s272 + $0x68] sm:$0xff]
        %v334 = vld [vmem:[%s272 + $0x70] sm:$0xff]
        %v335 = vld [vmem:[%s272 + $0x78] sm:$0xff]
        %v336 = vld [vmem:[%s272 + $0x80] sm:$0xff]
        %v337 = vld [vmem:[%s272 + $0x88] sm:$0xff]
        %v338 = vld [vmem:[%s272 + $0x90] sm:$0xff]
        %v339 = vld [vmem:[%s272 + $0x98] sm:$0xff]
        %v340 = vld [vmem:[%s272 + $0xa0] sm:$0xff]
        %v341 = vld [vmem:[%s272 + $0xa8] sm:$0xff]
        %v342 = vld [vmem:[%s272 + $0xb0] sm:$0xff]
        %v343 = vld [vmem:[%s272 + $0xb8] sm:$0xff]
        %v344 = vld [vmem:[%s272 + $0xc0] sm:$0xff]
        %v345 = vld [vmem:[%s272 + $0xc8] sm:$0xff]
        %v346 = vld [vmem:[%s272 + $0xd0] sm:$0xff]
        %v347 = vld [vmem:[%s272 + $0xd8] sm:$0xff]
        %v348 = vld [vmem:[%s272 + $0xe0] sm:$0xff]
        %v349 = vld [vmem:[%s272 + $0xe8] sm:$0xff]
        %v350 = vld [vmem:[%s272 + $0xf0] sm:$0xff]
        %v351 = vld [vmem:[%s272 + $0xf8] sm:$0xff]
        %v352 = vld [vmem:[%s272 + $0x100] sm:$0xff]
        %v353 = vld [vmem:[%s272 + $0x108] sm:$0xff]
        %v354 = vld [vmem:[%s272 + $0x110] sm:$0xff]
        %v355 = vld [vmem:[%s272 + $0x118] sm:$0xff]
        %v356 = vld [vmem:[%s272 + $0x120] sm:$0xff]
        %v357 = vld [vmem:[%s272 + $0x128] sm:$0xff]
        %v358 = vld [vmem:[%s272 + $0x130] sm:$0xff]
        %v359 = vld [vmem:[%s272 + $0x138] sm:$0xff]
        %v360 = vld [vmem:[%s272 + $0x140] sm:$0xff]
        %v361 = vld [vmem:[%s272 + $0x148] sm:$0xff]
        %v362 = vld [vmem:[%s272 + $0x150] sm:$0xff]
        %v363 = vld [vmem:[%s272 + $0x158] sm:$0xff]
        %v364 = vld [vmem:[%s272 + $0x160] sm:$0xff]
        %v365 = vld [vmem:[%s272 + $0x168] sm:$0xff]
        %v366 = vld [vmem:[%s272 + $0x170] sm:$0xff]
        %v367 = vld [vmem:[%s272 + $0x178] sm:$0xff]
        %v368 = vld [vmem:[%s272 + $0x180] sm:$0xff]
        %v369 = vld [vmem:[%s272 + $0x188] sm:$0xff]
        %v370 = vld [vmem:[%s272 + $0x190] sm:$0xff]
        %v371 = vld [vmem:[%s272 + $0x198] sm:$0xff]
        %v372 = vld [vmem:[%s272 + $0x1a0] sm:$0xff]
        %v373 = vld [vmem:[%s272 + $0x1a8] sm:$0xff]
        %v374 = vld [vmem:[%s272 + $0x1b0] sm:$0xff]
        %v375 = vld [vmem:[%s272 + $0x1b8] sm:$0xff]
        %v376 = vld [vmem:[%s272 + $0x1c0] sm:$0xff]
        %v377 = vld [vmem:[%s272 + $0x1c8] sm:$0xff]
        %v378 = vld [vmem:[%s272 + $0x1d0] sm:$0xff]
        %v379 = vld [vmem:[%s272 + $0x1d8] sm:$0xff]
        %v380 = vld [vmem:[%s272 + $0x1e0] sm:$0xff]
        %v381 = vld [vmem:[%s272 + $0x1e8] sm:$0xff]
        %v382 = vld [vmem:[%s272 + $0x1f0] sm:$0xff]
        %v383 = vld [vmem:[%s272 + $0x1f8] sm:$0xff]
        %v384 = vld [vmem:[#allocation5] sm:$0xf]
        %v385 = vld [vmem:[#allocation5 + $0x4] sm:$0xf]
        %v386 = vld [vmem:[#allocation5 + $0x8] sm:$0xf]
        %v387 = vld [vmem:[#allocation5 + $0xc] sm:$0xf]
        %v388 = vld [vmem:[#allocation5 + $0x10] sm:$0xf]
        %v389 = vld [vmem:[#allocation5 + $0x14] sm:$0xf]
        %v390 = vld [vmem:[#allocation5 + $0x18] sm:$0xf]
        %v391 = vld [vmem:[#allocation5 + $0x1c] sm:$0xf]
        %v392 = vld [vmem:[#allocation5 + $0x20] sm:$0xf]
        %v393 = vld [vmem:[#allocation5 + $0x24] sm:$0xf]
        %v394 = vld [vmem:[#allocation5 + $0x28] sm:$0xf]
        %v395 = vld [vmem:[#allocation5 + $0x2c] sm:$0xf]
        %v396 = vld [vmem:[#allocation5 + $0x30] sm:$0xf]
        %v397 = vld [vmem:[#allocation5 + $0x34] sm:$0xf]
        %v398 = vld [vmem:[#allocation5 + $0x38] sm:$0xf]
        %v399 = vld [vmem:[#allocation5 + $0x3c] sm:$0xf]
        %v400 = vld [vmem:[#allocation5 + $0x40] sm:$0xf]
        %v401 = vld [vmem:[#allocation5 + $0x44] sm:$0xf]
        %v402 = vld [vmem:[#allocation5 + $0x48] sm:$0xf]
        %v403 = vld [vmem:[#allocation5 + $0x4c] sm:$0xf]
        %v404 = vld [vmem:[#allocation5 + $0x50] sm:$0xf]
        %v405 = vld [vmem:[#allocation5 + $0x54] sm:$0xf]
        %v406 = vld [vmem:[#allocation5 + $0x58] sm:$0xf]
        %v407 = vld [vmem:[#allocation5 + $0x5c] sm:$0xf]
        %v408 = vld [vmem:[#allocation5 + $0x60] sm:$0xf]
        %v409 = vld [vmem:[#allocation5 + $0x64] sm:$0xf]
        %v410 = vld [vmem:[#allocation5 + $0x68] sm:$0xf]
        %v411 = vld [vmem:[#allocation5 + $0x6c] sm:$0xf]
        %v412 = vld [vmem:[#allocation5 + $0x70] sm:$0xf]
        %v413 = vld [vmem:[#allocation5 + $0x74] sm:$0xf]
        %v414 = vld [vmem:[#allocation5 + $0x78] sm:$0xf]
        %v415 = vld [vmem:[#allocation5 + $0x7c] sm:$0xf]
        %v416 = vld [vmem:[%s2] sm:$0x1]
        %v417 = vunpack.c.l.bf16 %v416
        %v418 = vperm.slane %v417, 0
        %v483 = vunpack.c.l.b16 %v320
        %v484 = vunpack.c.h.b16 %v320
        %v485 = vunpack.c.l.b16 %v321
        %v486 = vunpack.c.h.b16 %v321
        %v487 = vunpack.c.l.b16 %v322
        %v488 = vunpack.c.h.b16 %v322
        %v489 = vunpack.c.l.b16 %v323
        %v490 = vunpack.c.h.b16 %v323
        %v491 = vunpack.c.l.b16 %v324
        %v492 = vunpack.c.h.b16 %v324
        %v493 = vunpack.c.l.b16 %v325
        %v494 = vunpack.c.h.b16 %v325
        %v495 = vunpack.c.l.b16 %v326
        %v496 = vunpack.c.h.b16 %v326
        %v497 = vunpack.c.l.b16 %v327
        %v498 = vunpack.c.h.b16 %v327
        %v499 = vunpack.c.l.b16 %v328
        %v500 = vunpack.c.h.b16 %v328
        %v501 = vunpack.c.l.b16 %v329
        %v502 = vunpack.c.h.b16 %v329
        %v503 = vunpack.c.l.b16 %v330
        %v504 = vunpack.c.h.b16 %v330
        %v505 = vunpack.c.l.b16 %v331
        %v506 = vunpack.c.h.b16 %v331
        %v507 = vunpack.c.l.b16 %v332
        %v508 = vunpack.c.h.b16 %v332
        %v509 = vunpack.c.l.b16 %v333
        %v510 = vunpack.c.h.b16 %v333
        %v511 = vunpack.c.l.b16 %v334
        %v512 = vunpack.c.h.b16 %v334
        %v513 = vunpack.c.l.b16 %v335
        %v514 = vunpack.c.h.b16 %v335
        %v515 = vunpack.c.l.b16 %v336
        %v516 = vunpack.c.h.b16 %v336
        %v517 = vunpack.c.l.b16 %v337
        %v518 = vunpack.c.h.b16 %v337
        %v519 = vunpack.c.l.b16 %v338
        %v520 = vunpack.c.h.b16 %v338
        %v521 = vunpack.c.l.b16 %v339
        %v522 = vunpack.c.h.b16 %v339
        %v523 = vunpack.c.l.b16 %v340
        %v524 = vunpack.c.h.b16 %v340
        %v525 = vunpack.c.l.b16 %v341
        %v526 = vunpack.c.h.b16 %v341
        %v527 = vunpack.c.l.b16 %v342
        %v528 = vunpack.c.h.b16 %v342
        %v529 = vunpack.c.l.b16 %v343
        %v530 = vunpack.c.h.b16 %v343
        %v531 = vunpack.c.l.b16 %v344
        %v532 = vunpack.c.h.b16 %v344
        %v533 = vunpack.c.l.b16 %v345
        %v534 = vunpack.c.h.b16 %v345
        %v535 = vunpack.c.l.b16 %v346
        %v536 = vunpack.c.h.b16 %v346
        %v537 = vunpack.c.l.b16 %v347
        %v538 = vunpack.c.h.b16 %v347
        %v539 = vunpack.c.l.b16 %v348
        %v540 = vunpack.c.h.b16 %v348
        %v541 = vunpack.c.l.b16 %v349
        %v542 = vunpack.c.h.b16 %v349
        %v543 = vunpack.c.l.b16 %v350
        %v544 = vunpack.c.h.b16 %v350
        %v545 = vunpack.c.l.b16 %v351
        %v546 = vunpack.c.h.b16 %v351
        %v547 = vunpack.c.l.b16 %v352
        %v548 = vunpack.c.h.b16 %v352
        %v549 = vunpack.c.l.b16 %v353
        %v550 = vunpack.c.h.b16 %v353
        %v551 = vunpack.c.l.b16 %v354
        %v552 = vunpack.c.h.b16 %v354
        %v553 = vunpack.c.l.b16 %v355
        %v554 = vunpack.c.h.b16 %v355
        %v555 = vunpack.c.l.b16 %v356
        %v556 = vunpack.c.h.b16 %v356
        %v557 = vunpack.c.l.b16 %v357
        %v558 = vunpack.c.h.b16 %v357
        %v559 = vunpack.c.l.b16 %v358
        %v560 = vunpack.c.h.b16 %v358
        %v561 = vunpack.c.l.b16 %v359
        %v562 = vunpack.c.h.b16 %v359
        %v563 = vunpack.c.l.b16 %v360
        %v564 = vunpack.c.h.b16 %v360
        %v565 = vunpack.c.l.b16 %v361
        %v566 = vunpack.c.h.b16 %v361
        %v567 = vunpack.c.l.b16 %v362
        %v568 = vunpack.c.h.b16 %v362
        %v569 = vunpack.c.l.b16 %v363
        %v570 = vunpack.c.h.b16 %v363
        %v571 = vunpack.c.l.b16 %v364
        %v572 = vunpack.c.h.b16 %v364
        %v573 = vunpack.c.l.b16 %v365
        %v574 = vunpack.c.h.b16 %v365
        %v575 = vunpack.c.l.b16 %v366
        %v576 = vunpack.c.h.b16 %v366
        %v577 = vunpack.c.l.b16 %v367
        %v578 = vunpack.c.h.b16 %v367
        %v579 = vunpack.c.l.b16 %v368
        %v580 = vunpack.c.h.b16 %v368
        %v581 = vunpack.c.l.b16 %v369
        %v582 = vunpack.c.h.b16 %v369
        %v583 = vunpack.c.l.b16 %v370
        %v584 = vunpack.c.h.b16 %v370
        %v585 = vunpack.c.l.b16 %v371
        %v586 = vunpack.c.h.b16 %v371
        %v587 = vunpack.c.l.b16 %v372
        %v588 = vunpack.c.h.b16 %v372
        %v589 = vunpack.c.l.b16 %v373
        %v590 = vunpack.c.h.b16 %v373
        %v591 = vunpack.c.l.b16 %v374
        %v592 = vunpack.c.h.b16 %v374
        %v593 = vunpack.c.l.b16 %v375
        %v594 = vunpack.c.h.b16 %v375
        %v595 = vunpack.c.l.b16 %v376
        %v596 = vunpack.c.h.b16 %v376
        %v597 = vunpack.c.l.b16 %v377
        %v598 = vunpack.c.h.b16 %v377
        %v599 = vunpack.c.l.b16 %v378
        %v600 = vunpack.c.h.b16 %v378
        %v601 = vunpack.c.l.b16 %v379
        %v602 = vunpack.c.h.b16 %v379
        %v603 = vunpack.c.l.b16 %v380
        %v604 = vunpack.c.h.b16 %v380
        %v605 = vunpack.c.l.b16 %v381
        %v606 = vunpack.c.h.b16 %v381
        %v607 = vunpack.c.l.b16 %v382
        %v608 = vunpack.c.h.b16 %v382
        %v609 = vunpack.c.l.b16 %v383
        %v610 = vunpack.c.h.b16 %v383
        %v611 = vpack.c.b16 %v485, %v483
        %v612 = vpack.c.b16 %v486, %v484
        %v613 = vpack.c.b16 %v489, %v487
        %v614 = vpack.c.b16 %v490, %v488
        %v615 = vpack.c.b16 %v493, %v491
        %v616 = vpack.c.b16 %v494, %v492
        %v617 = vpack.c.b16 %v497, %v495
        %v618 = vpack.c.b16 %v498, %v496
        %v619 = vpack.c.b16 %v501, %v499
        %v620 = vpack.c.b16 %v502, %v500
        %v621 = vpack.c.b16 %v505, %v503
        %v622 = vpack.c.b16 %v506, %v504
        %v623 = vpack.c.b16 %v509, %v507
        %v624 = vpack.c.b16 %v510, %v508
        %v625 = vpack.c.b16 %v513, %v511
        %v626 = vpack.c.b16 %v514, %v512
        %v627 = vpack.c.b16 %v517, %v515
        %v628 = vpack.c.b16 %v518, %v516
        %v629 = vpack.c.b16 %v521, %v519
        %v630 = vpack.c.b16 %v522, %v520
        %v631 = vpack.c.b16 %v525, %v523
        %v632 = vpack.c.b16 %v526, %v524
        %v633 = vpack.c.b16 %v529, %v527
        %v634 = vpack.c.b16 %v530, %v528
        %v635 = vpack.c.b16 %v533, %v531
        %v636 = vpack.c.b16 %v534, %v532
        %v637 = vpack.c.b16 %v537, %v535
        %v638 = vpack.c.b16 %v538, %v536
        %v639 = vpack.c.b16 %v541, %v539
        %v640 = vpack.c.b16 %v542, %v540
        %v641 = vpack.c.b16 %v545, %v543
        %v642 = vpack.c.b16 %v546, %v544
        %v643 = vpack.c.b16 %v549, %v547
        %v644 = vpack.c.b16 %v550, %v548
        %v645 = vpack.c.b16 %v553, %v551
        %v646 = vpack.c.b16 %v554, %v552
        %v647 = vpack.c.b16 %v557, %v555
        %v648 = vpack.c.b16 %v558, %v556
        %v649 = vpack.c.b16 %v561, %v559
        %v650 = vpack.c.b16 %v562, %v560
        %v651 = vpack.c.b16 %v565, %v563
        %v652 = vpack.c.b16 %v566, %v564
        %v653 = vpack.c.b16 %v569, %v567
        %v654 = vpack.c.b16 %v570, %v568
        %v655 = vpack.c.b16 %v573, %v571
        %v656 = vpack.c.b16 %v574, %v572
        %v657 = vpack.c.b16 %v577, %v575
        %v658 = vpack.c.b16 %v578, %v576
        %v659 = vpack.c.b16 %v581, %v579
        %v660 = vpack.c.b16 %v582, %v580
        %v661 = vpack.c.b16 %v585, %v583
        %v662 = vpack.c.b16 %v586, %v584
        %v663 = vpack.c.b16 %v589, %v587
        %v664 = vpack.c.b16 %v590, %v588
        %v665 = vpack.c.b16 %v593, %v591
        %v666 = vpack.c.b16 %v594, %v592
        %v667 = vpack.c.b16 %v597, %v595
        %v668 = vpack.c.b16 %v598, %v596
        %v669 = vpack.c.b16 %v601, %v599
        %v670 = vpack.c.b16 %v602, %v600
        %v671 = vpack.c.b16 %v605, %v603
        %v672 = vpack.c.b16 %v606, %v604
        %v673 = vpack.c.b16 %v609, %v607
        %v674 = vpack.c.b16 %v610, %v608
        %v771 = vunpack.c.l.b16 %v384
        %v772 = vunpack.c.l.b16 %v385
        %v773 = vunpack.c.l.b16 %v386
        %v774 = vunpack.c.l.b16 %v387
        %v775 = vunpack.c.l.b16 %v388
        %v776 = vunpack.c.l.b16 %v389
        %v777 = vunpack.c.l.b16 %v390
        %v778 = vunpack.c.l.b16 %v391
        %v779 = vunpack.c.l.b16 %v392
        %v780 = vunpack.c.l.b16 %v393
        %v781 = vunpack.c.l.b16 %v394
        %v782 = vunpack.c.l.b16 %v395
        %v783 = vunpack.c.l.b16 %v396
        %v784 = vunpack.c.l.b16 %v397
        %v785 = vunpack.c.l.b16 %v398
        %v786 = vunpack.c.l.b16 %v399
        %v787 = vunpack.c.l.b16 %v400
        %v788 = vunpack.c.l.b16 %v401
        %v789 = vunpack.c.l.b16 %v402
        %v790 = vunpack.c.l.b16 %v403
        %v791 = vunpack.c.l.b16 %v404
        %v792 = vunpack.c.l.b16 %v405
        %v793 = vunpack.c.l.b16 %v406
        %v794 = vunpack.c.l.b16 %v407
        %v795 = vunpack.c.l.b16 %v408
        %v796 = vunpack.c.l.b16 %v409
        %v797 = vunpack.c.l.b16 %v410
        %v798 = vunpack.c.l.b16 %v411
        %v799 = vunpack.c.l.b16 %v412
        %v800 = vunpack.c.l.b16 %v413
        %v801 = vunpack.c.l.b16 %v414
        %v802 = vunpack.c.l.b16 %v415
        %v803 = vpack.c.b16 %v772, %v771
        %v804 = vpack.c.b16 %v774, %v773
        %v805 = vpack.c.b16 %v776, %v775
        %v806 = vpack.c.b16 %v778, %v777
        %v807 = vpack.c.b16 %v780, %v779
        %v808 = vpack.c.b16 %v782, %v781
        %v809 = vpack.c.b16 %v784, %v783
        %v810 = vpack.c.b16 %v786, %v785
        %v811 = vpack.c.b16 %v788, %v787
        %v812 = vpack.c.b16 %v790, %v789
        %v813 = vpack.c.b16 %v792, %v791
        %v814 = vpack.c.b16 %v794, %v793
        %v815 = vpack.c.b16 %v796, %v795
        %v816 = vpack.c.b16 %v798, %v797
        %v817 = vpack.c.b16 %v800, %v799
        %v818 = vpack.c.b16 %v802, %v801
        %835 = vmatpush.bf16.msra.mxu0 %v810
        %836 = vmatpush.bf16.msra.mxu0 %v809
        %837 = vmatpush.bf16.msra.mxu0 %v808
        %838 = vmatpush.bf16.msra.mxu0 %v807
        %839 = vmatpush.bf16.msra.mxu0 %v806
        %840 = vmatpush.bf16.msra.mxu0 %v805
        %841 = vmatpush.bf16.msra.mxu0 %v804
        %842 = vmatpush.bf16.msra.mxu0 %v803
        %843 = vmatmul.bf16.gmra.mxu0 %v611
        %v844 = vpop.f32.mrf.mxu0
        %v845 = vadd.f32 %v418, %v844
        %v846 = vpop.f32.mrf.mxu0
        %v847 = vadd.f32 %v418, %v846
        %848 = vmatmul.bf16.gmra.mxu0 %v613
        %v849 = vpop.f32.mrf.mxu0
        %v850 = vadd.f32 %v418, %v849
        %v851 = vpop.f32.mrf.mxu0
        %v852 = vadd.f32 %v418, %v851
        %853 = vmatmul.bf16.gmra.mxu0 %v615
        %v854 = vpop.f32.mrf.mxu0
        %v855 = vadd.f32 %v418, %v854
        %v856 = vpop.f32.mrf.mxu0
        %v857 = vadd.f32 %v418, %v856
        %858 = vmatmul.bf16.gmra.mxu0 %v617
        %v859 = vpop.f32.mrf.mxu0
        %v860 = vadd.f32 %v418, %v859
        %v861 = vpop.f32.mrf.mxu0
        %v862 = vadd.f32 %v418, %v861
        %863 = vmatmul.bf16.gmra.mxu0 %v619
        %v864 = vpop.f32.mrf.mxu0
        %v865 = vadd.f32 %v418, %v864
        %v866 = vpop.f32.mrf.mxu0
        %v867 = vadd.f32 %v418, %v866
        %868 = vmatmul.bf16.gmra.mxu0 %v621
        %v869 = vpop.f32.mrf.mxu0
        %v870 = vadd.f32 %v418, %v869
        %v871 = vpop.f32.mrf.mxu0
        %v872 = vadd.f32 %v418, %v871
        %873 = vmatmul.bf16.gmra.mxu0 %v623
        %v874 = vpop.f32.mrf.mxu0
        %v875 = vadd.f32 %v418, %v874
        %v876 = vpop.f32.mrf.mxu0
        %v877 = vadd.f32 %v418, %v876
        %878 = vmatmul.bf16.gmra.mxu0 %v625
        %v879 = vpop.f32.mrf.mxu0
        %v880 = vadd.f32 %v418, %v879
        %v881 = vpop.f32.mrf.mxu0
        %v882 = vadd.f32 %v418, %v881
        %883 = vmatmul.bf16.gmra.mxu0 %v627
        %v884 = vpop.f32.mrf.mxu0
        %v885 = vadd.f32 %v418, %v884
        %v886 = vpop.f32.mrf.mxu0
        %v887 = vadd.f32 %v418, %v886
        %888 = vmatmul.bf16.gmra.mxu0 %v629
        %v889 = vpop.f32.mrf.mxu0
        %v890 = vadd.f32 %v418, %v889
        %v891 = vpop.f32.mrf.mxu0
        %v892 = vadd.f32 %v418, %v891
        %893 = vmatmul.bf16.gmra.mxu0 %v631
        %v894 = vpop.f32.mrf.mxu0
        %v895 = vadd.f32 %v418, %v894
        %v896 = vpop.f32.mrf.mxu0
        %v897 = vadd.f32 %v418, %v896
        %898 = vmatmul.bf16.gmra.mxu0 %v633
        %v899 = vpop.f32.mrf.mxu0
        %v900 = vadd.f32 %v418, %v899
        %v901 = vpop.f32.mrf.mxu0
        %v902 = vadd.f32 %v418, %v901
        %903 = vmatmul.bf16.gmra.mxu0 %v635
        %v904 = vpop.f32.mrf.mxu0
        %v905 = vadd.f32 %v418, %v904
        %v906 = vpop.f32.mrf.mxu0
        %v907 = vadd.f32 %v418, %v906
        %908 = vmatmul.bf16.gmra.mxu0 %v637
        %v909 = vpop.f32.mrf.mxu0
        %v910 = vadd.f32 %v418, %v909
        %v911 = vpop.f32.mrf.mxu0
        %v912 = vadd.f32 %v418, %v911
        %913 = vmatmul.bf16.gmra.mxu0 %v639
        %v914 = vpop.f32.mrf.mxu0
        %v915 = vadd.f32 %v418, %v914
        %v916 = vpop.f32.mrf.mxu0
        %v917 = vadd.f32 %v418, %v916
        %918 = vmatmul.bf16.gmra.mxu0 %v641
        %v919 = vpop.f32.mrf.mxu0
        %v920 = vadd.f32 %v418, %v919
        %v921 = vpop.f32.mrf.mxu0
        %v922 = vadd.f32 %v418, %v921
        %923 = vmatmul.bf16.gmra.mxu0 %v643
        %v924 = vpop.f32.mrf.mxu0
        %v925 = vadd.f32 %v418, %v924
        %v926 = vpop.f32.mrf.mxu0
        %v927 = vadd.f32 %v418, %v926
        %928 = vmatmul.bf16.gmra.mxu0 %v645
        %v929 = vpop.f32.mrf.mxu0
        %v930 = vadd.f32 %v418, %v929
        %v931 = vpop.f32.mrf.mxu0
        %v932 = vadd.f32 %v418, %v931
        %933 = vmatmul.bf16.gmra.mxu0 %v647
        %v934 = vpop.f32.mrf.mxu0
        %v935 = vadd.f32 %v418, %v934
        %v936 = vpop.f32.mrf.mxu0
        %v937 = vadd.f32 %v418, %v936
        %938 = vmatmul.bf16.gmra.mxu0 %v649
        %v939 = vpop.f32.mrf.mxu0
        %v940 = vadd.f32 %v418, %v939
        %v941 = vpop.f32.mrf.mxu0
        %v942 = vadd.f32 %v418, %v941
        %943 = vmatmul.bf16.gmra.mxu0 %v651
        %v944 = vpop.f32.mrf.mxu0
        %v945 = vadd.f32 %v418, %v944
        %v946 = vpop.f32.mrf.mxu0
        %v947 = vadd.f32 %v418, %v946
        %948 = vmatmul.bf16.gmra.mxu0 %v653
        %v949 = vpop.f32.mrf.mxu0
        %v950 = vadd.f32 %v418, %v949
        %v951 = vpop.f32.mrf.mxu0
        %v952 = vadd.f32 %v418, %v951
        %953 = vmatmul.bf16.gmra.mxu0 %v655
        %v954 = vpop.f32.mrf.mxu0
        %v955 = vadd.f32 %v418, %v954
        %v956 = vpop.f32.mrf.mxu0
        %v957 = vadd.f32 %v418, %v956
        %958 = vmatmul.bf16.gmra.mxu0 %v657
        %v959 = vpop.f32.mrf.mxu0
        %v960 = vadd.f32 %v418, %v959
        %v961 = vpop.f32.mrf.mxu0
        %v962 = vadd.f32 %v418, %v961
        %963 = vmatmul.bf16.gmra.mxu0 %v659
        %v964 = vpop.f32.mrf.mxu0
        %v965 = vadd.f32 %v418, %v964
        %v966 = vpop.f32.mrf.mxu0
        %v967 = vadd.f32 %v418, %v966
        %968 = vmatmul.bf16.gmra.mxu0 %v661
        %v969 = vpop.f32.mrf.mxu0
        %v970 = vadd.f32 %v418, %v969
        %v971 = vpop.f32.mrf.mxu0
        %v972 = vadd.f32 %v418, %v971
        %973 = vmatmul.bf16.gmra.mxu0 %v663
        %v974 = vpop.f32.mrf.mxu0
        %v975 = vadd.f32 %v418, %v974
        %v976 = vpop.f32.mrf.mxu0
        %v977 = vadd.f32 %v418, %v976
        %978 = vmatmul.bf16.gmra.mxu0 %v665
        %v979 = vpop.f32.mrf.mxu0
        %v980 = vadd.f32 %v418, %v979
        %v981 = vpop.f32.mrf.mxu0
        %v982 = vadd.f32 %v418, %v981
        %983 = vmatmul.bf16.gmra.mxu0 %v667
        %v984 = vpop.f32.mrf.mxu0
        %v985 = vadd.f32 %v418, %v984
        %v986 = vpop.f32.mrf.mxu0
        %v987 = vadd.f32 %v418, %v986
        %988 = vmatmul.bf16.gmra.mxu0 %v669
        %v989 = vpop.f32.mrf.mxu0
        %v990 = vadd.f32 %v418, %v989
        %v991 = vpop.f32.mrf.mxu0
        %v992 = vadd.f32 %v418, %v991
        %993 = vmatmul.bf16.gmra.mxu0 %v671
        %v994 = vpop.f32.mrf.mxu0
        %v995 = vadd.f32 %v418, %v994
        %v996 = vpop.f32.mrf.mxu0
        %v997 = vadd.f32 %v418, %v996
        %998 = vmatmul.bf16.gmra.mxu0 %v673
        %v999 = vpop.f32.mrf.mxu0
        %v1000 = vadd.f32 %v418, %v999
        %v1001 = vpop.f32.mrf.mxu0
        %v1002 = vadd.f32 %v418, %v1001
        %1003 = vdwg.mxu0
        %1004 = vmatpush.bf16.msra.mxu0 %v818
        %1005 = vmatpush.bf16.msra.mxu0 %v817
        %1006 = vmatpush.bf16.msra.mxu0 %v816
        %1007 = vmatpush.bf16.msra.mxu0 %v815
        %1008 = vmatpush.bf16.msra.mxu0 %v814
        %1009 = vmatpush.bf16.msra.mxu0 %v813
        %1010 = vmatpush.bf16.msra.mxu0 %v812
        %1011 = vmatpush.bf16.msra.mxu0 %v811
        %1012 = vmatmul.bf16.gmra.mxu0 %v612
        %v1013 = vpop.f32.mrf.mxu0
        %v1014 = vadd.f32 %v845, %v1013
        %v1015 = vpop.f32.mrf.mxu0
        %v1016 = vadd.f32 %v847, %v1015
        %1017 = vmatmul.bf16.gmra.mxu0 %v614
        %v1018 = vpop.f32.mrf.mxu0
        %v1019 = vadd.f32 %v850, %v1018
        %v1020 = vpop.f32.mrf.mxu0
        %v1021 = vadd.f32 %v852, %v1020
        %1022 = vmatmul.bf16.gmra.mxu0 %v616
        %v1023 = vpop.f32.mrf.mxu0
        %v1024 = vadd.f32 %v855, %v1023
        %v1025 = vpop.f32.mrf.mxu0
        %v1026 = vadd.f32 %v857, %v1025
        %1027 = vmatmul.bf16.gmra.mxu0 %v618
        %v1028 = vpop.f32.mrf.mxu0
        %v1029 = vadd.f32 %v860, %v1028
        %v1030 = vpop.f32.mrf.mxu0
        %v1031 = vadd.f32 %v862, %v1030
        %1032 = vmatmul.bf16.gmra.mxu0 %v620
        %v1033 = vpop.f32.mrf.mxu0
        %v1034 = vadd.f32 %v865, %v1033
        %v1035 = vpop.f32.mrf.mxu0
        %v1036 = vadd.f32 %v867, %v1035
        %1037 = vmatmul.bf16.gmra.mxu0 %v622
        %v1038 = vpop.f32.mrf.mxu0
        %v1039 = vadd.f32 %v870, %v1038
        %v1040 = vpop.f32.mrf.mxu0
        %v1041 = vadd.f32 %v872, %v1040
        %1042 = vmatmul.bf16.gmra.mxu0 %v624
        %v1043 = vpop.f32.mrf.mxu0
        %v1044 = vadd.f32 %v875, %v1043
        %v1045 = vpop.f32.mrf.mxu0
        %v1046 = vadd.f32 %v877, %v1045
        %1047 = vmatmul.bf16.gmra.mxu0 %v626
        %v1048 = vpop.f32.mrf.mxu0
        %v1049 = vadd.f32 %v880, %v1048
        %v1050 = vpop.f32.mrf.mxu0
        %v1051 = vadd.f32 %v882, %v1050
        %1052 = vmatmul.bf16.gmra.mxu0 %v628
        %v1053 = vpop.f32.mrf.mxu0
        %v1054 = vadd.f32 %v885, %v1053
        %v1055 = vpop.f32.mrf.mxu0
        %v1056 = vadd.f32 %v887, %v1055
        %1057 = vmatmul.bf16.gmra.mxu0 %v630
        %v1058 = vpop.f32.mrf.mxu0
        %v1059 = vadd.f32 %v890, %v1058
        %v1060 = vpop.f32.mrf.mxu0
        %v1061 = vadd.f32 %v892, %v1060
        %1062 = vmatmul.bf16.gmra.mxu0 %v632
        %v1063 = vpop.f32.mrf.mxu0
        %v1064 = vadd.f32 %v895, %v1063
        %v1065 = vpop.f32.mrf.mxu0
        %v1066 = vadd.f32 %v897, %v1065
        %1067 = vmatmul.bf16.gmra.mxu0 %v634
        %v1068 = vpop.f32.mrf.mxu0
        %v1069 = vadd.f32 %v900, %v1068
        %v1070 = vpop.f32.mrf.mxu0
        %v1071 = vadd.f32 %v902, %v1070
        %1072 = vmatmul.bf16.gmra.mxu0 %v636
        %v1073 = vpop.f32.mrf.mxu0
        %v1074 = vadd.f32 %v905, %v1073
        %v1075 = vpop.f32.mrf.mxu0
        %v1076 = vadd.f32 %v907, %v1075
        %1077 = vmatmul.bf16.gmra.mxu0 %v638
        %v1078 = vpop.f32.mrf.mxu0
        %v1079 = vadd.f32 %v910, %v1078
        %v1080 = vpop.f32.mrf.mxu0
        %v1081 = vadd.f32 %v912, %v1080
        %1082 = vmatmul.bf16.gmra.mxu0 %v640
        %v1083 = vpop.f32.mrf.mxu0
        %v1084 = vadd.f32 %v915, %v1083
        %v1085 = vpop.f32.mrf.mxu0
        %v1086 = vadd.f32 %v917, %v1085
        %1087 = vmatmul.bf16.gmra.mxu0 %v642
        %v1088 = vpop.f32.mrf.mxu0
        %v1089 = vadd.f32 %v920, %v1088
        %v1090 = vpop.f32.mrf.mxu0
        %v1091 = vadd.f32 %v922, %v1090
        %1092 = vmatmul.bf16.gmra.mxu0 %v644
        %v1093 = vpop.f32.mrf.mxu0
        %v1094 = vadd.f32 %v925, %v1093
        %v1095 = vpop.f32.mrf.mxu0
        %v1096 = vadd.f32 %v927, %v1095
        %1097 = vmatmul.bf16.gmra.mxu0 %v646
        %v1098 = vpop.f32.mrf.mxu0
        %v1099 = vadd.f32 %v930, %v1098
        %v1100 = vpop.f32.mrf.mxu0
        %v1101 = vadd.f32 %v932, %v1100
        %1102 = vmatmul.bf16.gmra.mxu0 %v648
        %v1103 = vpop.f32.mrf.mxu0
        %v1104 = vadd.f32 %v935, %v1103
        %v1105 = vpop.f32.mrf.mxu0
        %v1106 = vadd.f32 %v937, %v1105
        %1107 = vmatmul.bf16.gmra.mxu0 %v650
        %v1108 = vpop.f32.mrf.mxu0
        %v1109 = vadd.f32 %v940, %v1108
        %v1110 = vpop.f32.mrf.mxu0
        %v1111 = vadd.f32 %v942, %v1110
        %1112 = vmatmul.bf16.gmra.mxu0 %v652
        %v1113 = vpop.f32.mrf.mxu0
        %v1114 = vadd.f32 %v945, %v1113
        %v1115 = vpop.f32.mrf.mxu0
        %v1116 = vadd.f32 %v947, %v1115
        %1117 = vmatmul.bf16.gmra.mxu0 %v654
        %v1118 = vpop.f32.mrf.mxu0
        %v1119 = vadd.f32 %v950, %v1118
        %v1120 = vpop.f32.mrf.mxu0
        %v1121 = vadd.f32 %v952, %v1120
        %1122 = vmatmul.bf16.gmra.mxu0 %v656
        %v1123 = vpop.f32.mrf.mxu0
        %v1124 = vadd.f32 %v955, %v1123
        %v1125 = vpop.f32.mrf.mxu0
        %v1126 = vadd.f32 %v957, %v1125
        %1127 = vmatmul.bf16.gmra.mxu0 %v658
        %v1128 = vpop.f32.mrf.mxu0
        %v1129 = vadd.f32 %v960, %v1128
        %v1130 = vpop.f32.mrf.mxu0
        %v1131 = vadd.f32 %v962, %v1130
        %1132 = vmatmul.bf16.gmra.mxu0 %v660
        %v1133 = vpop.f32.mrf.mxu0
        %v1134 = vadd.f32 %v965, %v1133
        %v1135 = vpop.f32.mrf.mxu0
        %v1136 = vadd.f32 %v967, %v1135
        %1137 = vmatmul.bf16.gmra.mxu0 %v662
        %v1138 = vpop.f32.mrf.mxu0
        %v1139 = vadd.f32 %v970, %v1138
        %v1140 = vpop.f32.mrf.mxu0
        %v1141 = vadd.f32 %v972, %v1140
        %1142 = vmatmul.bf16.gmra.mxu0 %v664
        %v1143 = vpop.f32.mrf.mxu0
        %v1144 = vadd.f32 %v975, %v1143
        %v1145 = vpop.f32.mrf.mxu0
        %v1146 = vadd.f32 %v977, %v1145
        %1147 = vmatmul.bf16.gmra.mxu0 %v666
        %v1148 = vpop.f32.mrf.mxu0
        %v1149 = vadd.f32 %v980, %v1148
        %v1150 = vpop.f32.mrf.mxu0
        %v1151 = vadd.f32 %v982, %v1150
        %1152 = vmatmul.bf16.gmra.mxu0 %v668
        %v1153 = vpop.f32.mrf.mxu0
        %v1154 = vadd.f32 %v985, %v1153
        %v1155 = vpop.f32.mrf.mxu0
        %v1156 = vadd.f32 %v987, %v1155
        %1157 = vmatmul.bf16.gmra.mxu0 %v670
        %v1158 = vpop.f32.mrf.mxu0
        %v1159 = vadd.f32 %v990, %v1158
        %v1160 = vpop.f32.mrf.mxu0
        %v1161 = vadd.f32 %v992, %v1160
        %1162 = vmatmul.bf16.gmra.mxu0 %v672
        %v1163 = vpop.f32.mrf.mxu0
        %v1164 = vadd.f32 %v995, %v1163
        %v1165 = vpop.f32.mrf.mxu0
        %v1166 = vadd.f32 %v997, %v1165
        %1167 = vmatmul.bf16.gmra.mxu0 %v674
        %v1168 = vpop.f32.mrf.mxu0
        %v1169 = vadd.f32 %v1000, %v1168
        %v1170 = vpop.f32.mrf.mxu0
        %v1171 = vadd.f32 %v1002, %v1170
        %1172 = vdwg.mxu0
        %v1173 = vmax.f32 %v1014, 0.0
        %v1174 = vmax.f32 %v1016, 0.0
        %v1175 = vmax.f32 %v1019, 0.0
        %v1176 = vmax.f32 %v1021, 0.0
        %v1177 = vmax.f32 %v1024, 0.0
        %v1178 = vmax.f32 %v1026, 0.0
        %v1179 = vmax.f32 %v1029, 0.0
        %v1180 = vmax.f32 %v1031, 0.0
        %v1181 = vmax.f32 %v1034, 0.0
        %v1182 = vmax.f32 %v1036, 0.0
        %v1183 = vmax.f32 %v1039, 0.0
        %v1184 = vmax.f32 %v1041, 0.0
        %v1185 = vmax.f32 %v1044, 0.0
        %v1186 = vmax.f32 %v1046, 0.0
        %v1187 = vmax.f32 %v1049, 0.0
        %v1188 = vmax.f32 %v1051, 0.0
        %v1189 = vmax.f32 %v1054, 0.0
        %v1190 = vmax.f32 %v1056, 0.0
        %v1191 = vmax.f32 %v1059, 0.0
        %v1192 = vmax.f32 %v1061, 0.0
        %v1193 = vmax.f32 %v1064, 0.0
        %v1194 = vmax.f32 %v1066, 0.0
        %v1195 = vmax.f32 %v1069, 0.0
        %v1196 = vmax.f32 %v1071, 0.0
        %v1197 = vmax.f32 %v1074, 0.0
        %v1198 = vmax.f32 %v1076, 0.0
        %v1199 = vmax.f32 %v1079, 0.0
        %v1200 = vmax.f32 %v1081, 0.0
        %v1201 = vmax.f32 %v1084, 0.0
        %v1202 = vmax.f32 %v1086, 0.0
        %v1203 = vmax.f32 %v1089, 0.0
        %v1204 = vmax.f32 %v1091, 0.0
        %v1205 = vmax.f32 %v1094, 0.0
        %v1206 = vmax.f32 %v1096, 0.0
        %v1207 = vmax.f32 %v1099, 0.0
        %v1208 = vmax.f32 %v1101, 0.0
        %v1209 = vmax.f32 %v1104, 0.0
        %v1210 = vmax.f32 %v1106, 0.0
        %v1211 = vmax.f32 %v1109, 0.0
        %v1212 = vmax.f32 %v1111, 0.0
        %v1213 = vmax.f32 %v1114, 0.0
        %v1214 = vmax.f32 %v1116, 0.0
        %v1215 = vmax.f32 %v1119, 0.0
        %v1216 = vmax.f32 %v1121, 0.0
        %v1217 = vmax.f32 %v1124, 0.0
        %v1218 = vmax.f32 %v1126, 0.0
        %v1219 = vmax.f32 %v1129, 0.0
        %v1220 = vmax.f32 %v1131, 0.0
        %v1221 = vmax.f32 %v1134, 0.0
        %v1222 = vmax.f32 %v1136, 0.0
        %v1223 = vmax.f32 %v1139, 0.0
        %v1224 = vmax.f32 %v1141, 0.0
        %v1225 = vmax.f32 %v1144, 0.0
        %v1226 = vmax.f32 %v1146, 0.0
        %v1227 = vmax.f32 %v1149, 0.0
        %v1228 = vmax.f32 %v1151, 0.0
        %v1229 = vmax.f32 %v1154, 0.0
        %v1230 = vmax.f32 %v1156, 0.0
        %v1231 = vmax.f32 %v1159, 0.0
        %v1232 = vmax.f32 %v1161, 0.0
        %v1233 = vmax.f32 %v1164, 0.0
        %v1234 = vmax.f32 %v1166, 0.0
        %v1235 = vmax.f32 %v1169, 0.0
        %v1236 = vmax.f32 %v1171, 0.0
        %v1237 = vpack.c.bf16 %v1173, %v1173
        %v1238 = vpack.c.bf16 %v1174, %v1174
        %v1239 = vpack.c.bf16 %v1175, %v1175
        %v1240 = vpack.c.bf16 %v1176, %v1176
        %v1241 = vpack.c.bf16 %v1177, %v1177
        %v1242 = vpack.c.bf16 %v1178, %v1178
        %v1243 = vpack.c.bf16 %v1179, %v1179
        %v1244 = vpack.c.bf16 %v1180, %v1180
        %v1245 = vpack.c.bf16 %v1181, %v1181
        %v1246 = vpack.c.bf16 %v1182, %v1182
        %v1247 = vpack.c.bf16 %v1183, %v1183
        %v1248 = vpack.c.bf16 %v1184, %v1184
        %v1249 = vpack.c.bf16 %v1185, %v1185
        %v1250 = vpack.c.bf16 %v1186, %v1186
        %v1251 = vpack.c.bf16 %v1187, %v1187
        %v1252 = vpack.c.bf16 %v1188, %v1188
        %v1253 = vpack.c.bf16 %v1189, %v1189
        %v1254 = vpack.c.bf16 %v1190, %v1190
        %v1255 = vpack.c.bf16 %v1191, %v1191
        %v1256 = vpack.c.bf16 %v1192, %v1192
        %v1257 = vpack.c.bf16 %v1193, %v1193
        %v1258 = vpack.c.bf16 %v1194, %v1194
        %v1259 = vpack.c.bf16 %v1195, %v1195
        %v1260 = vpack.c.bf16 %v1196, %v1196
        %v1261 = vpack.c.bf16 %v1197, %v1197
        %v1262 = vpack.c.bf16 %v1198, %v1198
        %v1263 = vpack.c.bf16 %v1199, %v1199
        %v1264 = vpack.c.bf16 %v1200, %v1200
        %v1265 = vpack.c.bf16 %v1201, %v1201
        %v1266 = vpack.c.bf16 %v1202, %v1202
        %v1267 = vpack.c.bf16 %v1203, %v1203
        %v1268 = vpack.c.bf16 %v1204, %v1204
        %v1269 = vpack.c.bf16 %v1205, %v1205
        %v1270 = vpack.c.bf16 %v1206, %v1206
        %v1271 = vpack.c.bf16 %v1207, %v1207
        %v1272 = vpack.c.bf16 %v1208, %v1208
        %v1273 = vpack.c.bf16 %v1209, %v1209
        %v1274 = vpack.c.bf16 %v1210, %v1210
        %v1275 = vpack.c.bf16 %v1211, %v1211
        %v1276 = vpack.c.bf16 %v1212, %v1212
        %v1277 = vpack.c.bf16 %v1213, %v1213
        %v1278 = vpack.c.bf16 %v1214, %v1214
        %v1279 = vpack.c.bf16 %v1215, %v1215
        %v1280 = vpack.c.bf16 %v1216, %v1216
        %v1281 = vpack.c.bf16 %v1217, %v1217
        %v1282 = vpack.c.bf16 %v1218, %v1218
        %v1283 = vpack.c.bf16 %v1219, %v1219
        %v1284 = vpack.c.bf16 %v1220, %v1220
        %v1285 = vpack.c.bf16 %v1221, %v1221
        %v1286 = vpack.c.bf16 %v1222, %v1222
        %v1287 = vpack.c.bf16 %v1223, %v1223
        %v1288 = vpack.c.bf16 %v1224, %v1224
        %v1289 = vpack.c.bf16 %v1225, %v1225
        %v1290 = vpack.c.bf16 %v1226, %v1226
        %v1291 = vpack.c.bf16 %v1227, %v1227
        %v1292 = vpack.c.bf16 %v1228, %v1228
        %v1293 = vpack.c.bf16 %v1229, %v1229
        %v1294 = vpack.c.bf16 %v1230, %v1230
        %v1295 = vpack.c.bf16 %v1231, %v1231
        %v1296 = vpack.c.bf16 %v1232, %v1232
        %v1297 = vpack.c.bf16 %v1233, %v1233
        %v1298 = vpack.c.bf16 %v1234, %v1234
        %v1299 = vpack.c.bf16 %v1235, %v1235
        %v1300 = vpack.c.bf16 %v1236, %v1236
        %1301 = vst [vmem:[%s309] sm:$0xf] %v1237
        %1302 = vst [vmem:[%s309 + $0x4] sm:$0xf] %v1238
        %1303 = vst [vmem:[%s309 + $0x8] sm:$0xf] %v1239
        %1304 = vst [vmem:[%s309 + $0xc] sm:$0xf] %v1240
        %1305 = vst [vmem:[%s309 + $0x10] sm:$0xf] %v1241
        %1306 = vst [vmem:[%s309 + $0x14] sm:$0xf] %v1242
        %1307 = vst [vmem:[%s309 + $0x18] sm:$0xf] %v1243
        %1308 = vst [vmem:[%s309 + $0x1c] sm:$0xf] %v1244
        %1309 = vst [vmem:[%s309 + $0x20] sm:$0xf] %v1245
        %1310 = vst [vmem:[%s309 + $0x24] sm:$0xf] %v1246
        %1311 = vst [vmem:[%s309 + $0x28] sm:$0xf] %v1247
        %1312 = vst [vmem:[%s309 + $0x2c] sm:$0xf] %v1248
        %1313 = vst [vmem:[%s309 + $0x30] sm:$0xf] %v1249
        %1314 = vst [vmem:[%s309 + $0x34] sm:$0xf] %v1250
        %1315 = vst [vmem:[%s309 + $0x38] sm:$0xf] %v1251
        %1316 = vst [vmem:[%s309 + $0x3c] sm:$0xf] %v1252
        %1317 = vst [vmem:[%s309 + $0x40] sm:$0xf] %v1253
        %1318 = vst [vmem:[%s309 + $0x44] sm:$0xf] %v1254
        %1319 = vst [vmem:[%s309 + $0x48] sm:$0xf] %v1255
        %1320 = vst [vmem:[%s309 + $0x4c] sm:$0xf] %v1256
        %1321 = vst [vmem:[%s309 + $0x50] sm:$0xf] %v1257
        %1322 = vst [vmem:[%s309 + $0x54] sm:$0xf] %v1258
        %1323 = vst [vmem:[%s309 + $0x58] sm:$0xf] %v1259
        %1324 = vst [vmem:[%s309 + $0x5c] sm:$0xf] %v1260
        %1325 = vst [vmem:[%s309 + $0x60] sm:$0xf] %v1261
        %1326 = vst [vmem:[%s309 + $0x64] sm:$0xf] %v1262
        %1327 = vst [vmem:[%s309 + $0x68] sm:$0xf] %v1263
        %1328 = vst [vmem:[%s309 + $0x6c] sm:$0xf] %v1264
        %1329 = vst [vmem:[%s309 + $0x70] sm:$0xf] %v1265
        %1330 = vst [vmem:[%s309 + $0x74] sm:$0xf] %v1266
        %1331 = vst [vmem:[%s309 + $0x78] sm:$0xf] %v1267
        %1332 = vst [vmem:[%s309 + $0x7c] sm:$0xf] %v1268
        %1333 = vst [vmem:[%s309 + $0x80] sm:$0xf] %v1269
        %1334 = vst [vmem:[%s309 + $0x84] sm:$0xf] %v1270
        %1335 = vst [vmem:[%s309 + $0x88] sm:$0xf] %v1271
        %1336 = vst [vmem:[%s309 + $0x8c] sm:$0xf] %v1272
        %1337 = vst [vmem:[%s309 + $0x90] sm:$0xf] %v1273
        %1338 = vst [vmem:[%s309 + $0x94] sm:$0xf] %v1274
        %1339 = vst [vmem:[%s309 + $0x98] sm:$0xf] %v1275
        %1340 = vst [vmem:[%s309 + $0x9c] sm:$0xf] %v1276
        %1341 = vst [vmem:[%s309 + $0xa0] sm:$0xf] %v1277
        %1342 = vst [vmem:[%s309 + $0xa4] sm:$0xf] %v1278
        %1343 = vst [vmem:[%s309 + $0xa8] sm:$0xf] %v1279
        %1344 = vst [vmem:[%s309 + $0xac] sm:$0xf] %v1280
        %1345 = vst [vmem:[%s309 + $0xb0] sm:$0xf] %v1281
        %1346 = vst [vmem:[%s309 + $0xb4] sm:$0xf] %v1282
        %1347 = vst [vmem:[%s309 + $0xb8] sm:$0xf] %v1283
        %1348 = vst [vmem:[%s309 + $0xbc] sm:$0xf] %v1284
        %1349 = vst [vmem:[%s309 + $0xc0] sm:$0xf] %v1285
        %1350 = vst [vmem:[%s309 + $0xc4] sm:$0xf] %v1286
        %1351 = vst [vmem:[%s309 + $0xc8] sm:$0xf] %v1287
        %1352 = vst [vmem:[%s309 + $0xcc] sm:$0xf] %v1288
        %1353 = vst [vmem:[%s309 + $0xd0] sm:$0xf] %v1289
        %1354 = vst [vmem:[%s309 + $0xd4] sm:$0xf] %v1290
        %1355 = vst [vmem:[%s309 + $0xd8] sm:$0xf] %v1291
        %1356 = vst [vmem:[%s309 + $0xdc] sm:$0xf] %v1292
        %1357 = vst [vmem:[%s309 + $0xe0] sm:$0xf] %v1293
        %1358 = vst [vmem:[%s309 + $0xe4] sm:$0xf] %v1294
        %1359 = vst [vmem:[%s309 + $0xe8] sm:$0xf] %v1295
        %1360 = vst [vmem:[%s309 + $0xec] sm:$0xf] %v1296
        %1361 = vst [vmem:[%s309 + $0xf0] sm:$0xf] %v1297
        %1362 = vst [vmem:[%s309 + $0xf4] sm:$0xf] %v1298
        %1363 = vst [vmem:[%s309 + $0xf8] sm:$0xf] %v1299
        %1364 = vst [vmem:[%s309 + $0xfc] sm:$0xf] %v1300
        %v1365 = vld [vmem:[#allocation7] sm:$0xff]
        %v1366 = vld [vmem:[#allocation7 + $0x8] sm:$0xff]
        %v1367 = vld [vmem:[#allocation7 + $0x10] sm:$0xff]
        %v1368 = vld [vmem:[#allocation7 + $0x18] sm:$0xff]
        %v1369 = vld [vmem:[#allocation7 + $0x20] sm:$0xff]
        %v1370 = vld [vmem:[#allocation7 + $0x28] sm:$0xff]
        %v1371 = vld [vmem:[#allocation7 + $0x30] sm:$0xff]
        %v1372 = vld [vmem:[#allocation7 + $0x38] sm:$0xff]
        %v1373 = vld [vmem:[#allocation7 + $0x40] sm:$0xff]
        %v1374 = vld [vmem:[#allocation7 + $0x48] sm:$0xff]
        %v1375 = vld [vmem:[#allocation7 + $0x50] sm:$0xff]
        %v1376 = vld [vmem:[#allocation7 + $0x58] sm:$0xff]
        %v1377 = vld [vmem:[#allocation7 + $0x60] sm:$0xff]
        %v1378 = vld [vmem:[#allocation7 + $0x68] sm:$0xff]
        %v1379 = vld [vmem:[#allocation7 + $0x70] sm:$0xff]
        %v1380 = vld [vmem:[#allocation7 + $0x78] sm:$0xff]
        %v1381 = vld [vmem:[%s4] sm:$0x3]
        %v1382 = vunpack.c.l.bf16 %v1381
        %v1384 = vperm.slane %v1382, 0
        %v1385 = vperm.slane %v1382, 2
        %v1388 = vperm.slane %v1384, 0
        %v1389 = vperm.slane %v1385, 0
        %v1454 = vunpack.c.l.b16 %v1237
        %v1455 = vunpack.c.l.b16 %v1238
        %v1456 = vunpack.c.l.b16 %v1239
        %v1457 = vunpack.c.l.b16 %v1240
        %v1458 = vunpack.c.l.b16 %v1241
        %v1459 = vunpack.c.l.b16 %v1242
        %v1460 = vunpack.c.l.b16 %v1243
        %v1461 = vunpack.c.l.b16 %v1244
        %v1462 = vunpack.c.l.b16 %v1245
        %v1463 = vunpack.c.l.b16 %v1246
        %v1464 = vunpack.c.l.b16 %v1247
        %v1465 = vunpack.c.l.b16 %v1248
        %v1466 = vunpack.c.l.b16 %v1249
        %v1467 = vunpack.c.l.b16 %v1250
        %v1468 = vunpack.c.l.b16 %v1251
        %v1469 = vunpack.c.l.b16 %v1252
        %v1470 = vunpack.c.l.b16 %v1253
        %v1471 = vunpack.c.l.b16 %v1254
        %v1472 = vunpack.c.l.b16 %v1255
        %v1473 = vunpack.c.l.b16 %v1256
        %v1474 = vunpack.c.l.b16 %v1257
        %v1475 = vunpack.c.l.b16 %v1258
        %v1476 = vunpack.c.l.b16 %v1259
        %v1477 = vunpack.c.l.b16 %v1260
        %v1478 = vunpack.c.l.b16 %v1261
        %v1479 = vunpack.c.l.b16 %v1262
        %v1480 = vunpack.c.l.b16 %v1263
        %v1481 = vunpack.c.l.b16 %v1264
        %v1482 = vunpack.c.l.b16 %v1265
        %v1483 = vunpack.c.l.b16 %v1266
        %v1484 = vunpack.c.l.b16 %v1267
        %v1485 = vunpack.c.l.b16 %v1268
        %v1486 = vunpack.c.l.b16 %v1269
        %v1487 = vunpack.c.l.b16 %v1270
        %v1488 = vunpack.c.l.b16 %v1271
        %v1489 = vunpack.c.l.b16 %v1272
        %v1490 = vunpack.c.l.b16 %v1273
        %v1491 = vunpack.c.l.b16 %v1274
        %v1492 = vunpack.c.l.b16 %v1275
        %v1493 = vunpack.c.l.b16 %v1276
        %v1494 = vunpack.c.l.b16 %v1277
        %v1495 = vunpack.c.l.b16 %v1278
        %v1496 = vunpack.c.l.b16 %v1279
        %v1497 = vunpack.c.l.b16 %v1280
        %v1498 = vunpack.c.l.b16 %v1281
        %v1499 = vunpack.c.l.b16 %v1282
        %v1500 = vunpack.c.l.b16 %v1283
        %v1501 = vunpack.c.l.b16 %v1284
        %v1502 = vunpack.c.l.b16 %v1285
        %v1503 = vunpack.c.l.b16 %v1286
        %v1504 = vunpack.c.l.b16 %v1287
        %v1505 = vunpack.c.l.b16 %v1288
        %v1506 = vunpack.c.l.b16 %v1289
        %v1507 = vunpack.c.l.b16 %v1290
        %v1508 = vunpack.c.l.b16 %v1291
        %v1509 = vunpack.c.l.b16 %v1292
        %v1510 = vunpack.c.l.b16 %v1293
        %v1511 = vunpack.c.l.b16 %v1294
        %v1512 = vunpack.c.l.b16 %v1295
        %v1513 = vunpack.c.l.b16 %v1296
        %v1514 = vunpack.c.l.b16 %v1297
        %v1515 = vunpack.c.l.b16 %v1298
        %v1516 = vunpack.c.l.b16 %v1299
        %v1517 = vunpack.c.l.b16 %v1300
        %v1518 = vpack.c.b16 %v1455, %v1454
        %v1519 = vpack.c.b16 %v1457, %v1456
        %v1520 = vpack.c.b16 %v1459, %v1458
        %v1521 = vpack.c.b16 %v1461, %v1460
        %v1522 = vpack.c.b16 %v1463, %v1462
        %v1523 = vpack.c.b16 %v1465, %v1464
        %v1524 = vpack.c.b16 %v1467, %v1466
        %v1525 = vpack.c.b16 %v1469, %v1468
        %v1526 = vpack.c.b16 %v1471, %v1470
        %v1527 = vpack.c.b16 %v1473, %v1472
        %v1528 = vpack.c.b16 %v1475, %v1474
        %v1529 = vpack.c.b16 %v1477, %v1476
        %v1530 = vpack.c.b16 %v1479, %v1478
        %v1531 = vpack.c.b16 %v1481, %v1480
        %v1532 = vpack.c.b16 %v1483, %v1482
        %v1533 = vpack.c.b16 %v1485, %v1484
        %v1534 = vpack.c.b16 %v1487, %v1486
        %v1535 = vpack.c.b16 %v1489, %v1488
        %v1536 = vpack.c.b16 %v1491, %v1490
        %v1537 = vpack.c.b16 %v1493, %v1492
        %v1538 = vpack.c.b16 %v1495, %v1494
        %v1539 = vpack.c.b16 %v1497, %v1496
        %v1540 = vpack.c.b16 %v1499, %v1498
        %v1541 = vpack.c.b16 %v1501, %v1500
        %v1542 = vpack.c.b16 %v1503, %v1502
        %v1543 = vpack.c.b16 %v1505, %v1504
        %v1544 = vpack.c.b16 %v1507, %v1506
        %v1545 = vpack.c.b16 %v1509, %v1508
        %v1546 = vpack.c.b16 %v1511, %v1510
        %v1547 = vpack.c.b16 %v1513, %v1512
        %v1548 = vpack.c.b16 %v1515, %v1514
        %v1549 = vpack.c.b16 %v1517, %v1516
        %v1598 = vunpack.c.l.b16 %v1365
        %v1599 = vunpack.c.h.b16 %v1365
        %v1600 = vunpack.c.l.b16 %v1366
        %v1601 = vunpack.c.h.b16 %v1366
        %v1602 = vunpack.c.l.b16 %v1367
        %v1603 = vunpack.c.h.b16 %v1367
        %v1604 = vunpack.c.l.b16 %v1368
        %v1605 = vunpack.c.h.b16 %v1368
        %v1606 = vunpack.c.l.b16 %v1369
        %v1607 = vunpack.c.h.b16 %v1369
        %v1608 = vunpack.c.l.b16 %v1370
        %v1609 = vunpack.c.h.b16 %v1370
        %v1610 = vunpack.c.l.b16 %v1371
        %v1611 = vunpack.c.h.b16 %v1371
        %v1612 = vunpack.c.l.b16 %v1372
        %v1613 = vunpack.c.h.b16 %v1372
        %v1614 = vunpack.c.l.b16 %v1373
        %v1615 = vunpack.c.h.b16 %v1373
        %v1616 = vunpack.c.l.b16 %v1374
        %v1617 = vunpack.c.h.b16 %v1374
        %v1618 = vunpack.c.l.b16 %v1375
        %v1619 = vunpack.c.h.b16 %v1375
        %v1620 = vunpack.c.l.b16 %v1376
        %v1621 = vunpack.c.h.b16 %v1376
        %v1622 = vunpack.c.l.b16 %v1377
        %v1623 = vunpack.c.h.b16 %v1377
        %v1624 = vunpack.c.l.b16 %v1378
        %v1625 = vunpack.c.h.b16 %v1378
        %v1626 = vunpack.c.l.b16 %v1379
        %v1627 = vunpack.c.h.b16 %v1379
        %v1628 = vunpack.c.l.b16 %v1380
        %v1629 = vunpack.c.h.b16 %v1380
        %v1630 = vpack.c.b16 %v1600, %v1598
        %v1631 = vpack.c.b16 %v1601, %v1599
        %v1632 = vpack.c.b16 %v1604, %v1602
        %v1633 = vpack.c.b16 %v1605, %v1603
        %v1634 = vpack.c.b16 %v1608, %v1606
        %v1635 = vpack.c.b16 %v1609, %v1607
        %v1636 = vpack.c.b16 %v1612, %v1610
        %v1637 = vpack.c.b16 %v1613, %v1611
        %v1638 = vpack.c.b16 %v1616, %v1614
        %v1639 = vpack.c.b16 %v1617, %v1615
        %v1640 = vpack.c.b16 %v1620, %v1618
        %v1641 = vpack.c.b16 %v1621, %v1619
        %v1642 = vpack.c.b16 %v1624, %v1622
        %v1643 = vpack.c.b16 %v1625, %v1623
        %v1644 = vpack.c.b16 %v1628, %v1626
        %v1645 = vpack.c.b16 %v1629, %v1627
        %1662 = vmatpush.bf16.msra.mxu0 %v1644
        %1663 = vmatpush.bf16.msra.mxu0 %v1642
        %1664 = vmatpush.bf16.msra.mxu0 %v1640
        %1665 = vmatpush.bf16.msra.mxu0 %v1638
        %1666 = vmatpush.bf16.msra.mxu0 %v1636
        %1667 = vmatpush.bf16.msra.mxu0 %v1634
        %1668 = vmatpush.bf16.msra.mxu0 %v1632
        %1669 = vmatpush.bf16.msra.mxu0 %v1630
        %1670 = vmatmul.bf16.gmra.mxu0 %v1518
        %v1671 = vpop.f32.mrf.mxu0
        %v1672 = vadd.f32 %v1388, %v1671
        %v1673 = vpop.f32.mrf.mxu0
        %v1674 = vadd.f32 %v1388, %v1673
        %1675 = vmatmul.bf16.gmra.mxu0 %v1519
        %v1676 = vpop.f32.mrf.mxu0
        %v1677 = vadd.f32 %v1388, %v1676
        %v1678 = vpop.f32.mrf.mxu0
        %v1679 = vadd.f32 %v1388, %v1678
        %1680 = vmatmul.bf16.gmra.mxu0 %v1520
        %v1681 = vpop.f32.mrf.mxu0
        %v1682 = vadd.f32 %v1388, %v1681
        %v1683 = vpop.f32.mrf.mxu0
        %v1684 = vadd.f32 %v1388, %v1683
        %1685 = vmatmul.bf16.gmra.mxu0 %v1521
        %v1686 = vpop.f32.mrf.mxu0
        %v1687 = vadd.f32 %v1388, %v1686
        %v1688 = vpop.f32.mrf.mxu0
        %v1689 = vadd.f32 %v1388, %v1688
        %1690 = vmatmul.bf16.gmra.mxu0 %v1522
        %v1691 = vpop.f32.mrf.mxu0
        %v1692 = vadd.f32 %v1388, %v1691
        %v1693 = vpop.f32.mrf.mxu0
        %v1694 = vadd.f32 %v1388, %v1693
        %1695 = vmatmul.bf16.gmra.mxu0 %v1523
        %v1696 = vpop.f32.mrf.mxu0
        %v1697 = vadd.f32 %v1388, %v1696
        %v1698 = vpop.f32.mrf.mxu0
        %v1699 = vadd.f32 %v1388, %v1698
        %1700 = vmatmul.bf16.gmra.mxu0 %v1524
        %v1701 = vpop.f32.mrf.mxu0
        %v1702 = vadd.f32 %v1388, %v1701
        %v1703 = vpop.f32.mrf.mxu0
        %v1704 = vadd.f32 %v1388, %v1703
        %1705 = vmatmul.bf16.gmra.mxu0 %v1525
        %v1706 = vpop.f32.mrf.mxu0
        %v1707 = vadd.f32 %v1388, %v1706
        %v1708 = vpop.f32.mrf.mxu0
        %v1709 = vadd.f32 %v1388, %v1708
        %1710 = vmatmul.bf16.gmra.mxu0 %v1526
        %v1711 = vpop.f32.mrf.mxu0
        %v1712 = vadd.f32 %v1388, %v1711
        %v1713 = vpop.f32.mrf.mxu0
        %v1714 = vadd.f32 %v1388, %v1713
        %1715 = vmatmul.bf16.gmra.mxu0 %v1527
        %v1716 = vpop.f32.mrf.mxu0
        %v1717 = vadd.f32 %v1388, %v1716
        %v1718 = vpop.f32.mrf.mxu0
        %v1719 = vadd.f32 %v1388, %v1718
        %1720 = vmatmul.bf16.gmra.mxu0 %v1528
        %v1721 = vpop.f32.mrf.mxu0
        %v1722 = vadd.f32 %v1388, %v1721
        %v1723 = vpop.f32.mrf.mxu0
        %v1724 = vadd.f32 %v1388, %v1723
        %1725 = vmatmul.bf16.gmra.mxu0 %v1529
        %v1726 = vpop.f32.mrf.mxu0
        %v1727 = vadd.f32 %v1388, %v1726
        %v1728 = vpop.f32.mrf.mxu0
        %v1729 = vadd.f32 %v1388, %v1728
        %1730 = vmatmul.bf16.gmra.mxu0 %v1530
        %v1731 = vpop.f32.mrf.mxu0
        %v1732 = vadd.f32 %v1388, %v1731
        %v1733 = vpop.f32.mrf.mxu0
        %v1734 = vadd.f32 %v1388, %v1733
        %1735 = vmatmul.bf16.gmra.mxu0 %v1531
        %v1736 = vpop.f32.mrf.mxu0
        %v1737 = vadd.f32 %v1388, %v1736
        %v1738 = vpop.f32.mrf.mxu0
        %v1739 = vadd.f32 %v1388, %v1738
        %1740 = vmatmul.bf16.gmra.mxu0 %v1532
        %v1741 = vpop.f32.mrf.mxu0
        %v1742 = vadd.f32 %v1388, %v1741
        %v1743 = vpop.f32.mrf.mxu0
        %v1744 = vadd.f32 %v1388, %v1743
        %1745 = vmatmul.bf16.gmra.mxu0 %v1533
        %v1746 = vpop.f32.mrf.mxu0
        %v1747 = vadd.f32 %v1388, %v1746
        %v1748 = vpop.f32.mrf.mxu0
        %v1749 = vadd.f32 %v1388, %v1748
        %1750 = vmatmul.bf16.gmra.mxu0 %v1534
        %v1751 = vpop.f32.mrf.mxu0
        %v1752 = vadd.f32 %v1388, %v1751
        %v1753 = vpop.f32.mrf.mxu0
        %v1754 = vadd.f32 %v1388, %v1753
        %1755 = vmatmul.bf16.gmra.mxu0 %v1535
        %v1756 = vpop.f32.mrf.mxu0
        %v1757 = vadd.f32 %v1388, %v1756
        %v1758 = vpop.f32.mrf.mxu0
        %v1759 = vadd.f32 %v1388, %v1758
        %1760 = vmatmul.bf16.gmra.mxu0 %v1536
        %v1761 = vpop.f32.mrf.mxu0
        %v1762 = vadd.f32 %v1388, %v1761
        %v1763 = vpop.f32.mrf.mxu0
        %v1764 = vadd.f32 %v1388, %v1763
        %1765 = vmatmul.bf16.gmra.mxu0 %v1537
        %v1766 = vpop.f32.mrf.mxu0
        %v1767 = vadd.f32 %v1388, %v1766
        %v1768 = vpop.f32.mrf.mxu0
        %v1769 = vadd.f32 %v1388, %v1768
        %1770 = vmatmul.bf16.gmra.mxu0 %v1538
        %v1771 = vpop.f32.mrf.mxu0
        %v1772 = vadd.f32 %v1388, %v1771
        %v1773 = vpop.f32.mrf.mxu0
        %v1774 = vadd.f32 %v1388, %v1773
        %1775 = vmatmul.bf16.gmra.mxu0 %v1539
        %v1776 = vpop.f32.mrf.mxu0
        %v1777 = vadd.f32 %v1388, %v1776
        %v1778 = vpop.f32.mrf.mxu0
        %v1779 = vadd.f32 %v1388, %v1778
        %1780 = vmatmul.bf16.gmra.mxu0 %v1540
        %v1781 = vpop.f32.mrf.mxu0
        %v1782 = vadd.f32 %v1388, %v1781
        %v1783 = vpop.f32.mrf.mxu0
        %v1784 = vadd.f32 %v1388, %v1783
        %1785 = vmatmul.bf16.gmra.mxu0 %v1541
        %v1786 = vpop.f32.mrf.mxu0
        %v1787 = vadd.f32 %v1388, %v1786
        %v1788 = vpop.f32.mrf.mxu0
        %v1789 = vadd.f32 %v1388, %v1788
        %1790 = vmatmul.bf16.gmra.mxu0 %v1542
        %v1791 = vpop.f32.mrf.mxu0
        %v1792 = vadd.f32 %v1388, %v1791
        %v1793 = vpop.f32.mrf.mxu0
        %v1794 = vadd.f32 %v1388, %v1793
        %1795 = vmatmul.bf16.gmra.mxu0 %v1543
        %v1796 = vpop.f32.mrf.mxu0
        %v1797 = vadd.f32 %v1388, %v1796
        %v1798 = vpop.f32.mrf.mxu0
        %v1799 = vadd.f32 %v1388, %v1798
        %1800 = vmatmul.bf16.gmra.mxu0 %v1544
        %v1801 = vpop.f32.mrf.mxu0
        %v1802 = vadd.f32 %v1388, %v1801
        %v1803 = vpop.f32.mrf.mxu0
        %v1804 = vadd.f32 %v1388, %v1803
        %1805 = vmatmul.bf16.gmra.mxu0 %v1545
        %v1806 = vpop.f32.mrf.mxu0
        %v1807 = vadd.f32 %v1388, %v1806
        %v1808 = vpop.f32.mrf.mxu0
        %v1809 = vadd.f32 %v1388, %v1808
        %1810 = vmatmul.bf16.gmra.mxu0 %v1546
        %v1811 = vpop.f32.mrf.mxu0
        %v1812 = vadd.f32 %v1388, %v1811
        %v1813 = vpop.f32.mrf.mxu0
        %v1814 = vadd.f32 %v1388, %v1813
        %1815 = vmatmul.bf16.gmra.mxu0 %v1547
        %v1816 = vpop.f32.mrf.mxu0
        %v1817 = vadd.f32 %v1388, %v1816
        %v1818 = vpop.f32.mrf.mxu0
        %v1819 = vadd.f32 %v1388, %v1818
        %1820 = vmatmul.bf16.gmra.mxu0 %v1548
        %v1821 = vpop.f32.mrf.mxu0
        %v1822 = vadd.f32 %v1388, %v1821
        %v1823 = vpop.f32.mrf.mxu0
        %v1824 = vadd.f32 %v1388, %v1823
        %1825 = vmatmul.bf16.gmra.mxu0 %v1549
        %v1826 = vpop.f32.mrf.mxu0
        %v1827 = vadd.f32 %v1388, %v1826
        %v1828 = vpop.f32.mrf.mxu0
        %v1829 = vadd.f32 %v1388, %v1828
        %1830 = vdwg.mxu0
        %1831 = vmatpush.bf16.msra.mxu0 %v1645
        %1832 = vmatpush.bf16.msra.mxu0 %v1643
        %1833 = vmatpush.bf16.msra.mxu0 %v1641
        %1834 = vmatpush.bf16.msra.mxu0 %v1639
        %1835 = vmatpush.bf16.msra.mxu0 %v1637
        %1836 = vmatpush.bf16.msra.mxu0 %v1635
        %1837 = vmatpush.bf16.msra.mxu0 %v1633
        %1838 = vmatpush.bf16.msra.mxu0 %v1631
        %1839 = vmatmul.bf16.gmra.mxu0 %v1518
        %v1840 = vpop.f32.mrf.mxu0
        %v1841 = vadd.f32 %v1389, %v1840
        %v1842 = vpop.f32.mrf.mxu0
        %v1843 = vadd.f32 %v1389, %v1842
        %1844 = vmatmul.bf16.gmra.mxu0 %v1519
        %v1845 = vpop.f32.mrf.mxu0
        %v1846 = vadd.f32 %v1389, %v1845
        %v1847 = vpop.f32.mrf.mxu0
        %v1848 = vadd.f32 %v1389, %v1847
        %1849 = vmatmul.bf16.gmra.mxu0 %v1520
        %v1850 = vpop.f32.mrf.mxu0
        %v1851 = vadd.f32 %v1389, %v1850
        %v1852 = vpop.f32.mrf.mxu0
        %v1853 = vadd.f32 %v1389, %v1852
        %1854 = vmatmul.bf16.gmra.mxu0 %v1521
        %v1855 = vpop.f32.mrf.mxu0
        %v1856 = vadd.f32 %v1389, %v1855
        %v1857 = vpop.f32.mrf.mxu0
        %v1858 = vadd.f32 %v1389, %v1857
        %1859 = vmatmul.bf16.gmra.mxu0 %v1522
        %v1860 = vpop.f32.mrf.mxu0
        %v1861 = vadd.f32 %v1389, %v1860
        %v1862 = vpop.f32.mrf.mxu0
        %v1863 = vadd.f32 %v1389, %v1862
        %1864 = vmatmul.bf16.gmra.mxu0 %v1523
        %v1865 = vpop.f32.mrf.mxu0
        %v1866 = vadd.f32 %v1389, %v1865
        %v1867 = vpop.f32.mrf.mxu0
        %v1868 = vadd.f32 %v1389, %v1867
        %1869 = vmatmul.bf16.gmra.mxu0 %v1524
        %v1870 = vpop.f32.mrf.mxu0
        %v1871 = vadd.f32 %v1389, %v1870
        %v1872 = vpop.f32.mrf.mxu0
        %v1873 = vadd.f32 %v1389, %v1872
        %1874 = vmatmul.bf16.gmra.mxu0 %v1525
        %v1875 = vpop.f32.mrf.mxu0
        %v1876 = vadd.f32 %v1389, %v1875
        %v1877 = vpop.f32.mrf.mxu0
        %v1878 = vadd.f32 %v1389, %v1877
        %1879 = vmatmul.bf16.gmra.mxu0 %v1526
        %v1880 = vpop.f32.mrf.mxu0
        %v1881 = vadd.f32 %v1389, %v1880
        %v1882 = vpop.f32.mrf.mxu0
        %v1883 = vadd.f32 %v1389, %v1882
        %1884 = vmatmul.bf16.gmra.mxu0 %v1527
        %v1885 = vpop.f32.mrf.mxu0
        %v1886 = vadd.f32 %v1389, %v1885
        %v1887 = vpop.f32.mrf.mxu0
        %v1888 = vadd.f32 %v1389, %v1887
        %1889 = vmatmul.bf16.gmra.mxu0 %v1528
        %v1890 = vpop.f32.mrf.mxu0
        %v1891 = vadd.f32 %v1389, %v1890
        %v1892 = vpop.f32.mrf.mxu0
        %v1893 = vadd.f32 %v1389, %v1892
        %1894 = vmatmul.bf16.gmra.mxu0 %v1529
        %v1895 = vpop.f32.mrf.mxu0
        %v1896 = vadd.f32 %v1389, %v1895
        %v1897 = vpop.f32.mrf.mxu0
        %v1898 = vadd.f32 %v1389, %v1897
        %1899 = vmatmul.bf16.gmra.mxu0 %v1530
        %v1900 = vpop.f32.mrf.mxu0
        %v1901 = vadd.f32 %v1389, %v1900
        %v1902 = vpop.f32.mrf.mxu0
        %v1903 = vadd.f32 %v1389, %v1902
        %1904 = vmatmul.bf16.gmra.mxu0 %v1531
        %v1905 = vpop.f32.mrf.mxu0
        %v1906 = vadd.f32 %v1389, %v1905
        %v1907 = vpop.f32.mrf.mxu0
        %v1908 = vadd.f32 %v1389, %v1907
        %1909 = vmatmul.bf16.gmra.mxu0 %v1532
        %v1910 = vpop.f32.mrf.mxu0
        %v1911 = vadd.f32 %v1389, %v1910
        %v1912 = vpop.f32.mrf.mxu0
        %v1913 = vadd.f32 %v1389, %v1912
        %1914 = vmatmul.bf16.gmra.mxu0 %v1533
        %v1915 = vpop.f32.mrf.mxu0
        %v1916 = vadd.f32 %v1389, %v1915
        %v1917 = vpop.f32.mrf.mxu0
        %v1918 = vadd.f32 %v1389, %v1917
        %1919 = vmatmul.bf16.gmra.mxu0 %v1534
        %v1920 = vpop.f32.mrf.mxu0
        %v1921 = vadd.f32 %v1389, %v1920
        %v1922 = vpop.f32.mrf.mxu0
        %v1923 = vadd.f32 %v1389, %v1922
        %1924 = vmatmul.bf16.gmra.mxu0 %v1535
        %v1925 = vpop.f32.mrf.mxu0
        %v1926 = vadd.f32 %v1389, %v1925
        %v1927 = vpop.f32.mrf.mxu0
        %v1928 = vadd.f32 %v1389, %v1927
        %1929 = vmatmul.bf16.gmra.mxu0 %v1536
        %v1930 = vpop.f32.mrf.mxu0
        %v1931 = vadd.f32 %v1389, %v1930
        %v1932 = vpop.f32.mrf.mxu0
        %v1933 = vadd.f32 %v1389, %v1932
        %1934 = vmatmul.bf16.gmra.mxu0 %v1537
        %v1935 = vpop.f32.mrf.mxu0
        %v1936 = vadd.f32 %v1389, %v1935
        %v1937 = vpop.f32.mrf.mxu0
        %v1938 = vadd.f32 %v1389, %v1937
        %1939 = vmatmul.bf16.gmra.mxu0 %v1538
        %v1940 = vpop.f32.mrf.mxu0
        %v1941 = vadd.f32 %v1389, %v1940
        %v1942 = vpop.f32.mrf.mxu0
        %v1943 = vadd.f32 %v1389, %v1942
        %1944 = vmatmul.bf16.gmra.mxu0 %v1539
        %v1945 = vpop.f32.mrf.mxu0
        %v1946 = vadd.f32 %v1389, %v1945
        %v1947 = vpop.f32.mrf.mxu0
        %v1948 = vadd.f32 %v1389, %v1947
        %1949 = vmatmul.bf16.gmra.mxu0 %v1540
        %v1950 = vpop.f32.mrf.mxu0
        %v1951 = vadd.f32 %v1389, %v1950
        %v1952 = vpop.f32.mrf.mxu0
        %v1953 = vadd.f32 %v1389, %v1952
        %1954 = vmatmul.bf16.gmra.mxu0 %v1541
        %v1955 = vpop.f32.mrf.mxu0
        %v1956 = vadd.f32 %v1389, %v1955
        %v1957 = vpop.f32.mrf.mxu0
        %v1958 = vadd.f32 %v1389, %v1957
        %1959 = vmatmul.bf16.gmra.mxu0 %v1542
        %v1960 = vpop.f32.mrf.mxu0
        %v1961 = vadd.f32 %v1389, %v1960
        %v1962 = vpop.f32.mrf.mxu0
        %v1963 = vadd.f32 %v1389, %v1962
        %1964 = vmatmul.bf16.gmra.mxu0 %v1543
        %v1965 = vpop.f32.mrf.mxu0
        %v1966 = vadd.f32 %v1389, %v1965
        %v1967 = vpop.f32.mrf.mxu0
        %v1968 = vadd.f32 %v1389, %v1967
        %1969 = vmatmul.bf16.gmra.mxu0 %v1544
        %v1970 = vpop.f32.mrf.mxu0
        %v1971 = vadd.f32 %v1389, %v1970
        %v1972 = vpop.f32.mrf.mxu0
        %v1973 = vadd.f32 %v1389, %v1972
        %1974 = vmatmul.bf16.gmra.mxu0 %v1545
        %v1975 = vpop.f32.mrf.mxu0
        %v1976 = vadd.f32 %v1389, %v1975
        %v1977 = vpop.f32.mrf.mxu0
        %v1978 = vadd.f32 %v1389, %v1977
        %1979 = vmatmul.bf16.gmra.mxu0 %v1546
        %v1980 = vpop.f32.mrf.mxu0
        %v1981 = vadd.f32 %v1389, %v1980
        %v1982 = vpop.f32.mrf.mxu0
        %v1983 = vadd.f32 %v1389, %v1982
        %1984 = vmatmul.bf16.gmra.mxu0 %v1547
        %v1985 = vpop.f32.mrf.mxu0
        %v1986 = vadd.f32 %v1389, %v1985
        %v1987 = vpop.f32.mrf.mxu0
        %v1988 = vadd.f32 %v1389, %v1987
        %1989 = vmatmul.bf16.gmra.mxu0 %v1548
        %v1990 = vpop.f32.mrf.mxu0
        %v1991 = vadd.f32 %v1389, %v1990
        %v1992 = vpop.f32.mrf.mxu0
        %v1993 = vadd.f32 %v1389, %v1992
        %1994 = vmatmul.bf16.gmra.mxu0 %v1549
        %v1995 = vpop.f32.mrf.mxu0
        %v1996 = vadd.f32 %v1389, %v1995
        %v1997 = vpop.f32.mrf.mxu0
        %v1998 = vadd.f32 %v1389, %v1997
        %1999 = vdwg.mxu0
        %v2000 = vpack.c.bf16 %v1841, %v1672
        %v2001 = vpack.c.bf16 %v1843, %v1674
        %v2002 = vpack.c.bf16 %v1846, %v1677
        %v2003 = vpack.c.bf16 %v1848, %v1679
        %v2004 = vpack.c.bf16 %v1851, %v1682
        %v2005 = vpack.c.bf16 %v1853, %v1684
        %v2006 = vpack.c.bf16 %v1856, %v1687
        %v2007 = vpack.c.bf16 %v1858, %v1689
        %v2008 = vpack.c.bf16 %v1861, %v1692
        %v2009 = vpack.c.bf16 %v1863, %v1694
        %v2010 = vpack.c.bf16 %v1866, %v1697
        %v2011 = vpack.c.bf16 %v1868, %v1699
        %v2012 = vpack.c.bf16 %v1871, %v1702
        %v2013 = vpack.c.bf16 %v1873, %v1704
        %v2014 = vpack.c.bf16 %v1876, %v1707
        %v2015 = vpack.c.bf16 %v1878, %v1709
        %v2016 = vpack.c.bf16 %v1881, %v1712
        %v2017 = vpack.c.bf16 %v1883, %v1714
        %v2018 = vpack.c.bf16 %v1886, %v1717
        %v2019 = vpack.c.bf16 %v1888, %v1719
        %v2020 = vpack.c.bf16 %v1891, %v1722
        %v2021 = vpack.c.bf16 %v1893, %v1724
        %v2022 = vpack.c.bf16 %v1896, %v1727
        %v2023 = vpack.c.bf16 %v1898, %v1729
        %v2024 = vpack.c.bf16 %v1901, %v1732
        %v2025 = vpack.c.bf16 %v1903, %v1734
        %v2026 = vpack.c.bf16 %v1906, %v1737
        %v2027 = vpack.c.bf16 %v1908, %v1739
        %v2028 = vpack.c.bf16 %v1911, %v1742
        %v2029 = vpack.c.bf16 %v1913, %v1744
        %v2030 = vpack.c.bf16 %v1916, %v1747
        %v2031 = vpack.c.bf16 %v1918, %v1749
        %v2032 = vpack.c.bf16 %v1921, %v1752
        %v2033 = vpack.c.bf16 %v1923, %v1754
        %v2034 = vpack.c.bf16 %v1926, %v1757
        %v2035 = vpack.c.bf16 %v1928, %v1759
        %v2036 = vpack.c.bf16 %v1931, %v1762
        %v2037 = vpack.c.bf16 %v1933, %v1764
        %v2038 = vpack.c.bf16 %v1936, %v1767
        %v2039 = vpack.c.bf16 %v1938, %v1769
        %v2040 = vpack.c.bf16 %v1941, %v1772
        %v2041 = vpack.c.bf16 %v1943, %v1774
        %v2042 = vpack.c.bf16 %v1946, %v1777
        %v2043 = vpack.c.bf16 %v1948, %v1779
        %v2044 = vpack.c.bf16 %v1951, %v1782
        %v2045 = vpack.c.bf16 %v1953, %v1784
        %v2046 = vpack.c.bf16 %v1956, %v1787
        %v2047 = vpack.c.bf16 %v1958, %v1789
        %v2048 = vpack.c.bf16 %v1961, %v1792
        %v2049 = vpack.c.bf16 %v1963, %v1794
        %v2050 = vpack.c.bf16 %v1966, %v1797
        %v2051 = vpack.c.bf16 %v1968, %v1799
        %v2052 = vpack.c.bf16 %v1971, %v1802
        %v2053 = vpack.c.bf16 %v1973, %v1804
        %v2054 = vpack.c.bf16 %v1976, %v1807
        %v2055 = vpack.c.bf16 %v1978, %v1809
        %v2056 = vpack.c.bf16 %v1981, %v1812
        %v2057 = vpack.c.bf16 %v1983, %v1814
        %v2058 = vpack.c.bf16 %v1986, %v1817
        %v2059 = vpack.c.bf16 %v1988, %v1819
        %v2060 = vpack.c.bf16 %v1991, %v1822
        %v2061 = vpack.c.bf16 %v1993, %v1824
        %v2062 = vpack.c.bf16 %v1996, %v1827
        %v2063 = vpack.c.bf16 %v1998, %v1829
        %2064 = vst [vmem:[%s316] sm:$0xff] %v2000
        %2065 = vst [vmem:[%s316 + $0x8] sm:$0xff] %v2001
        %2066 = vst [vmem:[%s316 + $0x10] sm:$0xff] %v2002
        %2067 = vst [vmem:[%s316 + $0x18] sm:$0xff] %v2003
        %2068 = vst [vmem:[%s316 + $0x20] sm:$0xff] %v2004
        %2069 = vst [vmem:[%s316 + $0x28] sm:$0xff] %v2005
        %2070 = vst [vmem:[%s316 + $0x30] sm:$0xff] %v2006
        %2071 = vst [vmem:[%s316 + $0x38] sm:$0xff] %v2007
        %2072 = vst [vmem:[%s316 + $0x40] sm:$0xff] %v2008
        %2073 = vst [vmem:[%s316 + $0x48] sm:$0xff] %v2009
        %2074 = vst [vmem:[%s316 + $0x50] sm:$0xff] %v2010
        %2075 = vst [vmem:[%s316 + $0x58] sm:$0xff] %v2011
        %2076 = vst [vmem:[%s316 + $0x60] sm:$0xff] %v2012
        %2077 = vst [vmem:[%s316 + $0x68] sm:$0xff] %v2013
        %2078 = vst [vmem:[%s316 + $0x70] sm:$0xff] %v2014
        %2079 = vst [vmem:[%s316 + $0x78] sm:$0xff] %v2015
        %2080 = vst [vmem:[%s316 + $0x80] sm:$0xff] %v2016
        %2081 = vst [vmem:[%s316 + $0x88] sm:$0xff] %v2017
        %2082 = vst [vmem:[%s316 + $0x90] sm:$0xff] %v2018
        %2083 = vst [vmem:[%s316 + $0x98] sm:$0xff] %v2019
        %2084 = vst [vmem:[%s316 + $0xa0] sm:$0xff] %v2020
        %2085 = vst [vmem:[%s316 + $0xa8] sm:$0xff] %v2021
        %2086 = vst [vmem:[%s316 + $0xb0] sm:$0xff] %v2022
        %2087 = vst [vmem:[%s316 + $0xb8] sm:$0xff] %v2023
        %2088 = vst [vmem:[%s316 + $0xc0] sm:$0xff] %v2024
        %2089 = vst [vmem:[%s316 + $0xc8] sm:$0xff] %v2025
        %2090 = vst [vmem:[%s316 + $0xd0] sm:$0xff] %v2026
        %2091 = vst [vmem:[%s316 + $0xd8] sm:$0xff] %v2027
        %2092 = vst [vmem:[%s316 + $0xe0] sm:$0xff] %v2028
        %2093 = vst [vmem:[%s316 + $0xe8] sm:$0xff] %v2029
        %2094 = vst [vmem:[%s316 + $0xf0] sm:$0xff] %v2030
        %2095 = vst [vmem:[%s316 + $0xf8] sm:$0xff] %v2031
        %2096 = vst [vmem:[%s316 + $0x100] sm:$0xff] %v2032
        %2097 = vst [vmem:[%s316 + $0x108] sm:$0xff] %v2033
        %2098 = vst [vmem:[%s316 + $0x110] sm:$0xff] %v2034
        %2099 = vst [vmem:[%s316 + $0x118] sm:$0xff] %v2035
        %2100 = vst [vmem:[%s316 + $0x120] sm:$0xff] %v2036
        %2101 = vst [vmem:[%s316 + $0x128] sm:$0xff] %v2037
        %2102 = vst [vmem:[%s316 + $0x130] sm:$0xff] %v2038
        %2103 = vst [vmem:[%s316 + $0x138] sm:$0xff] %v2039
        %2104 = vst [vmem:[%s316 + $0x140] sm:$0xff] %v2040
        %2105 = vst [vmem:[%s316 + $0x148] sm:$0xff] %v2041
        %2106 = vst [vmem:[%s316 + $0x150] sm:$0xff] %v2042
        %2107 = vst [vmem:[%s316 + $0x158] sm:$0xff] %v2043
        %2108 = vst [vmem:[%s316 + $0x160] sm:$0xff] %v2044
        %2109 = vst [vmem:[%s316 + $0x168] sm:$0xff] %v2045
        %2110 = vst [vmem:[%s316 + $0x170] sm:$0xff] %v2046
        %2111 = vst [vmem:[%s316 + $0x178] sm:$0xff] %v2047
        %2112 = vst [vmem:[%s316 + $0x180] sm:$0xff] %v2048
        %2113 = vst [vmem:[%s316 + $0x188] sm:$0xff] %v2049
        %2114 = vst [vmem:[%s316 + $0x190] sm:$0xff] %v2050
        %2115 = vst [vmem:[%s316 + $0x198] sm:$0xff] %v2051
        %2116 = vst [vmem:[%s316 + $0x1a0] sm:$0xff] %v2052
        %2117 = vst [vmem:[%s316 + $0x1a8] sm:$0xff] %v2053
        %2118 = vst [vmem:[%s316 + $0x1b0] sm:$0xff] %v2054
        %2119 = vst [vmem:[%s316 + $0x1b8] sm:$0xff] %v2055
        %2120 = vst [vmem:[%s316 + $0x1c0] sm:$0xff] %v2056
        %2121 = vst [vmem:[%s316 + $0x1c8] sm:$0xff] %v2057
        %2122 = vst [vmem:[%s316 + $0x1d0] sm:$0xff] %v2058
        %2123 = vst [vmem:[%s316 + $0x1d8] sm:$0xff] %v2059
        %2124 = vst [vmem:[%s316 + $0x1e0] sm:$0xff] %v2060
        %2125 = vst [vmem:[%s316 + $0x1e8] sm:$0xff] %v2061
        %2126 = vst [vmem:[%s316 + $0x1f0] sm:$0xff] %v2062
        %2127 = vst [vmem:[%s316 + $0x1f8] sm:$0xff] %v2063
        %s2128 = sand.u32 %s146, 1
        %s2129 = scalar_lea.sflag [#allocation4], %s2128
        %s2130 = sand.u32 %s146, 1
        %s2131 = smul.addr %s2130, 256
        %s2132 = scalar_lea.vmem [#allocation8], %s2131
        %s2133 = sand.u32 %s172, 1
        %s2134 = scalar_lea.sflag [#allocation10], %s2133
        %s2135 = sand.u32 %s172, 1
        %s2136 = smul.addr %s2135, 512
        %s2137 = scalar_lea.vmem [#allocation9], %s2136
        // Predicated region
        $region53: #{tpu_custom_call.1} parent=39 // pred_check
          %p2138 = pneg %p156
        $region54: #{tpu_custom_call.1} parent=39 // pred_check_branch
          %2140 = sbr.rel (%p2138) target = $region56
        $region55: #{tpu_custom_call.1} parent=39 // pred_region
          %s2141 = smul.u32 64, %s28
          %2143 = vsyncadd %s2129, 0
          %s2144 = smul.addr %s2141, 4
          %s2145 = scalar_lea.hbm %s5, %s2144
          %s2146 = sshll.u32 %s2132, 4
          %s2147 = int_to_ptr.vmem [resolvable:$true] %s2146
          %s2148 = sshll.u32 %s2145, 4
          %s2149 = int_to_ptr.hbm [resolvable:$true] %s2148
          %2154 = dma.vmem_to_hbm [thread:$0]  %s2147, 4096, %s2149, %s2129, 64, 64, 4
        $region56: #{tpu_custom_call.1} parent=39 // pred_fallthru
          _
        // Predicated region
        $region57: #{tpu_custom_call.1} parent=39 // pred_check
          %p2155 = pneg %p182
        $region58: #{tpu_custom_call.1} parent=39 // pred_check_branch
          %2157 = sbr.rel (%p2155) target = $region60
        $region59: #{tpu_custom_call.1} parent=39 // pred_region
          %s2158 = smul.u32 64, %s28
          %2160 = vsyncadd %s2134, 0
          %s2161 = smul.addr %s2158, 2
          %s2162 = smul.addr %s2161, 4
          %s2163 = scalar_lea.hbm %s6, %s2162
          %s2164 = sshll.u32 %s2137, 4
          %s2165 = int_to_ptr.vmem [resolvable:$true] %s2164
          %s2166 = sshll.u32 %s2163, 4
          %s2167 = int_to_ptr.hbm [resolvable:$true] %s2166
          %2172 = dma.vmem_to_hbm [thread:$0]  %s2165, 8192, %s2167, %s2134, 128, 128, 8
        $region60: #{tpu_custom_call.1} parent=39 // pred_fallthru
          _
      $region40: #{tpu_custom_call.1} parent=5 // pred_fallthru
        _
      %p2173 = scmp.le.s32.totalorder 2, %s23
      // Predicated region
      $region61: #{tpu_custom_call.1} parent=5 // pred_check
        %p2174 = pneg %p2173
      $region62: #{tpu_custom_call.1} parent=5 // pred_check_branch
        %2176 = sbr.rel (%p2174) target = $region64
      $region63: #{tpu_custom_call.1} parent=5 // pred_region
        %s2177 = ssub.s32 %s23, 2
        // Predicated region
        $region65: #{tpu_custom_call.1} parent=63 // pred_check
          %p2178 = pneg %p162
        $region66: #{tpu_custom_call.1} parent=63 // pred_check_branch
          %2180 = sbr.rel (%p2178) target = $region68
        $region67: #{tpu_custom_call.1} parent=63 // pred_region
          %s2181 = sand.u32 %s147, 1
          %s2182 = scalar_lea.sflag [#allocation4], %s2181
          %s2183 = sand.u32 %s147, 1
          %s2184 = smul.addr %s2183, 256
          %s2185 = scalar_lea.vmem [#allocation8], %s2184
          %2187 = dma.done %s2182, 4096
        $region68: #{tpu_custom_call.1} parent=63 // pred_fallthru
          _
        // Predicated region
        $region69: #{tpu_custom_call.1} parent=63 // pred_check
          %p2188 = pneg %p188
        $region70: #{tpu_custom_call.1} parent=63 // pred_check_branch
          %2190 = sbr.rel (%p2188) target = $region72
        $region71: #{tpu_custom_call.1} parent=63 // pred_region
          %s2191 = sand.u32 %s173, 1
          %s2192 = scalar_lea.sflag [#allocation10], %s2191
          %s2193 = sand.u32 %s173, 1
          %s2194 = smul.addr %s2193, 512
          %s2195 = scalar_lea.vmem [#allocation9], %s2194
          %2197 = dma.done %s2192, 8192
        $region72: #{tpu_custom_call.1} parent=63 // pred_fallthru
          _
      $region64: #{tpu_custom_call.1} parent=5 // pred_fallthru
        _
    $region6: #{tpu_custom_call.1} parent=1 // loop_footer
      %s27 = sadd.s32 1, %s23
    $region7: #{tpu_custom_call.1} parent=1 // loop_footer_branch
      %22 = sbr.rel target = $region3
    $region8: #{tpu_custom_call.1} parent=1 // loop_exit
      _
    %2198 = vsyncpa [#allocation3], 1
    %s2199 = scalar_lea.sflag [#allocation3], 1
    %2200 = vsyncpa %s2199, 1
    %2201 = vsyncpa [#allocation6], 1
    %2202 = vsyncpa [#allocation4], 1
    %s2203 = scalar_lea.sflag [#allocation4], 1
    %2204 = vsyncpa %s2203, 1
    %2205 = vsyncpa [#allocation10], 1
    %s2206 = scalar_lea.sflag [#allocation10], 1
    %2207 = vsyncpa %s2206, 1

</llo_original>
